<compile_context>
chip_gen: v7x
topology: tpu7x:2x2x1
jax: 0.10.0
libtpu: 0.0.40
codegen_flags: <defaults>
</compile_context>

<pallas_src>
import math
import jax
import jax.numpy as jnp
from jax import lax
from jax.experimental import pallas as pl
from jax.experimental.pallas import tpu as pltpu

# ---- small synthetic "bert-base-chinese"-like config ----
VOCAB = 64
TYPE_VOCAB = 2
B = 2            # batch
S = 16           # sequence length
BS = B * S       # flattened rows (batch folded into matmul M dim)
H = 32           # hidden size
NUM_HEADS = 2
HEAD_DIM = H // NUM_HEADS
I = 64           # FFN intermediate size
NUM_LAYERS = 2
MAX_CLS_LEN = 4
NUM_CLASSES = 2
OUT_PAD = 128    # lane-dense classifier output width (sliced outside)
EPS = 1e-12
NEG_INF = -1e9


def _gelu(x):
    # tanh-approx GELU (EUP-friendly), computed in f32.
    # TODO(synk): HF BERT uses erf-based gelu; tiny numeric deviation expected.
    return 0.5 * x * (1.0 + jnp.tanh(0.7978845608028654 * (x + 0.044715 * x * x * x)))


def _layernorm(x, g, b):
    mu = jnp.mean(x, axis=-1, keepdims=True)
    var = jnp.mean((x - mu) ** 2, axis=-1, keepdims=True)
    return (x - mu) * lax.rsqrt(var + EPS) * g + b


# BlockSpec helpers. index_maps also receive the scalar-prefetch refs -> swallow.
def _resident(shape):
    n = len(shape)
    return pl.BlockSpec(shape, lambda l, *_, n=n: (0,) * n)


def _per_layer(shape):
    n = len(shape)
    blk = (1,) + tuple(shape[1:])
    return pl.BlockSpec(blk, lambda l, *_, n=n: (l,) + (0,) * (n - 1))


# -------------------- fused, layer-streamed BERT forward kernel --------------------
def bert_fused_kernel(cls_ids_ref, cls_len_ref,                       # SMEM prefetch
                      x_in_ref, kvalid_ref, eg_ref, eb_ref,           # resident
                      wq_ref, wk_ref, wv_ref, bq_ref, bk_ref, bv_ref, # per-layer
                      wo_ref, bo_ref, g1_ref, be1_ref,
                      w1_ref, bi1_ref, w2_ref, bi2_ref, g2_ref, be2_ref,
                      cw_ref, cb_ref,                                 # resident
                      sen_ref, score_ref,                             # outputs
                      x_ref):                                         # f32 VMEM carry
    l = pl.program_id(0)

    # ---- layer 0: embedding LayerNorm into the activation carry ----
    @pl.when(l == 0)
    def _():
        x_ref[...] = _layernorm(x_in_ref[...], eg_ref[...], eb_ref[...])

    # ---- block-diagonal additive mask rebuilt in-kernel (no (B*S)^2 input) ----
    qi = lax.broadcasted_iota(jnp.int32, (BS, BS), 0)
    ki = lax.broadcasted_iota(jnp.int32, (BS, BS), 1)
    same_batch = (qi < S) & (ki < S)
    for b in range(1, B):                                   # static, tiny VPU work
        qin = (qi >= b * S) & (qi < (b + 1) * S)
        kin = (ki >= b * S) & (ki < (b + 1) * S)
        same_batch = same_batch | (qin & kin)
    key_ok = kvalid_ref[...] > 0.5                          # (1, BS) broadcast
    mask = jnp.where(same_batch & key_ok, 0.0, NEG_INF)     # (BS, BS) f32
    # NOTE: padded *query* rows still get outputs (only keys are masked); they
    # are never selected by the CLS gather, matching the PyTorch reference.

    # ---- one encoder layer (weights of layer `l` streamed into VMEM) ----
    x = x_ref[...]                                          # f32 residual path
    xb = x.astype(jnp.bfloat16)
    scale = 1.0 / math.sqrt(HEAD_DIM)

    attn = jnp.zeros((BS, H), jnp.float32)
    for h in range(NUM_HEADS):                              # static head loop
        qh = jnp.dot(xb, wq_ref[0, h], preferred_element_type=jnp.float32) + bq_ref[0, h]
        kh = jnp.dot(xb, wk_ref[0, h], preferred_element_type=jnp.float32) + bk_ref[0, h]
        vh = jnp.dot(xb, wv_ref[0, h], preferred_element_type=jnp.float32) + bv_ref[0, h]
        s = jnp.einsum('qd,kd->qk', qh.astype(jnp.bfloat16), kh.astype(jnp.bfloat16),
                       preferred_element_type=jnp.float32) * scale + mask
        m = jnp.max(s, axis=-1, keepdims=True)
        p = jnp.exp(s - m)
        p = p * pl.reciprocal(jnp.sum(p, axis=-1, keepdims=True), approx=True)
        ctx = jnp.dot(p.astype(jnp.bfloat16), vh.astype(jnp.bfloat16),
                      preferred_element_type=jnp.float32)   # (BS, HEAD_DIM)
        # fold the head-concat into MXU accumulation (no lane concat)
        attn = attn + jnp.dot(ctx.astype(jnp.bfloat16), wo_ref[0, h],
                              preferred_element_type=jnp.float32)
    attn = attn + bo_ref[0]

    h1 = _layernorm(x + attn, g1_ref[0], be1_ref[0])
    ff = _gelu(jnp.dot(h1.astype(jnp.bfloat16), w1_ref[0],
                       preferred_element_type=jnp.float32) + bi1_ref[0])
    ff = jnp.dot(ff.astype(jnp.bfloat16), w2_ref[0],
                 preferred_element_type=jnp.float32) + bi2_ref[0]
    x_new = _layernorm(h1 + ff, g2_ref[0], be2_ref[0])
    x_ref[...] = x_new

    # ---- last layer: one-hot CLS gather (matmul) + classifier ----
    @pl.when(l == pl.num_programs(0) - 1)
    def _():
        row = lax.broadcasted_iota(jnp.int32, (B * MAX_CLS_LEN, BS), 0)
        col = lax.broadcasted_iota(jnp.int32, (B * MAX_CLS_LEN, BS), 1)
        sel = jnp.zeros((B * MAX_CLS_LEN, BS), jnp.float32)
        for b in range(B):                                  # static, B*MAX_CLS_LEN tiny
            for j in range(MAX_CLS_LEN):
                idx = jnp.minimum(jnp.maximum(cls_ids_ref[b, j], 0), S - 1)
                tgt = b * S + idx
                one = jnp.where(j < cls_len_ref[b], 1.0, 0.0)   # zero-pad like PyTorch
                hit = (row == (b * MAX_CLS_LEN + j)) & (col == tgt)
                sel = jnp.where(hit, one, sel)
        sen = jnp.dot(sel, x_new, preferred_element_type=jnp.float32)  # (B*MCL, H)
        sen_ref[...] = sen
        score_ref[...] = (jnp.dot(sen.astype(jnp.bfloat16), cw_ref[...],
                                  preferred_element_type=jnp.float32) + cb_ref[...])


# -------------------- parameter init & forward --------------------
def init_params(key):
    def norm(k, shape, scale=0.02):
        return scale * jax.random.normal(k, shape, jnp.float32)

    k = jax.random.split(key, 10)
    return {
        'word_emb': norm(k[0], (VOCAB, H)),
        'type_emb': norm(k[1], (TYPE_VOCAB, H)),
        'pos_emb': norm(k[2], (S, H)),
        'emb_ln_g': jnp.ones((1, H), jnp.float32),
        'emb_ln_b': jnp.zeros((1, H), jnp.float32),
        'wq': norm(k[3], (NUM_LAYERS, H, H)),
        'wk': norm(k[4], (NUM_LAYERS, H, H)),
        'wv': norm(k[5], (NUM_LAYERS, H, H)),
        'bq': jnp.zeros((NUM_LAYERS, 1, H), jnp.float32),
        'bk': jnp.zeros((NUM_LAYERS, 1, H), jnp.float32),
        'bv': jnp.zeros((NUM_LAYERS, 1, H), jnp.float32),
        'wo': norm(k[6], (NUM_LAYERS, H, H)),
        'bo': jnp.zeros((NUM_LAYERS, 1, H), jnp.float32),
        'ln1_g': jnp.ones((NUM_LAYERS, 1, H), jnp.float32),
        'ln1_b': jnp.zeros((NUM_LAYERS, 1, H), jnp.float32),
        'w1': norm(k[7], (NUM_LAYERS, H, I)),
        'b1': jnp.zeros((NUM_LAYERS, 1, I), jnp.float32),
        'w2': norm(k[8], (NUM_LAYERS, I, H)),
        'b2': jnp.zeros((NUM_LAYERS, 1, H), jnp.float32),
        'ln2_g': jnp.ones((NUM_LAYERS, 1, H), jnp.float32),
        'ln2_b': jnp.zeros((NUM_LAYERS, 1, H), jnp.float32),
        'cls_w': norm(k[9], (H, NUM_CLASSES)),
        'cls_b': jnp.zeros((1, NUM_CLASSES), jnp.float32),
    }


def bert_forward(params, input_ids, token_type_ids, attention_mask, cls_ids, cls_len):
    bf16 = jnp.bfloat16

    # embedding lookup (glue) -> flatten batch into the M dimension
    emb = (params['word_emb'][input_ids]
           + params['type_emb'][token_type_ids]
           + params['pos_emb'][None, :, :])                   # (B, S, H)
    x_flat = emb.reshape(BS, H).astype(jnp.float32)

    # only the key-valid row goes in; the (BS, BS) mask is built in-kernel
    key_valid = attention_mask.astype(jnp.float32).reshape(1, BS)

    # per-head weight split (free XLA reshape/transpose), bf16 matmul operands
    def split_heads_qkv(w):   # (L, H, H) -> (L, NH, H, HEAD_DIM)
        return w.reshape(NUM_LAYERS, H, NUM_HEADS, HEAD_DIM).transpose(0, 2, 1, 3).astype(bf16)

    wq_h = split_heads_qkv(params['wq'])
    wk_h = split_heads_qkv(params['wk'])
    wv_h = split_heads_qkv(params['wv'])
    bq_h = params['bq'].reshape(NUM_LAYERS, NUM_HEADS, 1, HEAD_DIM)
    bk_h = params['bk'].reshape(NUM_LAYERS, NUM_HEADS, 1, HEAD_DIM)
    bv_h = params['bv'].reshape(NUM_LAYERS, NUM_HEADS, 1, HEAD_DIM)
    wo_h = params['wo'].reshape(NUM_LAYERS, NUM_HEADS, HEAD_DIM, H).astype(bf16)

    # lane-pad classifier weights so the kernel output is lane-dense (128)
    cw_pad = jnp.pad(params['cls_w'], ((0, 0), (0, OUT_PAD - NUM_CLASSES))).astype(bf16)
    cb_pad = jnp.pad(params['cls_b'], ((0, 0), (0, OUT_PAD - NUM_CLASSES)))

    resident_in = (x_flat, key_valid, params['emb_ln_g'], params['emb_ln_b'])
    per_layer_in = (wq_h, wk_h, wv_h, bq_h, bk_h, bv_h,
                    wo_h, params['bo'], params['ln1_g'], params['ln1_b'],
                    params['w1'].astype(bf16), params['b1'],
                    params['w2'].astype(bf16), params['b2'],
                    params['ln2_g'], params['ln2_b'])
    resident_tail = (cw_pad, cb_pad)
    in_arrays = resident_in + per_layer_in + resident_tail

    in_specs = ([_resident(a.shape) for a in resident_in]
                + [_per_layer(a.shape) for a in per_layer_in]
                + [_resident(a.shape) for a in resident_tail])

    sen_flat, scores_pad = pl.pallas_call(
        bert_fused_kernel,
        out_shape=(jax.ShapeDtypeStruct((B * MAX_CLS_LEN, H), jnp.float32),
                   jax.ShapeDtypeStruct((B * MAX_CLS_LEN, OUT_PAD), jnp.float32)),
        grid_spec=pltpu.PrefetchScalarGridSpec(
            num_scalar_prefetch=2,
            grid=(NUM_LAYERS,),                    # stream + double-buffer layer weights
            in_specs=in_specs,
            out_specs=[_resident((B * MAX_CLS_LEN, H)),
                       _resident((B * MAX_CLS_LEN, OUT_PAD))],
            scratch_shapes=[pltpu.VMEM((BS, H), jnp.float32)]),   # f32 activation carry
        compiler_params=pltpu.CompilerParams(dimension_semantics=("arbitrary",)),
    )(cls_ids.astype(jnp.int32), cls_len.astype(jnp.int32), *in_arrays)

    sen_inputs = sen_flat.reshape(B, MAX_CLS_LEN, H)
    sent_scores = scores_pad.reshape(B, MAX_CLS_LEN, OUT_PAD)[:, :, :NUM_CLASSES]
    sent_out = jnp.argmax(sent_scores, axis=2)
    return sent_scores, sent_out, sen_inputs


if __name__ == "__main__":
    root = jax.random.PRNGKey(0)
    kp, k1 = jax.random.split(root)
    params = init_params(kp)

    input_ids = jax.random.randint(k1, (B, S), 0, VOCAB, dtype=jnp.int32)
    token_type_ids = jnp.zeros((B, S), jnp.int32)
    attention_mask = jnp.ones((B, S), jnp.int32).at[1, S - 4:].set(0)
    cls_ids = jnp.tile(jnp.array([0, 5, 10, 15], jnp.int32)[None, :], (B, 1))
    cls_len = jnp.array([4, 3], jnp.int32)

    sent_scores, sent_out, sen_inputs = bert_forward(
        params, input_ids, token_type_ids, attention_mask, cls_ids, cls_len)
    jax.block_until_ready((sent_scores, sent_out, sen_inputs))

    assert sent_scores.shape == (B, MAX_CLS_LEN, NUM_CLASSES)
    assert sent_out.shape == (B, MAX_CLS_LEN)
    assert sen_inputs.shape == (B, MAX_CLS_LEN, H)
    print("KERNEL_OK")
</pallas_src>

<mosaic_0001>
module attributes {stable_mosaic.version = 11 : i64} {
  func.func @bert_fused_kernel(%arg0: i32, %arg1: memref<2x4xi32, #tpu.memory_space<smem>>, %arg2: memref<2xi32, #tpu.memory_space<smem>>, %arg3: memref<32x32xf32, #tpu.memory_space<vmem>>, %arg4: memref<1x32xf32, #tpu.memory_space<vmem>>, %arg5: memref<1x32xf32, #tpu.memory_space<vmem>>, %arg6: memref<1x32xf32, #tpu.memory_space<vmem>>, %arg7: memref<1x2x32x16xbf16, #tpu.memory_space<vmem>>, %arg8: memref<1x2x32x16xbf16, #tpu.memory_space<vmem>>, %arg9: memref<1x2x32x16xbf16, #tpu.memory_space<vmem>>, %arg10: memref<1x2x1x16xf32, #tpu.memory_space<vmem>>, %arg11: memref<1x2x1x16xf32, #tpu.memory_space<vmem>>, %arg12: memref<1x2x1x16xf32, #tpu.memory_space<vmem>>, %arg13: memref<1x2x16x32xbf16, #tpu.memory_space<vmem>>, %arg14: memref<1x1x32xf32, #tpu.memory_space<vmem>>, %arg15: memref<1x1x32xf32, #tpu.memory_space<vmem>>, %arg16: memref<1x1x32xf32, #tpu.memory_space<vmem>>, %arg17: memref<1x32x64xbf16, #tpu.memory_space<vmem>>, %arg18: memref<1x1x64xf32, #tpu.memory_space<vmem>>, %arg19: memref<1x64x32xbf16, #tpu.memory_space<vmem>>, %arg20: memref<1x1x32xf32, #tpu.memory_space<vmem>>, %arg21: memref<1x1x32xf32, #tpu.memory_space<vmem>>, %arg22: memref<1x1x32xf32, #tpu.memory_space<vmem>>, %arg23: memref<32x128xbf16, #tpu.memory_space<vmem>>, %arg24: memref<1x128xf32, #tpu.memory_space<vmem>>, %arg25: memref<8x32xf32, #tpu.memory_space<vmem>>, %arg26: memref<8x128xf32, #tpu.memory_space<vmem>>, %arg27: memref<32x32xf32, #tpu.memory_space<vmem>>) attributes {dimension_semantics = [#tpu.dimension_semantics<arbitrary>], iteration_bounds = array<i64: 2>, scalar_prefetch = 2 : i64, scratch_operands = 1 : i64, tpu.core_type = #tpu.core_type<tc>, window_params = [{pipeline_mode = #tpu.pipeline_mode<synchronous>, transform_indices = @transform_0, window_bounds = array<i64: 32, 32>}, {pipeline_mode = #tpu.pipeline_mode<synchronous>, transform_indices = @transform_1, window_bounds = array<i64: 1, 32>}, {pipeline_mode = #tpu.pipeline_mode<synchronous>, transform_indices = @transform_2, window_bounds = array<i64: 1, 32>}, {pipeline_mode = #tpu.pipeline_mode<synchronous>, transform_indices = @transform_3, window_bounds = array<i64: 1, 32>}, {transform_indices = @transform_4, window_bounds = array<i64: 1, 2, 32, 16>}, {transform_indices = @transform_5, window_bounds = array<i64: 1, 2, 32, 16>}, {transform_indices = @transform_6, window_bounds = array<i64: 1, 2, 32, 16>}, {transform_indices = @transform_7, window_bounds = array<i64: 1, 2, 1, 16>}, {transform_indices = @transform_8, window_bounds = array<i64: 1, 2, 1, 16>}, {transform_indices = @transform_9, window_bounds = array<i64: 1, 2, 1, 16>}, {transform_indices = @transform_10, window_bounds = array<i64: 1, 2, 16, 32>}, {transform_indices = @transform_11, window_bounds = array<i64: 1, 1, 32>}, {transform_indices = @transform_12, window_bounds = array<i64: 1, 1, 32>}, {transform_indices = @transform_13, window_bounds = array<i64: 1, 1, 32>}, {transform_indices = @transform_14, window_bounds = array<i64: 1, 32, 64>}, {transform_indices = @transform_15, window_bounds = array<i64: 1, 1, 64>}, {transform_indices = @transform_16, window_bounds = array<i64: 1, 64, 32>}, {transform_indices = @transform_17, window_bounds = array<i64: 1, 1, 32>}, {transform_indices = @transform_18, window_bounds = array<i64: 1, 1, 32>}, {transform_indices = @transform_19, window_bounds = array<i64: 1, 1, 32>}, {pipeline_mode = #tpu.pipeline_mode<synchronous>, transform_indices = @transform_20, window_bounds = array<i64: 32, 128>}, {pipeline_mode = #tpu.pipeline_mode<synchronous>, transform_indices = @transform_21, window_bounds = array<i64: 1, 128>}, {pipeline_mode = #tpu.pipeline_mode<synchronous>, transform_indices = @transform_22, window_bounds = array<i64: 8, 32>}, {pipeline_mode = #tpu.pipeline_mode<synchronous>, transform_indices = @transform_23, window_bounds = array<i64: 8, 128>}]} {
    %c0_i32 = arith.constant 0 : i32
    %0 = arith.cmpi eq, %arg0, %c0_i32 : i32
    %1 = arith.extui %0 : i1 to i32
    %c0_i32_0 = arith.constant 0 : i32
    %2 = arith.cmpi ne, %1, %c0_i32_0 : i32
    scf.if %2 {
      %c0_130 = arith.constant 0 : index
      %c0_131 = arith.constant 0 : index
      %214 = vector.load %arg3[%c0_130, %c0_131] : memref<32x32xf32, #tpu.memory_space<vmem>>, vector<32x32xf32>
      %c0_132 = arith.constant 0 : index
      %c0_133 = arith.constant 0 : index
      %215 = vector.load %arg5[%c0_132, %c0_133] : memref<1x32xf32, #tpu.memory_space<vmem>>, vector<1x32xf32>
      %c0_134 = arith.constant 0 : index
      %c0_135 = arith.constant 0 : index
      %216 = vector.load %arg6[%c0_134, %c0_135] : memref<1x32xf32, #tpu.memory_space<vmem>>, vector<1x32xf32>
      %cst_136 = arith.constant dense<0.000000e+00> : vector<32xf32>
      %217 = vector.multi_reduction <add>, %214, %cst_136 [1] : vector<32x32xf32> to vector<32xf32>
      %218 = vector.shape_cast %217 : vector<32xf32> to vector<32x1xf32>
      %cst_137 = arith.constant 3.200000e+01 : f32
      %219 = vector.broadcast %cst_137 : f32 to vector<32x1xf32>
      %220 = arith.divf %218, %219 : vector<32x1xf32>
      %221 = vector.broadcast %220 : vector<32x1xf32> to vector<32x32xf32>
      %222 = arith.subf %214, %221 : vector<32x32xf32>
      %223 = arith.mulf %222, %222 : vector<32x32xf32>
      %cst_138 = arith.constant dense<0.000000e+00> : vector<32xf32>
      %224 = vector.multi_reduction <add>, %223, %cst_138 [1] : vector<32x32xf32> to vector<32xf32>
      %225 = vector.shape_cast %224 : vector<32xf32> to vector<32x1xf32>
      %cst_139 = arith.constant 3.200000e+01 : f32
      %226 = vector.broadcast %cst_139 : f32 to vector<32x1xf32>
      %227 = arith.divf %225, %226 : vector<32x1xf32>
      %228 = vector.broadcast %220 : vector<32x1xf32> to vector<32x32xf32>
      %229 = arith.subf %214, %228 : vector<32x32xf32>
      %cst_140 = arith.constant 9.99999996E-13 : f32
      %230 = vector.broadcast %cst_140 : f32 to vector<32x1xf32>
      %231 = arith.addf %227, %230 : vector<32x1xf32>
      %232 = math.rsqrt %231 : vector<32x1xf32>
      %233 = vector.broadcast %232 : vector<32x1xf32> to vector<32x32xf32>
      %234 = arith.mulf %229, %233 : vector<32x32xf32>
      %235 = vector.broadcast %215 : vector<1x32xf32> to vector<32x32xf32>
      %236 = arith.mulf %234, %235 : vector<32x32xf32>
      %237 = vector.broadcast %216 : vector<1x32xf32> to vector<32x32xf32>
      %238 = arith.addf %236, %237 : vector<32x32xf32>
      %c0_141 = arith.constant 0 : index
      %c0_142 = arith.constant 0 : index
      %239 = vector.load %arg27[%c0_141, %c0_142] : memref<32x32xf32, #tpu.memory_space<vmem>>, vector<32x32xf32>
      tpu.vector_store %arg27[%c0_141, %c0_142], %238 {strides = array<i32>} : memref<32x32xf32, #tpu.memory_space<vmem>>, vector<32x32xf32>,
    } else {
    }
    %3 = tpu.iota {dimensions = array<i32: 0>} : vector<32x32xi32>
    %4 = tpu.iota {dimensions = array<i32: 1>} : vector<32x32xi32>
    %c16_i32 = arith.constant 16 : i32
    %5 = vector.broadcast %c16_i32 : i32 to vector<32x32xi32>
    %6 = arith.cmpi slt, %3, %5 : vector<32x32xi32>
    %c16_i32_1 = arith.constant 16 : i32
    %7 = vector.broadcast %c16_i32_1 : i32 to vector<32x32xi32>
    %8 = arith.cmpi slt, %4, %7 : vector<32x32xi32>
    %9 = arith.andi %6, %8 : vector<32x32xi1>
    %c16_i32_2 = arith.constant 16 : i32
    %10 = vector.broadcast %c16_i32_2 : i32 to vector<32x32xi32>
    %11 = arith.cmpi sge, %3, %10 : vector<32x32xi32>
    %c32_i32 = arith.constant 32 : i32
    %12 = vector.broadcast %c32_i32 : i32 to vector<32x32xi32>
    %13 = arith.cmpi slt, %3, %12 : vector<32x32xi32>
    %14 = arith.andi %11, %13 : vector<32x32xi1>
    %c16_i32_3 = arith.constant 16 : i32
    %15 = vector.broadcast %c16_i32_3 : i32 to vector<32x32xi32>
    %16 = arith.cmpi sge, %4, %15 : vector<32x32xi32>
    %c32_i32_4 = arith.constant 32 : i32
    %17 = vector.broadcast %c32_i32_4 : i32 to vector<32x32xi32>
    %18 = arith.cmpi slt, %4, %17 : vector<32x32xi32>
    %19 = arith.andi %16, %18 : vector<32x32xi1>
    %20 = arith.andi %14, %19 : vector<32x32xi1>
    %21 = arith.ori %9, %20 : vector<32x32xi1>
    %c0 = arith.constant 0 : index
    %c0_5 = arith.constant 0 : index
    %22 = vector.load %arg4[%c0, %c0_5] : memref<1x32xf32, #tpu.memory_space<vmem>>, vector<1x32xf32>
    %cst = arith.constant 5.000000e-01 : f32
    %23 = vector.broadcast %cst : f32 to vector<1x32xf32>
    %24 = arith.cmpf ogt, %22, %23 : vector<1x32xf32>
    %25 = vector.broadcast %24 : vector<1x32xi1> to vector<32x32xi1>
    %26 = arith.andi %21, %25 : vector<32x32xi1>
    %cst_6 = arith.constant 0.000000e+00 : f32
    %cst_7 = arith.constant -1.000000e+09 : f32
    %27 = vector.broadcast %cst_6 : f32 to vector<32x32xf32>
    %28 = vector.broadcast %cst_7 : f32 to vector<32x32xf32>
    %29 = arith.select %26, %27, %28 : vector<32x32xi1>, vector<32x32xf32>
    %c0_8 = arith.constant 0 : index
    %c0_9 = arith.constant 0 : index
    %30 = vector.load %arg27[%c0_8, %c0_9] : memref<32x32xf32, #tpu.memory_space<vmem>>, vector<32x32xf32>
    %31 = arith.truncf %30 : vector<32x32xf32> to vector<32x32xbf16>
    %cst_10 = arith.constant 0.000000e+00 : f32
    %32 = vector.broadcast %cst_10 : f32 to vector<32x32xf32>
    %c0_11 = arith.constant 0 : index
    %c0_12 = arith.constant 0 : index
    %c0_13 = arith.constant 0 : index
    %c0_14 = arith.constant 0 : index
    %33 = vector.load %arg7[%c0_11, %c0_12, %c0_13, %c0_14] : memref<1x2x32x16xbf16, #tpu.memory_space<vmem>>, vector<1x1x32x16xbf16>
    %34 = vector.shape_cast %33 : vector<1x1x32x16xbf16> to vector<32x16xbf16>
    %cst_15 = arith.constant dense<0.000000e+00> : vector<32x16xf32>
    %35 = tpu.matmul %31, %34, %cst_15 {dimension_numbers = #tpu.dot_dimension_numbers<[1], [0], [0], [1], [0, 0, 1, 1], [], []>} : vector<32x32xbf16>, vector<32x16xbf16>, vector<32x16xf32> -> vector<32x16xf32>
    %c0_16 = arith.constant 0 : index
    %c0_17 = arith.constant 0 : index
    %c0_18 = arith.constant 0 : index
    %c0_19 = arith.constant 0 : index
    %36 = vector.load %arg10[%c0_16, %c0_17, %c0_18, %c0_19] : memref<1x2x1x16xf32, #tpu.memory_space<vmem>>, vector<1x1x1x16xf32>
    %37 = vector.shape_cast %36 : vector<1x1x1x16xf32> to vector<1x16xf32>
    %38 = vector.broadcast %37 : vector<1x16xf32> to vector<32x16xf32>
    %39 = arith.addf %35, %38 : vector<32x16xf32>
    %c0_20 = arith.constant 0 : index
    %c0_21 = arith.constant 0 : index
    %c0_22 = arith.constant 0 : index
    %c0_23 = arith.constant 0 : index
    %40 = vector.load %arg8[%c0_20, %c0_21, %c0_22, %c0_23] : memref<1x2x32x16xbf16, #tpu.memory_space<vmem>>, vector<1x1x32x16xbf16>
    %41 = vector.shape_cast %40 : vector<1x1x32x16xbf16> to vector<32x16xbf16>
    %cst_24 = arith.constant dense<0.000000e+00> : vector<32x16xf32>
    %42 = tpu.matmul %31, %41, %cst_24 {dimension_numbers = #tpu.dot_dimension_numbers<[1], [0], [0], [1], [0, 0, 1, 1], [], []>} : vector<32x32xbf16>, vector<32x16xbf16>, vector<32x16xf32> -> vector<32x16xf32>
    %c0_25 = arith.constant 0 : index
    %c0_26 = arith.constant 0 : index
    %c0_27 = arith.constant 0 : index
    %c0_28 = arith.constant 0 : index
    %43 = vector.load %arg11[%c0_25, %c0_26, %c0_27, %c0_28] : memref<1x2x1x16xf32, #tpu.memory_space<vmem>>, vector<1x1x1x16xf32>
    %44 = vector.shape_cast %43 : vector<1x1x1x16xf32> to vector<1x16xf32>
    %45 = vector.broadcast %44 : vector<1x16xf32> to vector<32x16xf32>
    %46 = arith.addf %42, %45 : vector<32x16xf32>
    %c0_29 = arith.constant 0 : index
    %c0_30 = arith.constant 0 : index
    %c0_31 = arith.constant 0 : index
    %c0_32 = arith.constant 0 : index
    %47 = vector.load %arg9[%c0_29, %c0_30, %c0_31, %c0_32] : memref<1x2x32x16xbf16, #tpu.memory_space<vmem>>, vector<1x1x32x16xbf16>
    %48 = vector.shape_cast %47 : vector<1x1x32x16xbf16> to vector<32x16xbf16>
    %cst_33 = arith.constant dense<0.000000e+00> : vector<32x16xf32>
    %49 = tpu.matmul %31, %48, %cst_33 {dimension_numbers = #tpu.dot_dimension_numbers<[1], [0], [0], [1], [0, 0, 1, 1], [], []>} : vector<32x32xbf16>, vector<32x16xbf16>, vector<32x16xf32> -> vector<32x16xf32>
    %c0_34 = arith.constant 0 : index
    %c0_35 = arith.constant 0 : index
    %c0_36 = arith.constant 0 : index
    %c0_37 = arith.constant 0 : index
    %50 = vector.load %arg12[%c0_34, %c0_35, %c0_36, %c0_37] : memref<1x2x1x16xf32, #tpu.memory_space<vmem>>, vector<1x1x1x16xf32>
    %51 = vector.shape_cast %50 : vector<1x1x1x16xf32> to vector<1x16xf32>
    %52 = vector.broadcast %51 : vector<1x16xf32> to vector<32x16xf32>
    %53 = arith.addf %49, %52 : vector<32x16xf32>
    %54 = arith.truncf %39 : vector<32x16xf32> to vector<32x16xbf16>
    %55 = arith.truncf %46 : vector<32x16xf32> to vector<32x16xbf16>
    "tpu.trace_start"() <{level = 10 : i32, message = "qd,kd->qk"}> : () -> ()
    %cst_38 = arith.constant dense<0.000000e+00> : vector<32x32xf32>
    %56 = tpu.matmul %54, %55, %cst_38 {dimension_numbers = #tpu.dot_dimension_numbers<[1], [1], [0], [0], [0, 0, 1, 0], [], []>} : vector<32x16xbf16>, vector<32x16xbf16>, vector<32x32xf32> -> vector<32x32xf32>
    "tpu.trace_stop"() : () -> ()
    %cst_39 = arith.constant 2.500000e-01 : f32
    %57 = vector.broadcast %cst_39 : f32 to vector<32x32xf32>
    %58 = arith.mulf %56, %57 : vector<32x32xf32>
    %59 = arith.addf %58, %29 : vector<32x32xf32>
    %cst_40 = arith.constant dense<0xFF800000> : vector<32xf32>
    %60 = vector.multi_reduction <maximumf>, %59, %cst_40 [1] : vector<32x32xf32> to vector<32xf32>
    %61 = vector.shape_cast %60 : vector<32xf32> to vector<32x1xf32>
    %62 = vector.broadcast %61 : vector<32x1xf32> to vector<32x32xf32>
    %63 = arith.subf %59, %62 : vector<32x32xf32>
    %64 = math.exp %63 : vector<32x32xf32>
    %cst_41 = arith.constant dense<0.000000e+00> : vector<32xf32>
    %65 = vector.multi_reduction <add>, %64, %cst_41 [1] : vector<32x32xf32> to vector<32xf32>
    %66 = vector.shape_cast %65 : vector<32xf32> to vector<32x1xf32>
    %67 = tpu.reciprocal %66 {approx = true} : vector<32x1xf32> -> vector<32x1xf32>
    %68 = vector.broadcast %67 : vector<32x1xf32> to vector<32x32xf32>
    %69 = arith.mulf %64, %68 : vector<32x32xf32>
    %70 = arith.truncf %69 : vector<32x32xf32> to vector<32x32xbf16>
    %71 = arith.truncf %53 : vector<32x16xf32> to vector<32x16xbf16>
    %cst_42 = arith.constant dense<0.000000e+00> : vector<32x16xf32>
    %72 = tpu.matmul %70, %71, %cst_42 {dimension_numbers = #tpu.dot_dimension_numbers<[1], [0], [0], [1], [0, 0, 1, 1], [], []>} : vector<32x32xbf16>, vector<32x16xbf16>, vector<32x16xf32> -> vector<32x16xf32>
    %73 = arith.truncf %72 : vector<32x16xf32> to vector<32x16xbf16>
    %c0_43 = arith.constant 0 : index
    %c0_44 = arith.constant 0 : index
    %c0_45 = arith.constant 0 : index
    %c0_46 = arith.constant 0 : index
    %74 = vector.load %arg13[%c0_43, %c0_44, %c0_45, %c0_46] : memref<1x2x16x32xbf16, #tpu.memory_space<vmem>>, vector<1x1x16x32xbf16>
    %75 = vector.shape_cast %74 : vector<1x1x16x32xbf16> to vector<16x32xbf16>
    %cst_47 = arith.constant dense<0.000000e+00> : vector<32x32xf32>
    %76 = tpu.matmul %73, %75, %cst_47 {dimension_numbers = #tpu.dot_dimension_numbers<[1], [0], [0], [1], [0, 0, 1, 1], [], []>} : vector<32x16xbf16>, vector<16x32xbf16>, vector<32x32xf32> -> vector<32x32xf32>
    %77 = arith.addf %32, %76 : vector<32x32xf32>
    %c0_48 = arith.constant 0 : index
    %c1 = arith.constant 1 : index
    %c0_49 = arith.constant 0 : index
    %c0_50 = arith.constant 0 : index
    %78 = vector.load %arg7[%c0_48, %c1, %c0_49, %c0_50] : memref<1x2x32x16xbf16, #tpu.memory_space<vmem>>, vector<1x1x32x16xbf16>
    %79 = vector.shape_cast %78 : vector<1x1x32x16xbf16> to vector<32x16xbf16>
    %cst_51 = arith.constant dense<0.000000e+00> : vector<32x16xf32>
    %80 = tpu.matmul %31, %79, %cst_51 {dimension_numbers = #tpu.dot_dimension_numbers<[1], [0], [0], [1], [0, 0, 1, 1], [], []>} : vector<32x32xbf16>, vector<32x16xbf16>, vector<32x16xf32> -> vector<32x16xf32>
    %c0_52 = arith.constant 0 : index
    %c1_53 = arith.constant 1 : index
    %c0_54 = arith.constant 0 : index
    %c0_55 = arith.constant 0 : index
    %81 = vector.load %arg10[%c0_52, %c1_53, %c0_54, %c0_55] : memref<1x2x1x16xf32, #tpu.memory_space<vmem>>, vector<1x1x1x16xf32>
    %82 = vector.shape_cast %81 : vector<1x1x1x16xf32> to vector<1x16xf32>
    %83 = vector.broadcast %82 : vector<1x16xf32> to vector<32x16xf32>
    %84 = arith.addf %80, %83 : vector<32x16xf32>
    %c0_56 = arith.constant 0 : index
    %c1_57 = arith.constant 1 : index
    %c0_58 = arith.constant 0 : index
    %c0_59 = arith.constant 0 : index
    %85 = vector.load %arg8[%c0_56, %c1_57, %c0_58, %c0_59] : memref<1x2x32x16xbf16, #tpu.memory_space<vmem>>, vector<1x1x32x16xbf16>
    %86 = vector.shape_cast %85 : vector<1x1x32x16xbf16> to vector<32x16xbf16>
    %cst_60 = arith.constant dense<0.000000e+00> : vector<32x16xf32>
    %87 = tpu.matmul %31, %86, %cst_60 {dimension_numbers = #tpu.dot_dimension_numbers<[1], [0], [0], [1], [0, 0, 1, 1], [], []>} : vector<32x32xbf16>, vector<32x16xbf16>, vector<32x16xf32> -> vector<32x16xf32>
    %c0_61 = arith.constant 0 : index
    %c1_62 = arith.constant 1 : index
    %c0_63 = arith.constant 0 : index
    %c0_64 = arith.constant 0 : index
    %88 = vector.load %arg11[%c0_61, %c1_62, %c0_63, %c0_64] : memref<1x2x1x16xf32, #tpu.memory_space<vmem>>, vector<1x1x1x16xf32>
    %89 = vector.shape_cast %88 : vector<1x1x1x16xf32> to vector<1x16xf32>
    %90 = vector.broadcast %89 : vector<1x16xf32> to vector<32x16xf32>
    %91 = arith.addf %87, %90 : vector<32x16xf32>
    %c0_65 = arith.constant 0 : index
    %c1_66 = arith.constant 1 : index
    %c0_67 = arith.constant 0 : index
    %c0_68 = arith.constant 0 : index
    %92 = vector.load %arg9[%c0_65, %c1_66, %c0_67, %c0_68] : memref<1x2x32x16xbf16, #tpu.memory_space<vmem>>, vector<1x1x32x16xbf16>
    %93 = vector.shape_cast %92 : vector<1x1x32x16xbf16> to vector<32x16xbf16>
    %cst_69 = arith.constant dense<0.000000e+00> : vector<32x16xf32>
    %94 = tpu.matmul %31, %93, %cst_69 {dimension_numbers = #tpu.dot_dimension_numbers<[1], [0], [0], [1], [0, 0, 1, 1], [], []>} : vector<32x32xbf16>, vector<32x16xbf16>, vector<32x16xf32> -> vector<32x16xf32>
    %c0_70 = arith.constant 0 : index
    %c1_71 = arith.constant 1 : index
    %c0_72 = arith.constant 0 : index
    %c0_73 = arith.constant 0 : index
    %95 = vector.load %arg12[%c0_70, %c1_71, %c0_72, %c0_73] : memref<1x2x1x16xf32, #tpu.memory_space<vmem>>, vector<1x1x1x16xf32>
    %96 = vector.shape_cast %95 : vector<1x1x1x16xf32> to vector<1x16xf32>
    %97 = vector.broadcast %96 : vector<1x16xf32> to vector<32x16xf32>
    %98 = arith.addf %94, %97 : vector<32x16xf32>
    %99 = arith.truncf %84 : vector<32x16xf32> to vector<32x16xbf16>
    %100 = arith.truncf %91 : vector<32x16xf32> to vector<32x16xbf16>
    "tpu.trace_start"() <{level = 10 : i32, message = "qd,kd->qk"}> : () -> ()
    %cst_74 = arith.constant dense<0.000000e+00> : vector<32x32xf32>
    %101 = tpu.matmul %99, %100, %cst_74 {dimension_numbers = #tpu.dot_dimension_numbers<[1], [1], [0], [0], [0, 0, 1, 0], [], []>} : vector<32x16xbf16>, vector<32x16xbf16>, vector<32x32xf32> -> vector<32x32xf32>
    "tpu.trace_stop"() : () -> ()
    %cst_75 = arith.constant 2.500000e-01 : f32
    %102 = vector.broadcast %cst_75 : f32 to vector<32x32xf32>
    %103 = arith.mulf %101, %102 : vector<32x32xf32>
    %104 = arith.addf %103, %29 : vector<32x32xf32>
    %cst_76 = arith.constant dense<0xFF800000> : vector<32xf32>
    %105 = vector.multi_reduction <maximumf>, %104, %cst_76 [1] : vector<32x32xf32> to vector<32xf32>
    %106 = vector.shape_cast %105 : vector<32xf32> to vector<32x1xf32>
    %107 = vector.broadcast %106 : vector<32x1xf32> to vector<32x32xf32>
    %108 = arith.subf %104, %107 : vector<32x32xf32>
    %109 = math.exp %108 : vector<32x32xf32>
    %cst_77 = arith.constant dense<0.000000e+00> : vector<32xf32>
    %110 = vector.multi_reduction <add>, %109, %cst_77 [1] : vector<32x32xf32> to vector<32xf32>
    %111 = vector.shape_cast %110 : vector<32xf32> to vector<32x1xf32>
    %112 = tpu.reciprocal %111 {approx = true} : vector<32x1xf32> -> vector<32x1xf32>
    %113 = vector.broadcast %112 : vector<32x1xf32> to vector<32x32xf32>
    %114 = arith.mulf %109, %113 : vector<32x32xf32>
    %115 = arith.truncf %114 : vector<32x32xf32> to vector<32x32xbf16>
    %116 = arith.truncf %98 : vector<32x16xf32> to vector<32x16xbf16>
    %cst_78 = arith.constant dense<0.000000e+00> : vector<32x16xf32>
    %117 = tpu.matmul %115, %116, %cst_78 {dimension_numbers = #tpu.dot_dimension_numbers<[1], [0], [0], [1], [0, 0, 1, 1], [], []>} : vector<32x32xbf16>, vector<32x16xbf16>, vector<32x16xf32> -> vector<32x16xf32>
    %118 = arith.truncf %117 : vector<32x16xf32> to vector<32x16xbf16>
    %c0_79 = arith.constant 0 : index
    %c1_80 = arith.constant 1 : index
    %c0_81 = arith.constant 0 : index
    %c0_82 = arith.constant 0 : index
    %119 = vector.load %arg13[%c0_79, %c1_80, %c0_81, %c0_82] : memref<1x2x16x32xbf16, #tpu.memory_space<vmem>>, vector<1x1x16x32xbf16>
    %120 = vector.shape_cast %119 : vector<1x1x16x32xbf16> to vector<16x32xbf16>
    %cst_83 = arith.constant dense<0.000000e+00> : vector<32x32xf32>
    %121 = tpu.matmul %118, %120, %cst_83 {dimension_numbers = #tpu.dot_dimension_numbers<[1], [0], [0], [1], [0, 0, 1, 1], [], []>} : vector<32x16xbf16>, vector<16x32xbf16>, vector<32x32xf32> -> vector<32x32xf32>
    %122 = arith.addf %77, %121 : vector<32x32xf32>
    %c0_84 = arith.constant 0 : index
    %c0_85 = arith.constant 0 : index
    %c0_86 = arith.constant 0 : index
    %123 = vector.load %arg14[%c0_84, %c0_85, %c0_86] : memref<1x1x32xf32, #tpu.memory_space<vmem>>, vector<1x1x32xf32>
    %124 = vector.shape_cast %123 : vector<1x1x32xf32> to vector<1x32xf32>
    %125 = vector.broadcast %124 : vector<1x32xf32> to vector<32x32xf32>
    %126 = arith.addf %122, %125 : vector<32x32xf32>
    %127 = arith.addf %30, %126 : vector<32x32xf32>
    %c0_87 = arith.constant 0 : index
    %c0_88 = arith.constant 0 : index
    %c0_89 = arith.constant 0 : index
    %128 = vector.load %arg15[%c0_87, %c0_88, %c0_89] : memref<1x1x32xf32, #tpu.memory_space<vmem>>, vector<1x1x32xf32>
    %129 = vector.shape_cast %128 : vector<1x1x32xf32> to vector<1x32xf32>
    %c0_90 = arith.constant 0 : index
    %c0_91 = arith.constant 0 : index
    %c0_92 = arith.constant 0 : index
    %130 = vector.load %arg16[%c0_90, %c0_91, %c0_92] : memref<1x1x32xf32, #tpu.memory_space<vmem>>, vector<1x1x32xf32>
    %131 = vector.shape_cast %130 : vector<1x1x32xf32> to vector<1x32xf32>
    %cst_93 = arith.constant dense<0.000000e+00> : vector<32xf32>
    %132 = vector.multi_reduction <add>, %127, %cst_93 [1] : vector<32x32xf32> to vector<32xf32>
    %133 = vector.shape_cast %132 : vector<32xf32> to vector<32x1xf32>
    %cst_94 = arith.constant 3.200000e+01 : f32
    %134 = vector.broadcast %cst_94 : f32 to vector<32x1xf32>
    %135 = arith.divf %133, %134 : vector<32x1xf32>
    %136 = vector.broadcast %135 : vector<32x1xf32> to vector<32x32xf32>
    %137 = arith.subf %127, %136 : vector<32x32xf32>
    %138 = arith.mulf %137, %137 : vector<32x32xf32>
    %cst_95 = arith.constant dense<0.000000e+00> : vector<32xf32>
    %139 = vector.multi_reduction <add>, %138, %cst_95 [1] : vector<32x32xf32> to vector<32xf32>
    %140 = vector.shape_cast %139 : vector<32xf32> to vector<32x1xf32>
    %cst_96 = arith.constant 3.200000e+01 : f32
    %141 = vector.broadcast %cst_96 : f32 to vector<32x1xf32>
    %142 = arith.divf %140, %141 : vector<32x1xf32>
    %143 = vector.broadcast %135 : vector<32x1xf32> to vector<32x32xf32>
    %144 = arith.subf %127, %143 : vector<32x32xf32>
    %cst_97 = arith.constant 9.99999996E-13 : f32
    %145 = vector.broadcast %cst_97 : f32 to vector<32x1xf32>
    %146 = arith.addf %142, %145 : vector<32x1xf32>
    %147 = math.rsqrt %146 : vector<32x1xf32>
    %148 = vector.broadcast %147 : vector<32x1xf32> to vector<32x32xf32>
    %149 = arith.mulf %144, %148 : vector<32x32xf32>
    %150 = vector.broadcast %129 : vector<1x32xf32> to vector<32x32xf32>
    %151 = arith.mulf %149, %150 : vector<32x32xf32>
    %152 = vector.broadcast %131 : vector<1x32xf32> to vector<32x32xf32>
    %153 = arith.addf %151, %152 : vector<32x32xf32>
    %154 = arith.truncf %153 : vector<32x32xf32> to vector<32x32xbf16>
    %c0_98 = arith.constant 0 : index
    %c0_99 = arith.constant 0 : index
    %c0_100 = arith.constant 0 : index
    %155 = vector.load %arg17[%c0_98, %c0_99, %c0_100] : memref<1x32x64xbf16, #tpu.memory_space<vmem>>, vector<1x32x64xbf16>
    %156 = vector.shape_cast %155 : vector<1x32x64xbf16> to vector<32x64xbf16>
    %cst_101 = arith.constant dense<0.000000e+00> : vector<32x64xf32>
    %157 = tpu.matmul %154, %156, %cst_101 {dimension_numbers = #tpu.dot_dimension_numbers<[1], [0], [0], [1], [0, 0, 1, 1], [], []>} : vector<32x32xbf16>, vector<32x64xbf16>, vector<32x64xf32> -> vector<32x64xf32>
    %c0_102 = arith.constant 0 : index
    %c0_103 = arith.constant 0 : index
    %c0_104 = arith.constant 0 : index
    %158 = vector.load %arg18[%c0_102, %c0_103, %c0_104] : memref<1x1x64xf32, #tpu.memory_space<vmem>>, vector<1x1x64xf32>
    %159 = vector.shape_cast %158 : vector<1x1x64xf32> to vector<1x64xf32>
    %160 = vector.broadcast %159 : vector<1x64xf32> to vector<32x64xf32>
    %161 = arith.addf %157, %160 : vector<32x64xf32>
    %cst_105 = arith.constant 5.000000e-01 : f32
    %162 = vector.broadcast %cst_105 : f32 to vector<32x64xf32>
    %163 = arith.mulf %162, %161 : vector<32x64xf32>
    %cst_106 = arith.constant 4.471500e-02 : f32
    %164 = vector.broadcast %cst_106 : f32 to vector<32x64xf32>
    %165 = arith.mulf %164, %161 : vector<32x64xf32>
    %166 = arith.mulf %165, %161 : vector<32x64xf32>
    %167 = arith.mulf %166, %161 : vector<32x64xf32>
    %168 = arith.addf %161, %167 : vector<32x64xf32>
    %cst_107 = arith.constant 0.797884583 : f32
    %169 = vector.broadcast %cst_107 : f32 to vector<32x64xf32>
    %170 = arith.mulf %169, %168 : vector<32x64xf32>
    %171 = math.tanh %170 : vector<32x64xf32>
    %cst_108 = arith.constant 1.000000e+00 : f32
    %172 = vector.broadcast %cst_108 : f32 to vector<32x64xf32>
    %173 = arith.addf %172, %171 : vector<32x64xf32>
    %174 = arith.mulf %163, %173 : vector<32x64xf32>
    %175 = arith.truncf %174 : vector<32x64xf32> to vector<32x64xbf16>
    %c0_109 = arith.constant 0 : index
    %c0_110 = arith.constant 0 : index
    %c0_111 = arith.constant 0 : index
    %176 = vector.load %arg19[%c0_109, %c0_110, %c0_111] : memref<1x64x32xbf16, #tpu.memory_space<vmem>>, vector<1x64x32xbf16>
    %177 = vector.shape_cast %176 : vector<1x64x32xbf16> to vector<64x32xbf16>
    %cst_112 = arith.constant dense<0.000000e+00> : vector<32x32xf32>
    %178 = tpu.matmul %175, %177, %cst_112 {dimension_numbers = #tpu.dot_dimension_numbers<[1], [0], [0], [1], [0, 0, 1, 1], [], []>} : vector<32x64xbf16>, vector<64x32xbf16>, vector<32x32xf32> -> vector<32x32xf32>
    %c0_113 = arith.constant 0 : index
    %c0_114 = arith.constant 0 : index
    %c0_115 = arith.constant 0 : index
    %179 = vector.load %arg20[%c0_113, %c0_114, %c0_115] : memref<1x1x32xf32, #tpu.memory_space<vmem>>, vector<1x1x32xf32>
    %180 = vector.shape_cast %179 : vector<1x1x32xf32> to vector<1x32xf32>
    %181 = vector.broadcast %180 : vector<1x32xf32> to vector<32x32xf32>
    %182 = arith.addf %178, %181 : vector<32x32xf32>
    %183 = arith.addf %153, %182 : vector<32x32xf32>
    %c0_116 = arith.constant 0 : index
    %c0_117 = arith.constant 0 : index
    %c0_118 = arith.constant 0 : index
    %184 = vector.load %arg21[%c0_116, %c0_117, %c0_118] : memref<1x1x32xf32, #tpu.memory_space<vmem>>, vector<1x1x32xf32>
    %185 = vector.shape_cast %184 : vector<1x1x32xf32> to vector<1x32xf32>
    %c0_119 = arith.constant 0 : index
    %c0_120 = arith.constant 0 : index
    %c0_121 = arith.constant 0 : index
    %186 = vector.load %arg22[%c0_119, %c0_120, %c0_121] : memref<1x1x32xf32, #tpu.memory_space<vmem>>, vector<1x1x32xf32>
    %187 = vector.shape_cast %186 : vector<1x1x32xf32> to vector<1x32xf32>
    %cst_122 = arith.constant dense<0.000000e+00> : vector<32xf32>
    %188 = vector.multi_reduction <add>, %183, %cst_122 [1] : vector<32x32xf32> to vector<32xf32>
    %189 = vector.shape_cast %188 : vector<32xf32> to vector<32x1xf32>
    %cst_123 = arith.constant 3.200000e+01 : f32
    %190 = vector.broadcast %cst_123 : f32 to vector<32x1xf32>
    %191 = arith.divf %189, %190 : vector<32x1xf32>
    %192 = vector.broadcast %191 : vector<32x1xf32> to vector<32x32xf32>
    %193 = arith.subf %183, %192 : vector<32x32xf32>
    %194 = arith.mulf %193, %193 : vector<32x32xf32>
    %cst_124 = arith.constant dense<0.000000e+00> : vector<32xf32>
    %195 = vector.multi_reduction <add>, %194, %cst_124 [1] : vector<32x32xf32> to vector<32xf32>
    %196 = vector.shape_cast %195 : vector<32xf32> to vector<32x1xf32>
    %cst_125 = arith.constant 3.200000e+01 : f32
    %197 = vector.broadcast %cst_125 : f32 to vector<32x1xf32>
    %198 = arith.divf %196, %197 : vector<32x1xf32>
    %199 = vector.broadcast %191 : vector<32x1xf32> to vector<32x32xf32>
    %200 = arith.subf %183, %199 : vector<32x32xf32>
    %cst_126 = arith.constant 9.99999996E-13 : f32
    %201 = vector.broadcast %cst_126 : f32 to vector<32x1xf32>
    %202 = arith.addf %198, %201 : vector<32x1xf32>
    %203 = math.rsqrt %202 : vector<32x1xf32>
    %204 = vector.broadcast %203 : vector<32x1xf32> to vector<32x32xf32>
    %205 = arith.mulf %200, %204 : vector<32x32xf32>
    %206 = vector.broadcast %185 : vector<1x32xf32> to vector<32x32xf32>
    %207 = arith.mulf %205, %206 : vector<32x32xf32>
    %208 = vector.broadcast %187 : vector<1x32xf32> to vector<32x32xf32>
    %209 = arith.addf %207, %208 : vector<32x32xf32>
    %c0_127 = arith.constant 0 : index
    %c0_128 = arith.constant 0 : index
    %210 = vector.load %arg27[%c0_127, %c0_128] : memref<32x32xf32, #tpu.memory_space<vmem>>, vector<32x32xf32>
    tpu.vector_store %arg27[%c0_127, %c0_128], %209 {strides = array<i32>} : memref<32x32xf32, #tpu.memory_space<vmem>>, vector<32x32xf32>,
    %c1_i32 = arith.constant 1 : i32
    %211 = arith.cmpi eq, %arg0, %c1_i32 : i32
    %212 = arith.extui %211 : i1 to i32
    %c0_i32_129 = arith.constant 0 : i32
    %213 = arith.cmpi ne, %212, %c0_i32_129 : i32
    scf.if %213 {
      %214 = tpu.iota {dimensions = array<i32: 0>} : vector<8x32xi32>
      %215 = tpu.iota {dimensions = array<i32: 1>} : vector<8x32xi32>
      %cst_130 = arith.constant 0.000000e+00 : f32
      %216 = vector.broadcast %cst_130 : f32 to vector<8x32xf32>
      %c0_131 = arith.constant 0 : index
      %c0_132 = arith.constant 0 : index
      %217 = memref.load %arg1[%c0_131, %c0_132] : memref<2x4xi32, #tpu.memory_space<smem>>
      %c0_i32_133 = arith.constant 0 : i32
      %218 = arith.maxsi %217, %c0_i32_133 : i32
      %c15_i32 = arith.constant 15 : i32
      %219 = arith.minsi %218, %c15_i32 : i32
      %c0_i32_134 = arith.constant 0 : i32
      %220 = arith.addi %c0_i32_134, %219 : i32
      %c0_135 = arith.constant 0 : index
      %221 = memref.load %arg2[%c0_135] : memref<2xi32, #tpu.memory_space<smem>>
      %c0_i32_136 = arith.constant 0 : i32
      %222 = arith.cmpi sgt, %221, %c0_i32_136 : i32
      %cst_137 = arith.constant 1.000000e+00 : f32
      %cst_138 = arith.constant 0.000000e+00 : f32
      %223 = arith.select %222, %cst_137, %cst_138 : f32
      %c0_i32_139 = arith.constant 0 : i32
      %224 = vector.broadcast %c0_i32_139 : i32 to vector<8x32xi32>
      %225 = arith.cmpi eq, %214, %224 : vector<8x32xi32>
      %226 = vector.broadcast %220 : i32 to vector<8x32xi32>
      %227 = arith.cmpi eq, %215, %226 : vector<8x32xi32>
      %228 = arith.andi %225, %227 : vector<8x32xi1>
      %229 = vector.broadcast %223 : f32 to vector<8x32xf32>
      %230 = arith.select %228, %229, %216 : vector<8x32xi1>, vector<8x32xf32>
      %c0_140 = arith.constant 0 : index
      %c1_141 = arith.constant 1 : index
      %231 = memref.load %arg1[%c0_140, %c1_141] : memref<2x4xi32, #tpu.memory_space<smem>>
      %c0_i32_142 = arith.constant 0 : i32
      %232 = arith.maxsi %231, %c0_i32_142 : i32
      %c15_i32_143 = arith.constant 15 : i32
      %233 = arith.minsi %232, %c15_i32_143 : i32
      %c0_i32_144 = arith.constant 0 : i32
      %234 = arith.addi %c0_i32_144, %233 : i32
      %c0_145 = arith.constant 0 : index
      %235 = memref.load %arg2[%c0_145] : memref<2xi32, #tpu.memory_space<smem>>
      %c1_i32_146 = arith.constant 1 : i32
      %236 = arith.cmpi sgt, %235, %c1_i32_146 : i32
      %cst_147 = arith.constant 1.000000e+00 : f32
      %cst_148 = arith.constant 0.000000e+00 : f32
      %237 = arith.select %236, %cst_147, %cst_148 : f32
      %c1_i32_149 = arith.constant 1 : i32
      %238 = vector.broadcast %c1_i32_149 : i32 to vector<8x32xi32>
      %239 = arith.cmpi eq, %214, %238 : vector<8x32xi32>
      %240 = vector.broadcast %234 : i32 to vector<8x32xi32>
      %241 = arith.cmpi eq, %215, %240 : vector<8x32xi32>
      %242 = arith.andi %239, %241 : vector<8x32xi1>
      %243 = vector.broadcast %237 : f32 to vector<8x32xf32>
      %244 = arith.select %242, %243, %230 : vector<8x32xi1>, vector<8x32xf32>
      %c0_150 = arith.constant 0 : index
      %c2 = arith.constant 2 : index
      %245 = memref.load %arg1[%c0_150, %c2] : memref<2x4xi32, #tpu.memory_space<smem>>
      %c0_i32_151 = arith.constant 0 : i32
      %246 = arith.maxsi %245, %c0_i32_151 : i32
      %c15_i32_152 = arith.constant 15 : i32
      %247 = arith.minsi %246, %c15_i32_152 : i32
      %c0_i32_153 = arith.constant 0 : i32
      %248 = arith.addi %c0_i32_153, %247 : i32
      %c0_154 = arith.constant 0 : index
      %249 = memref.load %arg2[%c0_154] : memref<2xi32, #tpu.memory_space<smem>>
      %c2_i32 = arith.constant 2 : i32
      %250 = arith.cmpi sgt, %249, %c2_i32 : i32
      %cst_155 = arith.constant 1.000000e+00 : f32
      %cst_156 = arith.constant 0.000000e+00 : f32
      %251 = arith.select %250, %cst_155, %cst_156 : f32
      %c2_i32_157 = arith.constant 2 : i32
      %252 = vector.broadcast %c2_i32_157 : i32 to vector<8x32xi32>
      %253 = arith.cmpi eq, %214, %252 : vector<8x32xi32>
      %254 = vector.broadcast %248 : i32 to vector<8x32xi32>
      %255 = arith.cmpi eq, %215, %254 : vector<8x32xi32>
      %256 = arith.andi %253, %255 : vector<8x32xi1>
      %257 = vector.broadcast %251 : f32 to vector<8x32xf32>
      %258 = arith.select %256, %257, %244 : vector<8x32xi1>, vector<8x32xf32>
      %c0_158 = arith.constant 0 : index
      %c3 = arith.constant 3 : index
      %259 = memref.load %arg1[%c0_158, %c3] : memref<2x4xi32, #tpu.memory_space<smem>>
      %c0_i32_159 = arith.constant 0 : i32
      %260 = arith.maxsi %259, %c0_i32_159 : i32
      %c15_i32_160 = arith.constant 15 : i32
      %261 = arith.minsi %260, %c15_i32_160 : i32
      %c0_i32_161 = arith.constant 0 : i32
      %262 = arith.addi %c0_i32_161, %261 : i32
      %c0_162 = arith.constant 0 : index
      %263 = memref.load %arg2[%c0_162] : memref<2xi32, #tpu.memory_space<smem>>
      %c3_i32 = arith.constant 3 : i32
      %264 = arith.cmpi sgt, %263, %c3_i32 : i32
      %cst_163 = arith.constant 1.000000e+00 : f32
      %cst_164 = arith.constant 0.000000e+00 : f32
      %265 = arith.select %264, %cst_163, %cst_164 : f32
      %c3_i32_165 = arith.constant 3 : i32
      %266 = vector.broadcast %c3_i32_165 : i32 to vector<8x32xi32>
      %267 = arith.cmpi eq, %214, %266 : vector<8x32xi32>
      %268 = vector.broadcast %262 : i32 to vector<8x32xi32>
      %269 = arith.cmpi eq, %215, %268 : vector<8x32xi32>
      %270 = arith.andi %267, %269 : vector<8x32xi1>
      %271 = vector.broadcast %265 : f32 to vector<8x32xf32>
      %272 = arith.select %270, %271, %258 : vector<8x32xi1>, vector<8x32xf32>
      %c1_166 = arith.constant 1 : index
      %c0_167 = arith.constant 0 : index
      %273 = memref.load %arg1[%c1_166, %c0_167] : memref<2x4xi32, #tpu.memory_space<smem>>
      %c0_i32_168 = arith.constant 0 : i32
      %274 = arith.maxsi %273, %c0_i32_168 : i32
      %c15_i32_169 = arith.constant 15 : i32
      %275 = arith.minsi %274, %c15_i32_169 : i32
      %c16_i32_170 = arith.constant 16 : i32
      %276 = arith.addi %c16_i32_170, %275 : i32
      %c1_171 = arith.constant 1 : index
      %277 = memref.load %arg2[%c1_171] : memref<2xi32, #tpu.memory_space<smem>>
      %c0_i32_172 = arith.constant 0 : i32
      %278 = arith.cmpi sgt, %277, %c0_i32_172 : i32
      %cst_173 = arith.constant 1.000000e+00 : f32
      %cst_174 = arith.constant 0.000000e+00 : f32
      %279 = arith.select %278, %cst_173, %cst_174 : f32
      %c4_i32 = arith.constant 4 : i32
      %280 = vector.broadcast %c4_i32 : i32 to vector<8x32xi32>
      %281 = arith.cmpi eq, %214, %280 : vector<8x32xi32>
      %282 = vector.broadcast %276 : i32 to vector<8x32xi32>
      %283 = arith.cmpi eq, %215, %282 : vector<8x32xi32>
      %284 = arith.andi %281, %283 : vector<8x32xi1>
      %285 = vector.broadcast %279 : f32 to vector<8x32xf32>
      %286 = arith.select %284, %285, %272 : vector<8x32xi1>, vector<8x32xf32>
      %c1_175 = arith.constant 1 : index
      %c1_176 = arith.constant 1 : index
      %287 = memref.load %arg1[%c1_175, %c1_176] : memref<2x4xi32, #tpu.memory_space<smem>>
      %c0_i32_177 = arith.constant 0 : i32
      %288 = arith.maxsi %287, %c0_i32_177 : i32
      %c15_i32_178 = arith.constant 15 : i32
      %289 = arith.minsi %288, %c15_i32_178 : i32
      %c16_i32_179 = arith.constant 16 : i32
      %290 = arith.addi %c16_i32_179, %289 : i32
      %c1_180 = arith.constant 1 : index
      %291 = memref.load %arg2[%c1_180] : memref<2xi32, #tpu.memory_space<smem>>
      %c1_i32_181 = arith.constant 1 : i32
      %292 = arith.cmpi sgt, %291, %c1_i32_181 : i32
      %cst_182 = arith.constant 1.000000e+00 : f32
      %cst_183 = arith.constant 0.000000e+00 : f32
      %293 = arith.select %292, %cst_182, %cst_183 : f32
      %c5_i32 = arith.constant 5 : i32
      %294 = vector.broadcast %c5_i32 : i32 to vector<8x32xi32>
      %295 = arith.cmpi eq, %214, %294 : vector<8x32xi32>
      %296 = vector.broadcast %290 : i32 to vector<8x32xi32>
      %297 = arith.cmpi eq, %215, %296 : vector<8x32xi32>
      %298 = arith.andi %295, %297 : vector<8x32xi1>
      %299 = vector.broadcast %293 : f32 to vector<8x32xf32>
      %300 = arith.select %298, %299, %286 : vector<8x32xi1>, vector<8x32xf32>
      %c1_184 = arith.constant 1 : index
      %c2_185 = arith.constant 2 : index
      %301 = memref.load %arg1[%c1_184, %c2_185] : memref<2x4xi32, #tpu.memory_space<smem>>
      %c0_i32_186 = arith.constant 0 : i32
      %302 = arith.maxsi %301, %c0_i32_186 : i32
      %c15_i32_187 = arith.constant 15 : i32
      %303 = arith.minsi %302, %c15_i32_187 : i32
      %c16_i32_188 = arith.constant 16 : i32
      %304 = arith.addi %c16_i32_188, %303 : i32
      %c1_189 = arith.constant 1 : index
      %305 = memref.load %arg2[%c1_189] : memref<2xi32, #tpu.memory_space<smem>>
      %c2_i32_190 = arith.constant 2 : i32
      %306 = arith.cmpi sgt, %305, %c2_i32_190 : i32
      %cst_191 = arith.constant 1.000000e+00 : f32
      %cst_192 = arith.constant 0.000000e+00 : f32
      %307 = arith.select %306, %cst_191, %cst_192 : f32
      %c6_i32 = arith.constant 6 : i32
      %308 = vector.broadcast %c6_i32 : i32 to vector<8x32xi32>
      %309 = arith.cmpi eq, %214, %308 : vector<8x32xi32>
      %310 = vector.broadcast %304 : i32 to vector<8x32xi32>
      %311 = arith.cmpi eq, %215, %310 : vector<8x32xi32>
      %312 = arith.andi %309, %311 : vector<8x32xi1>
      %313 = vector.broadcast %307 : f32 to vector<8x32xf32>
      %314 = arith.select %312, %313, %300 : vector<8x32xi1>, vector<8x32xf32>
      %c1_193 = arith.constant 1 : index
      %c3_194 = arith.constant 3 : index
      %315 = memref.load %arg1[%c1_193, %c3_194] : memref<2x4xi32, #tpu.memory_space<smem>>
      %c0_i32_195 = arith.constant 0 : i32
      %316 = arith.maxsi %315, %c0_i32_195 : i32
      %c15_i32_196 = arith.constant 15 : i32
      %317 = arith.minsi %316, %c15_i32_196 : i32
      %c16_i32_197 = arith.constant 16 : i32
      %318 = arith.addi %c16_i32_197, %317 : i32
      %c1_198 = arith.constant 1 : index
      %319 = memref.load %arg2[%c1_198] : memref<2xi32, #tpu.memory_space<smem>>
      %c3_i32_199 = arith.constant 3 : i32
      %320 = arith.cmpi sgt, %319, %c3_i32_199 : i32
      %cst_200 = arith.constant 1.000000e+00 : f32
      %cst_201 = arith.constant 0.000000e+00 : f32
      %321 = arith.select %320, %cst_200, %cst_201 : f32
      %c7_i32 = arith.constant 7 : i32
      %322 = vector.broadcast %c7_i32 : i32 to vector<8x32xi32>
      %323 = arith.cmpi eq, %214, %322 : vector<8x32xi32>
      %324 = vector.broadcast %318 : i32 to vector<8x32xi32>
      %325 = arith.cmpi eq, %215, %324 : vector<8x32xi32>
      %326 = arith.andi %323, %325 : vector<8x32xi1>
      %327 = vector.broadcast %321 : f32 to vector<8x32xf32>
      %328 = arith.select %326, %327, %314 : vector<8x32xi1>, vector<8x32xf32>
      %cst_202 = arith.constant dense<0.000000e+00> : vector<8x32xf32>
      %329 = tpu.matmul %328, %209, %cst_202 {dimension_numbers = #tpu.dot_dimension_numbers<[1], [0], [0], [1], [0, 0, 1, 1], [], []>} : vector<8x32xf32>, vector<32x32xf32>, vector<8x32xf32> -> vector<8x32xf32>
      %c0_203 = arith.constant 0 : index
      %c0_204 = arith.constant 0 : index
      %330 = vector.load %arg25[%c0_203, %c0_204] : memref<8x32xf32, #tpu.memory_space<vmem>>, vector<8x32xf32>
      tpu.vector_store %arg25[%c0_203, %c0_204], %329 {strides = array<i32>} : memref<8x32xf32, #tpu.memory_space<vmem>>, vector<8x32xf32>,
      %331 = arith.truncf %329 : vector<8x32xf32> to vector<8x32xbf16>
      %c0_205 = arith.constant 0 : index
      %c0_206 = arith.constant 0 : index
      %332 = vector.load %arg23[%c0_205, %c0_206] : memref<32x128xbf16, #tpu.memory_space<vmem>>, vector<32x128xbf16>
      %cst_207 = arith.constant dense<0.000000e+00> : vector<8x128xf32>
      %333 = tpu.matmul %331, %332, %cst_207 {dimension_numbers = #tpu.dot_dimension_numbers<[1], [0], [0], [1], [0, 0, 1, 1], [], []>} : vector<8x32xbf16>, vector<32x128xbf16>, vector<8x128xf32> -> vector<8x128xf32>
      %c0_208 = arith.constant 0 : index
      %c0_209 = arith.constant 0 : index
      %334 = vector.load %arg24[%c0_208, %c0_209] : memref<1x128xf32, #tpu.memory_space<vmem>>, vector<1x128xf32>
      %335 = vector.broadcast %334 : vector<1x128xf32> to vector<8x128xf32>
      %336 = arith.addf %333, %335 : vector<8x128xf32>
      %c0_210 = arith.constant 0 : index
      %c0_211 = arith.constant 0 : index
      %337 = vector.load %arg26[%c0_210, %c0_211] : memref<8x128xf32, #tpu.memory_space<vmem>>, vector<8x128xf32>
      tpu.vector_store %arg26[%c0_210, %c0_211], %336 {strides = array<i32>} : memref<8x128xf32, #tpu.memory_space<vmem>>, vector<8x128xf32>,
    } else {
    }
    return
  }
  func.func @transform_0(%arg0: i32, %arg1: memref<2x4xi32, #tpu.memory_space<smem>>, %arg2: memref<2xi32, #tpu.memory_space<smem>>) -> (i32, i32) {
    %c0_i32 = arith.constant 0 : i32
    %c0_i32_0 = arith.constant 0 : i32
    %c0_i32_1 = arith.constant 0 : i32
    return %c0_i32, %c0_i32_0 : i32, i32
  }
  func.func @transform_1(%arg0: i32, %arg1: memref<2x4xi32, #tpu.memory_space<smem>>, %arg2: memref<2xi32, #tpu.memory_space<smem>>) -> (i32, i32) {
    %c0_i32 = arith.constant 0 : i32
    %c0_i32_0 = arith.constant 0 : i32
    %c0_i32_1 = arith.constant 0 : i32
    return %c0_i32, %c0_i32_0 : i32, i32
  }
  func.func @transform_2(%arg0: i32, %arg1: memref<2x4xi32, #tpu.memory_space<smem>>, %arg2: memref<2xi32, #tpu.memory_space<smem>>) -> (i32, i32) {
    %c0_i32 = arith.constant 0 : i32
    %c0_i32_0 = arith.constant 0 : i32
    %c0_i32_1 = arith.constant 0 : i32
    return %c0_i32, %c0_i32_0 : i32, i32
  }
  func.func @transform_3(%arg0: i32, %arg1: memref<2x4xi32, #tpu.memory_space<smem>>, %arg2: memref<2xi32, #tpu.memory_space<smem>>) -> (i32, i32) {
    %c0_i32 = arith.constant 0 : i32
    %c0_i32_0 = arith.constant 0 : i32
    %c0_i32_1 = arith.constant 0 : i32
    return %c0_i32, %c0_i32_0 : i32, i32
  }
  func.func @transform_4(%arg0: i32, %arg1: memref<2x4xi32, #tpu.memory_space<smem>>, %arg2: memref<2xi32, #tpu.memory_space<smem>>) -> (i32, i32, i32, i32) {
    %c0_i32 = arith.constant 0 : i32
    %c0_i32_0 = arith.constant 0 : i32
    %c0_i32_1 = arith.constant 0 : i32
    %c0_i32_2 = arith.constant 0 : i32
    return %arg0, %c0_i32, %c0_i32_0, %c0_i32_1 : i32, i32, i32, i32
  }
  func.func @transform_5(%arg0: i32, %arg1: memref<2x4xi32, #tpu.memory_space<smem>>, %arg2: memref<2xi32, #tpu.memory_space<smem>>) -> (i32, i32, i32, i32) {
    %c0_i32 = arith.constant 0 : i32
    %c0_i32_0 = arith.constant 0 : i32
    %c0_i32_1 = arith.constant 0 : i32
    %c0_i32_2 = arith.constant 0 : i32
    return %arg0, %c0_i32, %c0_i32_0, %c0_i32_1 : i32, i32, i32, i32
  }
  func.func @transform_6(%arg0: i32, %arg1: memref<2x4xi32, #tpu.memory_space<smem>>, %arg2: memref<2xi32, #tpu.memory_space<smem>>) -> (i32, i32, i32, i32) {
    %c0_i32 = arith.constant 0 : i32
    %c0_i32_0 = arith.constant 0 : i32
    %c0_i32_1 = arith.constant 0 : i32
    %c0_i32_2 = arith.constant 0 : i32
    return %arg0, %c0_i32, %c0_i32_0, %c0_i32_1 : i32, i32, i32, i32
  }
  func.func @transform_7(%arg0: i32, %arg1: memref<2x4xi32, #tpu.memory_space<smem>>, %arg2: memref<2xi32, #tpu.memory_space<smem>>) -> (i32, i32, i32, i32) {
    %c0_i32 = arith.constant 0 : i32
    %c0_i32_0 = arith.constant 0 : i32
    %c0_i32_1 = arith.constant 0 : i32
    %c0_i32_2 = arith.constant 0 : i32
    return %arg0, %c0_i32, %c0_i32_0, %c0_i32_1 : i32, i32, i32, i32
  }
  func.func @transform_8(%arg0: i32, %arg1: memref<2x4xi32, #tpu.memory_space<smem>>, %arg2: memref<2xi32, #tpu.memory_space<smem>>) -> (i32, i32, i32, i32) {
    %c0_i32 = arith.constant 0 : i32
    %c0_i32_0 = arith.constant 0 : i32
    %c0_i32_1 = arith.constant 0 : i32
    %c0_i32_2 = arith.constant 0 : i32
    return %arg0, %c0_i32, %c0_i32_0, %c0_i32_1 : i32, i32, i32, i32
  }
  func.func @transform_9(%arg0: i32, %arg1: memref<2x4xi32, #tpu.memory_space<smem>>, %arg2: memref<2xi32, #tpu.memory_space<smem>>) -> (i32, i32, i32, i32) {
    %c0_i32 = arith.constant 0 : i32
    %c0_i32_0 = arith.constant 0 : i32
    %c0_i32_1 = arith.constant 0 : i32
    %c0_i32_2 = arith.constant 0 : i32
    return %arg0, %c0_i32, %c0_i32_0, %c0_i32_1 : i32, i32, i32, i32
  }
  func.func @transform_10(%arg0: i32, %arg1: memref<2x4xi32, #tpu.memory_space<smem>>, %arg2: memref<2xi32, #tpu.memory_space<smem>>) -> (i32, i32, i32, i32) {
    %c0_i32 = arith.constant 0 : i32
    %c0_i32_0 = arith.constant 0 : i32
    %c0_i32_1 = arith.constant 0 : i32
    %c0_i32_2 = arith.constant 0 : i32
    return %arg0, %c0_i32, %c0_i32_0, %c0_i32_1 : i32, i32, i32, i32
  }
  func.func @transform_11(%arg0: i32, %arg1: memref<2x4xi32, #tpu.memory_space<smem>>, %arg2: memref<2xi32, #tpu.memory_space<smem>>) -> (i32, i32, i32) {
    %c0_i32 = arith.constant 0 : i32
    %c0_i32_0 = arith.constant 0 : i32
    %c0_i32_1 = arith.constant 0 : i32
    return %arg0, %c0_i32, %c0_i32_0 : i32, i32, i32
  }
  func.func @transform_12(%arg0: i32, %arg1: memref<2x4xi32, #tpu.memory_space<smem>>, %arg2: memref<2xi32, #tpu.memory_space<smem>>) -> (i32, i32, i32) {
    %c0_i32 = arith.constant 0 : i32
    %c0_i32_0 = arith.constant 0 : i32
    %c0_i32_1 = arith.constant 0 : i32
    return %arg0, %c0_i32, %c0_i32_0 : i32, i32, i32
  }
  func.func @transform_13(%arg0: i32, %arg1: memref<2x4xi32, #tpu.memory_space<smem>>, %arg2: memref<2xi32, #tpu.memory_space<smem>>) -> (i32, i32, i32) {
    %c0_i32 = arith.constant 0 : i32
    %c0_i32_0 = arith.constant 0 : i32
    %c0_i32_1 = arith.constant 0 : i32
    return %arg0, %c0_i32, %c0_i32_0 : i32, i32, i32
  }
  func.func @transform_14(%arg0: i32, %arg1: memref<2x4xi32, #tpu.memory_space<smem>>, %arg2: memref<2xi32, #tpu.memory_space<smem>>) -> (i32, i32, i32) {
    %c0_i32 = arith.constant 0 : i32
    %c0_i32_0 = arith.constant 0 : i32
    %c0_i32_1 = arith.constant 0 : i32
    return %arg0, %c0_i32, %c0_i32_0 : i32, i32, i32
  }
  func.func @transform_15(%arg0: i32, %arg1: memref<2x4xi32, #tpu.memory_space<smem>>, %arg2: memref<2xi32, #tpu.memory_space<smem>>) -> (i32, i32, i32) {
    %c0_i32 = arith.constant 0 : i32
    %c0_i32_0 = arith.constant 0 : i32
    %c0_i32_1 = arith.constant 0 : i32
    return %arg0, %c0_i32, %c0_i32_0 : i32, i32, i32
  }
  func.func @transform_16(%arg0: i32, %arg1: memref<2x4xi32, #tpu.memory_space<smem>>, %arg2: memref<2xi32, #tpu.memory_space<smem>>) -> (i32, i32, i32) {
    %c0_i32 = arith.constant 0 : i32
    %c0_i32_0 = arith.constant 0 : i32
    %c0_i32_1 = arith.constant 0 : i32
    return %arg0, %c0_i32, %c0_i32_0 : i32, i32, i32
  }
  func.func @transform_17(%arg0: i32, %arg1: memref<2x4xi32, #tpu.memory_space<smem>>, %arg2: memref<2xi32, #tpu.memory_space<smem>>) -> (i32, i32, i32) {
    %c0_i32 = arith.constant 0 : i32
    %c0_i32_0 = arith.constant 0 : i32
    %c0_i32_1 = arith.constant 0 : i32
    return %arg0, %c0_i32, %c0_i32_0 : i32, i32, i32
  }
  func.func @transform_18(%arg0: i32, %arg1: memref<2x4xi32, #tpu.memory_space<smem>>, %arg2: memref<2xi32, #tpu.memory_space<smem>>) -> (i32, i32, i32) {
    %c0_i32 = arith.constant 0 : i32
    %c0_i32_0 = arith.constant 0 : i32
    %c0_i32_1 = arith.constant 0 : i32
    return %arg0, %c0_i32, %c0_i32_0 : i32, i32, i32
  }
  func.func @transform_19(%arg0: i32, %arg1: memref<2x4xi32, #tpu.memory_space<smem>>, %arg2: memref<2xi32, #tpu.memory_space<smem>>) -> (i32, i32, i32) {
    %c0_i32 = arith.constant 0 : i32
    %c0_i32_0 = arith.constant 0 : i32
    %c0_i32_1 = arith.constant 0 : i32
    return %arg0, %c0_i32, %c0_i32_0 : i32, i32, i32
  }
  func.func @transform_20(%arg0: i32, %arg1: memref<2x4xi32, #tpu.memory_space<smem>>, %arg2: memref<2xi32, #tpu.memory_space<smem>>) -> (i32, i32) {
    %c0_i32 = arith.constant 0 : i32
    %c0_i32_0 = arith.constant 0 : i32
    %c0_i32_1 = arith.constant 0 : i32
    return %c0_i32, %c0_i32_0 : i32, i32
  }
  func.func @transform_21(%arg0: i32, %arg1: memref<2x4xi32, #tpu.memory_space<smem>>, %arg2: memref<2xi32, #tpu.memory_space<smem>>) -> (i32, i32) {
    %c0_i32 = arith.constant 0 : i32
    %c0_i32_0 = arith.constant 0 : i32
    %c0_i32_1 = arith.constant 0 : i32
    return %c0_i32, %c0_i32_0 : i32, i32
  }
  func.func @transform_22(%arg0: i32, %arg1: memref<2x4xi32, #tpu.memory_space<smem>>, %arg2: memref<2xi32, #tpu.memory_space<smem>>) -> (i32, i32) {
    %c0_i32 = arith.constant 0 : i32
    %c0_i32_0 = arith.constant 0 : i32
    %c0_i32_1 = arith.constant 0 : i32
    return %c0_i32, %c0_i32_0 : i32, i32
  }
  func.func @transform_23(%arg0: i32, %arg1: memref<2x4xi32, #tpu.memory_space<smem>>, %arg2: memref<2xi32, #tpu.memory_space<smem>>) -> (i32, i32) {
    %c0_i32 = arith.constant 0 : i32
    %c0_i32_0 = arith.constant 0 : i32
    %c0_i32_1 = arith.constant 0 : i32
    return %c0_i32, %c0_i32_0 : i32, i32
  }
}

</mosaic_0001>

<llo_original>
// kernel: tpu_custom_call.1
$region0: #{tpu_custom_call.1}
  #allocation0 [shape = 'u32[]', space=smem, size = 0x4, offset = 0x4, fixed_abs, tag = 'smem constant byte address 0x4 - core index']
  #allocation1 [shape = 'u32[144,128]{1,0:T(1,128)}', space=vmem, size = 0x12000, scoped, tag = 'internal scratch']
  #allocation2 [shape = 'f32[32,32]{1,0:T(8,128)}', space=vmem, size = 0x4000, scoped, tag = 'scratch operand']
  #allocation3 [shape = 's32[1]{0}', space=sflag, size = 0x4, scoped, tag = 'scoped memory for tpu_custom_call.1']
  #allocation4 [shape = 'u8[1024]{0}', space=smem, size = 0x400, scoped, tag = 'prefetched SMEM operand 0']
  #allocation5 [shape = 'u8[512]{0}', space=smem, size = 0x200, scoped, tag = 'prefetched SMEM operand 1']
  %s0 = inlined_call_operand.vmem [shape: s32[2,4], index: 0, kind: input, shape index: {}]
  %s1 = inlined_call_operand.vmem [shape: s32[2], index: 1, kind: input, shape index: {}]
  %s2 = inlined_call_operand.vmem [shape: f32[32,32], index: 2, kind: input, shape index: {}]
  %s3 = inlined_call_operand.vmem [shape: f32[1,32], index: 3, kind: input, shape index: {}]
  %s4 = inlined_call_operand.vmem [shape: f32[1,32], index: 4, kind: input, shape index: {}]
  %s5 = inlined_call_operand.vmem [shape: f32[1,32], index: 5, kind: input, shape index: {}]
  %s6 = inlined_call_operand.vmem [shape: bf16[2,2,32,16], index: 6, kind: input, shape index: {}]
  %s7 = inlined_call_operand.vmem [shape: bf16[2,2,32,16], index: 7, kind: input, shape index: {}]
  %s8 = inlined_call_operand.vmem [shape: bf16[2,2,32,16], index: 8, kind: input, shape index: {}]
  %s9 = inlined_call_operand.vmem [shape: f32[2,2,1,16], index: 9, kind: input, shape index: {}]
  %s10 = inlined_call_operand.vmem [shape: f32[2,2,1,16], index: 10, kind: input, shape index: {}]
  %s11 = inlined_call_operand.vmem [shape: f32[2,2,1,16], index: 11, kind: input, shape index: {}]
  %s12 = inlined_call_operand.vmem [shape: bf16[2,2,16,32], index: 12, kind: input, shape index: {}]
  %s13 = inlined_call_operand.vmem [shape: f32[2,1,32], index: 13, kind: input, shape index: {}]
  %s14 = inlined_call_operand.vmem [shape: f32[2,1,32], index: 14, kind: input, shape index: {}]
  %s15 = inlined_call_operand.vmem [shape: f32[2,1,32], index: 15, kind: input, shape index: {}]
  %s16 = inlined_call_operand.vmem [shape: bf16[2,32,64], index: 16, kind: input, shape index: {}]
  %s17 = inlined_call_operand.vmem [shape: f32[2,1,64], index: 17, kind: input, shape index: {}]
  %s18 = inlined_call_operand.vmem [shape: bf16[2,64,32], index: 18, kind: input, shape index: {}]
  %s19 = inlined_call_operand.vmem [shape: f32[2,1,32], index: 19, kind: input, shape index: {}]
  %s20 = inlined_call_operand.vmem [shape: f32[2,1,32], index: 20, kind: input, shape index: {}]
  %s21 = inlined_call_operand.vmem [shape: f32[2,1,32], index: 21, kind: input, shape index: {}]
  %s22 = inlined_call_operand.vmem [shape: bf16[32,128], index: 22, kind: input, shape index: {}]
  %s23 = inlined_call_operand.vmem [shape: f32[1,128], index: 23, kind: input, shape index: {}]
  %s24 = inlined_call_operand.hbm [shape: f32[8,32], index: 24, kind: output, shape index: {0}]
  %s25 = inlined_call_operand.hbm [shape: f32[8,128], index: 25, kind: output, shape index: {1}]
  %26 = xla_tuple %s24, %s25
  %s27 = sld [smem:[#allocation0]]
  $region137: #{tpu_custom_call.1} parent=0
    _
  %s29 = ssub.s32 1, %s27
  %s30 = scalar_select 0, %s29, %s27
  %s31 = sshll.u32 %s0, 4
  %s32 = int_to_ptr.vmem [resolvable:$true] %s31
  %34 = dma.vmem_to_smem %s32, 32, [#allocation4], [#allocation3]
  %s35 = sshll.u32 %s1, 4
  %s36 = int_to_ptr.vmem [resolvable:$true] %s35
  %38 = dma.vmem_to_smem %s36, 16, [#allocation5], [#allocation3]
  %39 = dma.done [#allocation3], 48
  %40 = sfence
  $region1: #{tpu_custom_call.1} parent=0
    #allocation6 [shape = 'u8[4096]{0}', space=vmem, size = 0x1000, scoped, tag = 'output window, operand 0, single buffered']
    #allocation7 [shape = 's32[2]{0}', space=sflag, size = 0x8, scoped, tag = 'scoped memory for tpu_custom_call.1']
    #allocation8 [shape = 'u8[4096]{0}', space=vmem, size = 0x1000, scoped, tag = 'output window, operand 1, single buffered']
    #allocation9 [shape = 's32[1]{0}', space=sflag, size = 0x4, scoped, tag = 'scoped memory for tpu_custom_call.1']
    %41 = vsyncpa [#allocation7], 0
    %42 = vsyncpa [#allocation9], 0
    loop: start=0, step=1, limit=4
    $region2: #{tpu_custom_call.1} parent=1 // loop_pre_header
      _
    $region3: #{tpu_custom_call.1} parent=1 // loop_header
      %s44 = sphi 0, %s48
      %p45 = scmp.ge.s32.totalorder %s44, 4
      %s52 = sphi 0, %s52
      %s54 = sphi 0, %s52
      %s55 = sphi 0, %s54
      %s69 = sphi 0, %s55
      %s73 = sphi 0, %s73
      %s75 = sphi 0, %s73
      %s76 = sphi 0, %s75
      %s90 = sphi 0, %s76
      %s94 = sphi 0, %s94
      %s96 = sphi 0, %s94
      %s97 = sphi 0, %s96
      %s111 = sphi 0, %s97
      %s115 = sphi 0, %s115
      %s117 = sphi 0, %s115
      %s118 = sphi 0, %s117
      %s132 = sphi 0, %s118
      %s138 = sphi 0, %s140
      %s141 = sphi 0, %s138
      %s142 = sphi 0, %s141
      %s158 = sphi 0, %s142
      %s164 = sphi 0, %s166
      %s167 = sphi 0, %s164
      %s168 = sphi 0, %s167
      %s184 = sphi 0, %s168
      %s190 = sphi 0, %s192
      %s193 = sphi 0, %s190
      %s194 = sphi 0, %s193
      %s210 = sphi 0, %s194
      %s216 = sphi 0, %s218
      %s219 = sphi 0, %s216
      %s220 = sphi 0, %s219
      %s236 = sphi 0, %s220
      %s242 = sphi 0, %s244
      %s245 = sphi 0, %s242
      %s246 = sphi 0, %s245
      %s262 = sphi 0, %s246
      %s268 = sphi 0, %s270
      %s271 = sphi 0, %s268
      %s272 = sphi 0, %s271
      %s288 = sphi 0, %s272
      %s294 = sphi 0, %s296
      %s297 = sphi 0, %s294
      %s298 = sphi 0, %s297
      %s314 = sphi 0, %s298
      %s320 = sphi 0, %s322
      %s323 = sphi 0, %s320
      %s324 = sphi 0, %s323
      %s340 = sphi 0, %s324
      %s346 = sphi 0, %s348
      %s349 = sphi 0, %s346
      %s350 = sphi 0, %s349
      %s366 = sphi 0, %s350
      %s372 = sphi 0, %s374
      %s375 = sphi 0, %s372
      %s376 = sphi 0, %s375
      %s392 = sphi 0, %s376
      %s398 = sphi 0, %s400
      %s401 = sphi 0, %s398
      %s402 = sphi 0, %s401
      %s418 = sphi 0, %s402
      %s424 = sphi 0, %s426
      %s427 = sphi 0, %s424
      %s428 = sphi 0, %s427
      %s444 = sphi 0, %s428
      %s450 = sphi 0, %s452
      %s453 = sphi 0, %s450
      %s454 = sphi 0, %s453
      %s470 = sphi 0, %s454
      %s476 = sphi 0, %s478
      %s479 = sphi 0, %s476
      %s480 = sphi 0, %s479
      %s496 = sphi 0, %s480
      %s502 = sphi 0, %s504
      %s505 = sphi 0, %s502
      %s506 = sphi 0, %s505
      %s522 = sphi 0, %s506
      %s528 = sphi 0, %s530
      %s531 = sphi 0, %s528
      %s532 = sphi 0, %s531
      %s548 = sphi 0, %s532
      %s552 = sphi 0, %s552
      %s554 = sphi 0, %s552
      %s555 = sphi 0, %s554
      %s569 = sphi 0, %s555
      %s573 = sphi 0, %s573
      %s575 = sphi 0, %s573
      %s576 = sphi 0, %s575
      %s590 = sphi 0, %s576
      %s594 = sphi 0, %s594
      %s596 = sphi 0, %s594
      %s597 = sphi 0, %s596
      %s611 = sphi 0, %s597
      %s615 = sphi 0, %s615
      %s617 = sphi 0, %s615
      %s618 = sphi 0, %s617
      %s632 = sphi 0, %s618
    $region4: #{tpu_custom_call.1} parent=1 // loop_header_branch
      %47 = sbr.rel (%p45) target = $region8
    $region5: #{tpu_custom_call.1} parent=1 // loop_body
      %s49 = ssub.s32 %s44, 1
      %s50 = ssub.s32 %s44, 2
      %s51 = sadd.s32 %s44, 1
      %s53 = sadd.s32 %s52, 1
      %p56 = scmp.eq.s32.totalorder %s44, 1
      %p57 = scmp.ne.s32.totalorder %s52, %s54
      %p58 = scmp.eq.s32.totalorder %s44, 0
      %p59 = por %p57, %p58
      %p60 = scmp.ne.s32.totalorder %s52, %s54
      %p61 = scmp.eq.s32.totalorder %s49, 1
      %p62 = por %p60, %p61
      %p63 = scmp.ne.s32.totalorder %s54, %s55
      %p64 = scmp.eq.s32.totalorder %s49, 0
      %p65 = por %p63, %p64
      %p66 = scmp.ne.s32.totalorder %s54, %s55
      %p67 = scmp.eq.s32.totalorder %s50, 1
      %p68 = por %p66, %p67
      %p70 = scmp.ne.s32.totalorder %s55, %s69
      %p71 = scmp.eq.s32.totalorder %s50, 0
      %p72 = por %p70, %p71
      %s74 = sadd.s32 %s73, 1
      %p77 = scmp.eq.s32.totalorder %s44, 1
      %p78 = scmp.ne.s32.totalorder %s73, %s75
      %p79 = scmp.eq.s32.totalorder %s44, 0
      %p80 = por %p78, %p79
      %p81 = scmp.ne.s32.totalorder %s73, %s75
      %p82 = scmp.eq.s32.totalorder %s49, 1
      %p83 = por %p81, %p82
      %p84 = scmp.ne.s32.totalorder %s75, %s76
      %p85 = scmp.eq.s32.totalorder %s49, 0
      %p86 = por %p84, %p85
      %p87 = scmp.ne.s32.totalorder %s75, %s76
      %p88 = scmp.eq.s32.totalorder %s50, 1
      %p89 = por %p87, %p88
      %p91 = scmp.ne.s32.totalorder %s76, %s90
      %p92 = scmp.eq.s32.totalorder %s50, 0
      %p93 = por %p91, %p92
      %s95 = sadd.s32 %s94, 1
      %p98 = scmp.eq.s32.totalorder %s44, 1
      %p99 = scmp.ne.s32.totalorder %s94, %s96
      %p100 = scmp.eq.s32.totalorder %s44, 0
      %p101 = por %p99, %p100
      %p102 = scmp.ne.s32.totalorder %s94, %s96
      %p103 = scmp.eq.s32.totalorder %s49, 1
      %p104 = por %p102, %p103
      %p105 = scmp.ne.s32.totalorder %s96, %s97
      %p106 = scmp.eq.s32.totalorder %s49, 0
      %p107 = por %p105, %p106
      %p108 = scmp.ne.s32.totalorder %s96, %s97
      %p109 = scmp.eq.s32.totalorder %s50, 1
      %p110 = por %p108, %p109
      %p112 = scmp.ne.s32.totalorder %s97, %s111
      %p113 = scmp.eq.s32.totalorder %s50, 0
      %p114 = por %p112, %p113
      %s116 = sadd.s32 %s115, 1
      %p119 = scmp.eq.s32.totalorder %s44, 1
      %p120 = scmp.ne.s32.totalorder %s115, %s117
      %p121 = scmp.eq.s32.totalorder %s44, 0
      %p122 = por %p120, %p121
      %p123 = scmp.ne.s32.totalorder %s115, %s117
      %p124 = scmp.eq.s32.totalorder %s49, 1
      %p125 = por %p123, %p124
      %p126 = scmp.ne.s32.totalorder %s117, %s118
      %p127 = scmp.eq.s32.totalorder %s49, 0
      %p128 = por %p126, %p127
      %p129 = scmp.ne.s32.totalorder %s117, %s118
      %p130 = scmp.eq.s32.totalorder %s50, 1
      %p131 = por %p129, %p130
      %p133 = scmp.ne.s32.totalorder %s118, %s132
      %p134 = scmp.eq.s32.totalorder %s50, 0
      %p135 = por %p133, %p134
      %s136 = ssub.s32 %s44, %s51
      %p137 = scmp.eq.s32.totalorder %s136, 0
      %s139 = sadd.s32 %s138, 1
      %s140 = scalar_select %p137, %s138, %s139
      %p143 = pneg %p137
      %p144 = scmp.eq.s32.totalorder %s44, 1
      %p145 = por %p143, %p144
      %p146 = scmp.ne.s32.totalorder %s138, %s141
      %p147 = scmp.eq.s32.totalorder %s44, 0
      %p148 = por %p146, %p147
      %p149 = scmp.ne.s32.totalorder %s138, %s141
      %p150 = scmp.eq.s32.totalorder %s49, 1
      %p151 = por %p149, %p150
      %p152 = scmp.ne.s32.totalorder %s141, %s142
      %p153 = scmp.eq.s32.totalorder %s49, 0
      %p154 = por %p152, %p153
      %p155 = scmp.ne.s32.totalorder %s141, %s142
      %p156 = scmp.eq.s32.totalorder %s50, 1
      %p157 = por %p155, %p156
      %p159 = scmp.ne.s32.totalorder %s142, %s158
      %p160 = scmp.eq.s32.totalorder %s50, 0
      %p161 = por %p159, %p160
      %s162 = ssub.s32 %s44, %s51
      %p163 = scmp.eq.s32.totalorder %s162, 0
      %s165 = sadd.s32 %s164, 1
      %s166 = scalar_select %p163, %s164, %s165
      %p169 = pneg %p163
      %p170 = scmp.eq.s32.totalorder %s44, 1
      %p171 = por %p169, %p170
      %p172 = scmp.ne.s32.totalorder %s164, %s167
      %p173 = scmp.eq.s32.totalorder %s44, 0
      %p174 = por %p172, %p173
      %p175 = scmp.ne.s32.totalorder %s164, %s167
      %p176 = scmp.eq.s32.totalorder %s49, 1
      %p177 = por %p175, %p176
      %p178 = scmp.ne.s32.totalorder %s167, %s168
      %p179 = scmp.eq.s32.totalorder %s49, 0
      %p180 = por %p178, %p179
      %p181 = scmp.ne.s32.totalorder %s167, %s168
      %p182 = scmp.eq.s32.totalorder %s50, 1
      %p183 = por %p181, %p182
      %p185 = scmp.ne.s32.totalorder %s168, %s184
      %p186 = scmp.eq.s32.totalorder %s50, 0
      %p187 = por %p185, %p186
      %s188 = ssub.s32 %s44, %s51
      %p189 = scmp.eq.s32.totalorder %s188, 0
      %s191 = sadd.s32 %s190, 1
      %s192 = scalar_select %p189, %s190, %s191
      %p195 = pneg %p189
      %p196 = scmp.eq.s32.totalorder %s44, 1
      %p197 = por %p195, %p196
      %p198 = scmp.ne.s32.totalorder %s190, %s193
      %p199 = scmp.eq.s32.totalorder %s44, 0
      %p200 = por %p198, %p199
      %p201 = scmp.ne.s32.totalorder %s190, %s193
      %p202 = scmp.eq.s32.totalorder %s49, 1
      %p203 = por %p201, %p202
      %p204 = scmp.ne.s32.totalorder %s193, %s194
      %p205 = scmp.eq.s32.totalorder %s49, 0
      %p206 = por %p204, %p205
      %p207 = scmp.ne.s32.totalorder %s193, %s194
      %p208 = scmp.eq.s32.totalorder %s50, 1
      %p209 = por %p207, %p208
      %p211 = scmp.ne.s32.totalorder %s194, %s210
      %p212 = scmp.eq.s32.totalorder %s50, 0
      %p213 = por %p211, %p212
      %s214 = ssub.s32 %s44, %s51
      %p215 = scmp.eq.s32.totalorder %s214, 0
      %s217 = sadd.s32 %s216, 1
      %s218 = scalar_select %p215, %s216, %s217
      %p221 = pneg %p215
      %p222 = scmp.eq.s32.totalorder %s44, 1
      %p223 = por %p221, %p222
      %p224 = scmp.ne.s32.totalorder %s216, %s219
      %p225 = scmp.eq.s32.totalorder %s44, 0
      %p226 = por %p224, %p225
      %p227 = scmp.ne.s32.totalorder %s216, %s219
      %p228 = scmp.eq.s32.totalorder %s49, 1
      %p229 = por %p227, %p228
      %p230 = scmp.ne.s32.totalorder %s219, %s220
      %p231 = scmp.eq.s32.totalorder %s49, 0
      %p232 = por %p230, %p231
      %p233 = scmp.ne.s32.totalorder %s219, %s220
      %p234 = scmp.eq.s32.totalorder %s50, 1
      %p235 = por %p233, %p234
      %p237 = scmp.ne.s32.totalorder %s220, %s236
      %p238 = scmp.eq.s32.totalorder %s50, 0
      %p239 = por %p237, %p238
      %s240 = ssub.s32 %s44, %s51
      %p241 = scmp.eq.s32.totalorder %s240, 0
      %s243 = sadd.s32 %s242, 1
      %s244 = scalar_select %p241, %s242, %s243
      %p247 = pneg %p241
      %p248 = scmp.eq.s32.totalorder %s44, 1
      %p249 = por %p247, %p248
      %p250 = scmp.ne.s32.totalorder %s242, %s245
      %p251 = scmp.eq.s32.totalorder %s44, 0
      %p252 = por %p250, %p251
      %p253 = scmp.ne.s32.totalorder %s242, %s245
      %p254 = scmp.eq.s32.totalorder %s49, 1
      %p255 = por %p253, %p254
      %p256 = scmp.ne.s32.totalorder %s245, %s246
      %p257 = scmp.eq.s32.totalorder %s49, 0
      %p258 = por %p256, %p257
      %p259 = scmp.ne.s32.totalorder %s245, %s246
      %p260 = scmp.eq.s32.totalorder %s50, 1
      %p261 = por %p259, %p260
      %p263 = scmp.ne.s32.totalorder %s246, %s262
      %p264 = scmp.eq.s32.totalorder %s50, 0
      %p265 = por %p263, %p264
      %s266 = ssub.s32 %s44, %s51
      %p267 = scmp.eq.s32.totalorder %s266, 0
      %s269 = sadd.s32 %s268, 1
      %s270 = scalar_select %p267, %s268, %s269
      %p273 = pneg %p267
      %p274 = scmp.eq.s32.totalorder %s44, 1
      %p275 = por %p273, %p274
      %p276 = scmp.ne.s32.totalorder %s268, %s271
      %p277 = scmp.eq.s32.totalorder %s44, 0
      %p278 = por %p276, %p277
      %p279 = scmp.ne.s32.totalorder %s268, %s271
      %p280 = scmp.eq.s32.totalorder %s49, 1
      %p281 = por %p279, %p280
      %p282 = scmp.ne.s32.totalorder %s271, %s272
      %p283 = scmp.eq.s32.totalorder %s49, 0
      %p284 = por %p282, %p283
      %p285 = scmp.ne.s32.totalorder %s271, %s272
      %p286 = scmp.eq.s32.totalorder %s50, 1
      %p287 = por %p285, %p286
      %p289 = scmp.ne.s32.totalorder %s272, %s288
      %p290 = scmp.eq.s32.totalorder %s50, 0
      %p291 = por %p289, %p290
      %s292 = ssub.s32 %s44, %s51
      %p293 = scmp.eq.s32.totalorder %s292, 0
      %s295 = sadd.s32 %s294, 1
      %s296 = scalar_select %p293, %s294, %s295
      %p299 = pneg %p293
      %p300 = scmp.eq.s32.totalorder %s44, 1
      %p301 = por %p299, %p300
      %p302 = scmp.ne.s32.totalorder %s294, %s297
      %p303 = scmp.eq.s32.totalorder %s44, 0
      %p304 = por %p302, %p303
      %p305 = scmp.ne.s32.totalorder %s294, %s297
      %p306 = scmp.eq.s32.totalorder %s49, 1
      %p307 = por %p305, %p306
      %p308 = scmp.ne.s32.totalorder %s297, %s298
      %p309 = scmp.eq.s32.totalorder %s49, 0
      %p310 = por %p308, %p309
      %p311 = scmp.ne.s32.totalorder %s297, %s298
      %p312 = scmp.eq.s32.totalorder %s50, 1
      %p313 = por %p311, %p312
      %p315 = scmp.ne.s32.totalorder %s298, %s314
      %p316 = scmp.eq.s32.totalorder %s50, 0
      %p317 = por %p315, %p316
      %s318 = ssub.s32 %s44, %s51
      %p319 = scmp.eq.s32.totalorder %s318, 0
      %s321 = sadd.s32 %s320, 1
      %s322 = scalar_select %p319, %s320, %s321
      %p325 = pneg %p319
      %p326 = scmp.eq.s32.totalorder %s44, 1
      %p327 = por %p325, %p326
      %p328 = scmp.ne.s32.totalorder %s320, %s323
      %p329 = scmp.eq.s32.totalorder %s44, 0
      %p330 = por %p328, %p329
      %p331 = scmp.ne.s32.totalorder %s320, %s323
      %p332 = scmp.eq.s32.totalorder %s49, 1
      %p333 = por %p331, %p332
      %p334 = scmp.ne.s32.totalorder %s323, %s324
      %p335 = scmp.eq.s32.totalorder %s49, 0
      %p336 = por %p334, %p335
      %p337 = scmp.ne.s32.totalorder %s323, %s324
      %p338 = scmp.eq.s32.totalorder %s50, 1
      %p339 = por %p337, %p338
      %p341 = scmp.ne.s32.totalorder %s324, %s340
      %p342 = scmp.eq.s32.totalorder %s50, 0
      %p343 = por %p341, %p342
      %s344 = ssub.s32 %s44, %s51
      %p345 = scmp.eq.s32.totalorder %s344, 0
      %s347 = sadd.s32 %s346, 1
      %s348 = scalar_select %p345, %s346, %s347
      %p351 = pneg %p345
      %p352 = scmp.eq.s32.totalorder %s44, 1
      %p353 = por %p351, %p352
      %p354 = scmp.ne.s32.totalorder %s346, %s349
      %p355 = scmp.eq.s32.totalorder %s44, 0
      %p356 = por %p354, %p355
      %p357 = scmp.ne.s32.totalorder %s346, %s349
      %p358 = scmp.eq.s32.totalorder %s49, 1
      %p359 = por %p357, %p358
      %p360 = scmp.ne.s32.totalorder %s349, %s350
      %p361 = scmp.eq.s32.totalorder %s49, 0
      %p362 = por %p360, %p361
      %p363 = scmp.ne.s32.totalorder %s349, %s350
      %p364 = scmp.eq.s32.totalorder %s50, 1
      %p365 = por %p363, %p364
      %p367 = scmp.ne.s32.totalorder %s350, %s366
      %p368 = scmp.eq.s32.totalorder %s50, 0
      %p369 = por %p367, %p368
      %s370 = ssub.s32 %s44, %s51
      %p371 = scmp.eq.s32.totalorder %s370, 0
      %s373 = sadd.s32 %s372, 1
      %s374 = scalar_select %p371, %s372, %s373
      %p377 = pneg %p371
      %p378 = scmp.eq.s32.totalorder %s44, 1
      %p379 = por %p377, %p378
      %p380 = scmp.ne.s32.totalorder %s372, %s375
      %p381 = scmp.eq.s32.totalorder %s44, 0
      %p382 = por %p380, %p381
      %p383 = scmp.ne.s32.totalorder %s372, %s375
      %p384 = scmp.eq.s32.totalorder %s49, 1
      %p385 = por %p383, %p384
      %p386 = scmp.ne.s32.totalorder %s375, %s376
      %p387 = scmp.eq.s32.totalorder %s49, 0
      %p388 = por %p386, %p387
      %p389 = scmp.ne.s32.totalorder %s375, %s376
      %p390 = scmp.eq.s32.totalorder %s50, 1
      %p391 = por %p389, %p390
      %p393 = scmp.ne.s32.totalorder %s376, %s392
      %p394 = scmp.eq.s32.totalorder %s50, 0
      %p395 = por %p393, %p394
      %s396 = ssub.s32 %s44, %s51
      %p397 = scmp.eq.s32.totalorder %s396, 0
      %s399 = sadd.s32 %s398, 1
      %s400 = scalar_select %p397, %s398, %s399
      %p403 = pneg %p397
      %p404 = scmp.eq.s32.totalorder %s44, 1
      %p405 = por %p403, %p404
      %p406 = scmp.ne.s32.totalorder %s398, %s401
      %p407 = scmp.eq.s32.totalorder %s44, 0
      %p408 = por %p406, %p407
      %p409 = scmp.ne.s32.totalorder %s398, %s401
      %p410 = scmp.eq.s32.totalorder %s49, 1
      %p411 = por %p409, %p410
      %p412 = scmp.ne.s32.totalorder %s401, %s402
      %p413 = scmp.eq.s32.totalorder %s49, 0
      %p414 = por %p412, %p413
      %p415 = scmp.ne.s32.totalorder %s401, %s402
      %p416 = scmp.eq.s32.totalorder %s50, 1
      %p417 = por %p415, %p416
      %p419 = scmp.ne.s32.totalorder %s402, %s418
      %p420 = scmp.eq.s32.totalorder %s50, 0
      %p421 = por %p419, %p420
      %s422 = ssub.s32 %s44, %s51
      %p423 = scmp.eq.s32.totalorder %s422, 0
      %s425 = sadd.s32 %s424, 1
      %s426 = scalar_select %p423, %s424, %s425
      %p429 = pneg %p423
      %p430 = scmp.eq.s32.totalorder %s44, 1
      %p431 = por %p429, %p430
      %p432 = scmp.ne.s32.totalorder %s424, %s427
      %p433 = scmp.eq.s32.totalorder %s44, 0
      %p434 = por %p432, %p433
      %p435 = scmp.ne.s32.totalorder %s424, %s427
      %p436 = scmp.eq.s32.totalorder %s49, 1
      %p437 = por %p435, %p436
      %p438 = scmp.ne.s32.totalorder %s427, %s428
      %p439 = scmp.eq.s32.totalorder %s49, 0
      %p440 = por %p438, %p439
      %p441 = scmp.ne.s32.totalorder %s427, %s428
      %p442 = scmp.eq.s32.totalorder %s50, 1
      %p443 = por %p441, %p442
      %p445 = scmp.ne.s32.totalorder %s428, %s444
      %p446 = scmp.eq.s32.totalorder %s50, 0
      %p447 = por %p445, %p446
      %s448 = ssub.s32 %s44, %s51
      %p449 = scmp.eq.s32.totalorder %s448, 0
      %s451 = sadd.s32 %s450, 1
      %s452 = scalar_select %p449, %s450, %s451
      %p455 = pneg %p449
      %p456 = scmp.eq.s32.totalorder %s44, 1
      %p457 = por %p455, %p456
      %p458 = scmp.ne.s32.totalorder %s450, %s453
      %p459 = scmp.eq.s32.totalorder %s44, 0
      %p460 = por %p458, %p459
      %p461 = scmp.ne.s32.totalorder %s450, %s453
      %p462 = scmp.eq.s32.totalorder %s49, 1
      %p463 = por %p461, %p462
      %p464 = scmp.ne.s32.totalorder %s453, %s454
      %p465 = scmp.eq.s32.totalorder %s49, 0
      %p466 = por %p464, %p465
      %p467 = scmp.ne.s32.totalorder %s453, %s454
      %p468 = scmp.eq.s32.totalorder %s50, 1
      %p469 = por %p467, %p468
      %p471 = scmp.ne.s32.totalorder %s454, %s470
      %p472 = scmp.eq.s32.totalorder %s50, 0
      %p473 = por %p471, %p472
      %s474 = ssub.s32 %s44, %s51
      %p475 = scmp.eq.s32.totalorder %s474, 0
      %s477 = sadd.s32 %s476, 1
      %s478 = scalar_select %p475, %s476, %s477
      %p481 = pneg %p475
      %p482 = scmp.eq.s32.totalorder %s44, 1
      %p483 = por %p481, %p482
      %p484 = scmp.ne.s32.totalorder %s476, %s479
      %p485 = scmp.eq.s32.totalorder %s44, 0
      %p486 = por %p484, %p485
      %p487 = scmp.ne.s32.totalorder %s476, %s479
      %p488 = scmp.eq.s32.totalorder %s49, 1
      %p489 = por %p487, %p488
      %p490 = scmp.ne.s32.totalorder %s479, %s480
      %p491 = scmp.eq.s32.totalorder %s49, 0
      %p492 = por %p490, %p491
      %p493 = scmp.ne.s32.totalorder %s479, %s480
      %p494 = scmp.eq.s32.totalorder %s50, 1
      %p495 = por %p493, %p494
      %p497 = scmp.ne.s32.totalorder %s480, %s496
      %p498 = scmp.eq.s32.totalorder %s50, 0
      %p499 = por %p497, %p498
      %s500 = ssub.s32 %s44, %s51
      %p501 = scmp.eq.s32.totalorder %s500, 0
      %s503 = sadd.s32 %s502, 1
      %s504 = scalar_select %p501, %s502, %s503
      %p507 = pneg %p501
      %p508 = scmp.eq.s32.totalorder %s44, 1
      %p509 = por %p507, %p508
      %p510 = scmp.ne.s32.totalorder %s502, %s505
      %p511 = scmp.eq.s32.totalorder %s44, 0
      %p512 = por %p510, %p511
      %p513 = scmp.ne.s32.totalorder %s502, %s505
      %p514 = scmp.eq.s32.totalorder %s49, 1
      %p515 = por %p513, %p514
      %p516 = scmp.ne.s32.totalorder %s505, %s506
      %p517 = scmp.eq.s32.totalorder %s49, 0
      %p518 = por %p516, %p517
      %p519 = scmp.ne.s32.totalorder %s505, %s506
      %p520 = scmp.eq.s32.totalorder %s50, 1
      %p521 = por %p519, %p520
      %p523 = scmp.ne.s32.totalorder %s506, %s522
      %p524 = scmp.eq.s32.totalorder %s50, 0
      %p525 = por %p523, %p524
      %s526 = ssub.s32 %s44, %s51
      %p527 = scmp.eq.s32.totalorder %s526, 0
      %s529 = sadd.s32 %s528, 1
      %s530 = scalar_select %p527, %s528, %s529
      %p533 = pneg %p527
      %p534 = scmp.eq.s32.totalorder %s44, 1
      %p535 = por %p533, %p534
      %p536 = scmp.ne.s32.totalorder %s528, %s531
      %p537 = scmp.eq.s32.totalorder %s44, 0
      %p538 = por %p536, %p537
      %p539 = scmp.ne.s32.totalorder %s528, %s531
      %p540 = scmp.eq.s32.totalorder %s49, 1
      %p541 = por %p539, %p540
      %p542 = scmp.ne.s32.totalorder %s531, %s532
      %p543 = scmp.eq.s32.totalorder %s49, 0
      %p544 = por %p542, %p543
      %p545 = scmp.ne.s32.totalorder %s531, %s532
      %p546 = scmp.eq.s32.totalorder %s50, 1
      %p547 = por %p545, %p546
      %p549 = scmp.ne.s32.totalorder %s532, %s548
      %p550 = scmp.eq.s32.totalorder %s50, 0
      %p551 = por %p549, %p550
      %s553 = sadd.s32 %s552, 1
      %p556 = scmp.eq.s32.totalorder %s44, 1
      %p557 = scmp.ne.s32.totalorder %s552, %s554
      %p558 = scmp.eq.s32.totalorder %s44, 0
      %p559 = por %p557, %p558
      %p560 = scmp.ne.s32.totalorder %s552, %s554
      %p561 = scmp.eq.s32.totalorder %s49, 1
      %p562 = por %p560, %p561
      %p563 = scmp.ne.s32.totalorder %s554, %s555
      %p564 = scmp.eq.s32.totalorder %s49, 0
      %p565 = por %p563, %p564
      %p566 = scmp.ne.s32.totalorder %s554, %s555
      %p567 = scmp.eq.s32.totalorder %s50, 1
      %p568 = por %p566, %p567
      %p570 = scmp.ne.s32.totalorder %s555, %s569
      %p571 = scmp.eq.s32.totalorder %s50, 0
      %p572 = por %p570, %p571
      %s574 = sadd.s32 %s573, 1
      %p577 = scmp.eq.s32.totalorder %s44, 1
      %p578 = scmp.ne.s32.totalorder %s573, %s575
      %p579 = scmp.eq.s32.totalorder %s44, 0
      %p580 = por %p578, %p579
      %p581 = scmp.ne.s32.totalorder %s573, %s575
      %p582 = scmp.eq.s32.totalorder %s49, 1
      %p583 = por %p581, %p582
      %p584 = scmp.ne.s32.totalorder %s575, %s576
      %p585 = scmp.eq.s32.totalorder %s49, 0
      %p586 = por %p584, %p585
      %p587 = scmp.ne.s32.totalorder %s575, %s576
      %p588 = scmp.eq.s32.totalorder %s50, 1
      %p589 = por %p587, %p588
      %p591 = scmp.ne.s32.totalorder %s576, %s590
      %p592 = scmp.eq.s32.totalorder %s50, 0
      %p593 = por %p591, %p592
      %s595 = sadd.s32 %s594, 1
      %p598 = scmp.eq.s32.totalorder %s44, 1
      %p599 = scmp.ne.s32.totalorder %s594, %s596
      %p600 = scmp.eq.s32.totalorder %s44, 0
      %p601 = por %p599, %p600
      %p602 = scmp.ne.s32.totalorder %s594, %s596
      %p603 = scmp.eq.s32.totalorder %s49, 1
      %p604 = por %p602, %p603
      %p605 = scmp.ne.s32.totalorder %s596, %s597
      %p606 = scmp.eq.s32.totalorder %s49, 0
      %p607 = por %p605, %p606
      %p608 = scmp.ne.s32.totalorder %s596, %s597
      %p609 = scmp.eq.s32.totalorder %s50, 1
      %p610 = por %p608, %p609
      %p612 = scmp.ne.s32.totalorder %s597, %s611
      %p613 = scmp.eq.s32.totalorder %s50, 0
      %p614 = por %p612, %p613
      %s616 = sadd.s32 %s615, 1
      %p619 = scmp.eq.s32.totalorder %s44, 1
      %p620 = scmp.ne.s32.totalorder %s615, %s617
      %p621 = scmp.eq.s32.totalorder %s44, 0
      %p622 = por %p620, %p621
      %p623 = scmp.ne.s32.totalorder %s615, %s617
      %p624 = scmp.eq.s32.totalorder %s49, 1
      %p625 = por %p623, %p624
      %p626 = scmp.ne.s32.totalorder %s617, %s618
      %p627 = scmp.eq.s32.totalorder %s49, 0
      %p628 = por %p626, %p627
      %p629 = scmp.ne.s32.totalorder %s617, %s618
      %p630 = scmp.eq.s32.totalorder %s50, 1
      %p631 = por %p629, %p630
      %p633 = scmp.ne.s32.totalorder %s618, %s632
      %p634 = scmp.eq.s32.totalorder %s50, 0
      %p635 = por %p633, %p634
      %p636 = scmp.le.s32.totalorder 1, %s44
      %p637 = scmp.lt.s32.totalorder %s44, 3
      %p638 = pnand %p636, %p637
      %p639 = pneg %p638
      // Predicated region
      $region9: #{tpu_custom_call.1} parent=5 // pred_check
        _
      $region10: #{tpu_custom_call.1} parent=5 // pred_check_branch
        %641 = sbr.rel (%p638) target = $region12
      $region11: #{tpu_custom_call.1} parent=5 // pred_region
        %s642 = ssub.s32 %s44, 1
        // Predicated region
        $region13: #{tpu_custom_call.1} parent=11 // pred_check
          %p643 = pneg %p65
        $region14: #{tpu_custom_call.1} parent=11 // pred_check_branch
          %645 = sbr.rel (%p643) target = $region16
        $region15: #{tpu_custom_call.1} parent=11 // pred_region
          _
        $region16: #{tpu_custom_call.1} parent=11 // pred_fallthru
          _
        // Predicated region
        $region17: #{tpu_custom_call.1} parent=11 // pred_check
          %p646 = pneg %p86
        $region18: #{tpu_custom_call.1} parent=11 // pred_check_branch
          %648 = sbr.rel (%p646) target = $region20
        $region19: #{tpu_custom_call.1} parent=11 // pred_region
          _
        $region20: #{tpu_custom_call.1} parent=11 // pred_fallthru
          _
        // Predicated region
        $region21: #{tpu_custom_call.1} parent=11 // pred_check
          %p649 = pneg %p107
        $region22: #{tpu_custom_call.1} parent=11 // pred_check_branch
          %651 = sbr.rel (%p649) target = $region24
        $region23: #{tpu_custom_call.1} parent=11 // pred_region
          _
        $region24: #{tpu_custom_call.1} parent=11 // pred_fallthru
          _
        // Predicated region
        $region25: #{tpu_custom_call.1} parent=11 // pred_check
          %p652 = pneg %p128
        $region26: #{tpu_custom_call.1} parent=11 // pred_check_branch
          %654 = sbr.rel (%p652) target = $region28
        $region27: #{tpu_custom_call.1} parent=11 // pred_region
          _
        $region28: #{tpu_custom_call.1} parent=11 // pred_fallthru
          _
        // Predicated region
        $region29: #{tpu_custom_call.1} parent=11 // pred_check
          %p655 = pneg %p565
        $region30: #{tpu_custom_call.1} parent=11 // pred_check_branch
          %657 = sbr.rel (%p655) target = $region32
        $region31: #{tpu_custom_call.1} parent=11 // pred_region
          _
        $region32: #{tpu_custom_call.1} parent=11 // pred_fallthru
          _
        // Predicated region
        $region33: #{tpu_custom_call.1} parent=11 // pred_check
          %p658 = pneg %p586
        $region34: #{tpu_custom_call.1} parent=11 // pred_check_branch
          %660 = sbr.rel (%p658) target = $region36
        $region35: #{tpu_custom_call.1} parent=11 // pred_region
          _
        $region36: #{tpu_custom_call.1} parent=11 // pred_fallthru
          _
      $region12: #{tpu_custom_call.1} parent=5 // pred_fallthru
        _
      %p661 = scmp.lt.s32.totalorder %s44, 2
      // Predicated region
      $region37: #{tpu_custom_call.1} parent=5 // pred_check
        %p662 = pneg %p661
      $region38: #{tpu_custom_call.1} parent=5 // pred_check_branch
        %664 = sbr.rel (%p662) target = $region40
      $region39: #{tpu_custom_call.1} parent=5 // pred_region
        // Predicated region
        $region41: #{tpu_custom_call.1} parent=39 // pred_check
          %p665 = pneg %p148
        $region42: #{tpu_custom_call.1} parent=39 // pred_check_branch
          %667 = sbr.rel (%p665) target = $region44
        $region43: #{tpu_custom_call.1} parent=39 // pred_region
          %p668 = scmp.lt.s32.totalorder %s44, 1
          %s669 = scalar_select %p668, %s44, 1
          %s670 = smul.addr %s669, 8
          %s671 = smul.addr %s670, 4
          %s672 = scalar_lea.vmem %s6, %s671
        $region44: #{tpu_custom_call.1} parent=39 // pred_fallthru
          _
        // Predicated region
        $region45: #{tpu_custom_call.1} parent=39 // pred_check
          %p673 = pneg %p174
        $region46: #{tpu_custom_call.1} parent=39 // pred_check_branch
          %675 = sbr.rel (%p673) target = $region48
        $region47: #{tpu_custom_call.1} parent=39 // pred_region
          %p676 = scmp.lt.s32.totalorder %s44, 1
          %s677 = scalar_select %p676, %s44, 1
          %s678 = smul.addr %s677, 8
          %s679 = smul.addr %s678, 4
          %s680 = scalar_lea.vmem %s7, %s679
        $region48: #{tpu_custom_call.1} parent=39 // pred_fallthru
          _
        // Predicated region
        $region49: #{tpu_custom_call.1} parent=39 // pred_check
          %p681 = pneg %p200
        $region50: #{tpu_custom_call.1} parent=39 // pred_check_branch
          %683 = sbr.rel (%p681) target = $region52
        $region51: #{tpu_custom_call.1} parent=39 // pred_region
          %p684 = scmp.lt.s32.totalorder %s44, 1
          %s685 = scalar_select %p684, %s44, 1
          %s686 = smul.addr %s685, 8
          %s687 = smul.addr %s686, 4
          %s688 = scalar_lea.vmem %s8, %s687
        $region52: #{tpu_custom_call.1} parent=39 // pred_fallthru
          _
        // Predicated region
        $region53: #{tpu_custom_call.1} parent=39 // pred_check
          %p689 = pneg %p226
        $region54: #{tpu_custom_call.1} parent=39 // pred_check_branch
          %691 = sbr.rel (%p689) target = $region56
        $region55: #{tpu_custom_call.1} parent=39 // pred_region
          %p692 = scmp.lt.s32.totalorder %s44, 1
          %s693 = scalar_select %p692, %s44, 1
          %s694 = smul.addr %s693, 2
          %s695 = scalar_lea.vmem %s9, %s694
        $region56: #{tpu_custom_call.1} parent=39 // pred_fallthru
          _
        // Predicated region
        $region57: #{tpu_custom_call.1} parent=39 // pred_check
          %p696 = pneg %p252
        $region58: #{tpu_custom_call.1} parent=39 // pred_check_branch
          %698 = sbr.rel (%p696) target = $region60
        $region59: #{tpu_custom_call.1} parent=39 // pred_region
          %p699 = scmp.lt.s32.totalorder %s44, 1
          %s700 = scalar_select %p699, %s44, 1
          %s701 = smul.addr %s700, 2
          %s702 = scalar_lea.vmem %s10, %s701
        $region60: #{tpu_custom_call.1} parent=39 // pred_fallthru
          _
        // Predicated region
        $region61: #{tpu_custom_call.1} parent=39 // pred_check
          %p703 = pneg %p278
        $region62: #{tpu_custom_call.1} parent=39 // pred_check_branch
          %705 = sbr.rel (%p703) target = $region64
        $region63: #{tpu_custom_call.1} parent=39 // pred_region
          %p706 = scmp.lt.s32.totalorder %s44, 1
          %s707 = scalar_select %p706, %s44, 1
          %s708 = smul.addr %s707, 2
          %s709 = scalar_lea.vmem %s11, %s708
        $region64: #{tpu_custom_call.1} parent=39 // pred_fallthru
          _
        // Predicated region
        $region65: #{tpu_custom_call.1} parent=39 // pred_check
          %p710 = pneg %p304
        $region66: #{tpu_custom_call.1} parent=39 // pred_check_branch
          %712 = sbr.rel (%p710) target = $region68
        $region67: #{tpu_custom_call.1} parent=39 // pred_region
          %p713 = scmp.lt.s32.totalorder %s44, 1
          %s714 = scalar_select %p713, %s44, 1
          %s715 = smul.addr %s714, 4
          %s716 = smul.addr %s715, 4
          %s717 = scalar_lea.vmem %s12, %s716
        $region68: #{tpu_custom_call.1} parent=39 // pred_fallthru
          _
        // Predicated region
        $region69: #{tpu_custom_call.1} parent=39 // pred_check
          %p718 = pneg %p330
        $region70: #{tpu_custom_call.1} parent=39 // pred_check_branch
          %720 = sbr.rel (%p718) target = $region72
        $region71: #{tpu_custom_call.1} parent=39 // pred_region
          %p721 = scmp.lt.s32.totalorder %s44, 1
          %s722 = scalar_select %p721, %s44, 1
          %s723 = scalar_lea.vmem %s13, %s722
        $region72: #{tpu_custom_call.1} parent=39 // pred_fallthru
          _
        // Predicated region
        $region73: #{tpu_custom_call.1} parent=39 // pred_check
          %p724 = pneg %p356
        $region74: #{tpu_custom_call.1} parent=39 // pred_check_branch
          %726 = sbr.rel (%p724) target = $region76
        $region75: #{tpu_custom_call.1} parent=39 // pred_region
          %p727 = scmp.lt.s32.totalorder %s44, 1
          %s728 = scalar_select %p727, %s44, 1
          %s729 = scalar_lea.vmem %s14, %s728
        $region76: #{tpu_custom_call.1} parent=39 // pred_fallthru
          _
        // Predicated region
        $region77: #{tpu_custom_call.1} parent=39 // pred_check
          %p730 = pneg %p382
        $region78: #{tpu_custom_call.1} parent=39 // pred_check_branch
          %732 = sbr.rel (%p730) target = $region80
        $region79: #{tpu_custom_call.1} parent=39 // pred_region
          %p733 = scmp.lt.s32.totalorder %s44, 1
          %s734 = scalar_select %p733, %s44, 1
          %s735 = scalar_lea.vmem %s15, %s734
        $region80: #{tpu_custom_call.1} parent=39 // pred_fallthru
          _
        // Predicated region
        $region81: #{tpu_custom_call.1} parent=39 // pred_check
          %p736 = pneg %p408
        $region82: #{tpu_custom_call.1} parent=39 // pred_check_branch
          %738 = sbr.rel (%p736) target = $region84
        $region83: #{tpu_custom_call.1} parent=39 // pred_region
          %p739 = scmp.lt.s32.totalorder %s44, 1
          %s740 = scalar_select %p739, %s44, 1
          %s741 = smul.addr %s740, 4
          %s742 = smul.addr %s741, 4
          %s743 = scalar_lea.vmem %s16, %s742
        $region84: #{tpu_custom_call.1} parent=39 // pred_fallthru
          _
        // Predicated region
        $region85: #{tpu_custom_call.1} parent=39 // pred_check
          %p744 = pneg %p434
        $region86: #{tpu_custom_call.1} parent=39 // pred_check_branch
          %746 = sbr.rel (%p744) target = $region88
        $region87: #{tpu_custom_call.1} parent=39 // pred_region
          %p747 = scmp.lt.s32.totalorder %s44, 1
          %s748 = scalar_select %p747, %s44, 1
          %s749 = scalar_lea.vmem %s17, %s748
        $region88: #{tpu_custom_call.1} parent=39 // pred_fallthru
          _
        // Predicated region
        $region89: #{tpu_custom_call.1} parent=39 // pred_check
          %p750 = pneg %p460
        $region90: #{tpu_custom_call.1} parent=39 // pred_check_branch
          %752 = sbr.rel (%p750) target = $region92
        $region91: #{tpu_custom_call.1} parent=39 // pred_region
          %p753 = scmp.lt.s32.totalorder %s44, 1
          %s754 = scalar_select %p753, %s44, 1
          %s755 = smul.addr %s754, 8
          %s756 = smul.addr %s755, 4
          %s757 = scalar_lea.vmem %s18, %s756
        $region92: #{tpu_custom_call.1} parent=39 // pred_fallthru
          _
        // Predicated region
        $region93: #{tpu_custom_call.1} parent=39 // pred_check
          %p758 = pneg %p486
        $region94: #{tpu_custom_call.1} parent=39 // pred_check_branch
          %760 = sbr.rel (%p758) target = $region96
        $region95: #{tpu_custom_call.1} parent=39 // pred_region
          %p761 = scmp.lt.s32.totalorder %s44, 1
          %s762 = scalar_select %p761, %s44, 1
          %s763 = scalar_lea.vmem %s19, %s762
        $region96: #{tpu_custom_call.1} parent=39 // pred_fallthru
          _
        // Predicated region
        $region97: #{tpu_custom_call.1} parent=39 // pred_check
          %p764 = pneg %p512
        $region98: #{tpu_custom_call.1} parent=39 // pred_check_branch
          %766 = sbr.rel (%p764) target = $region100
        $region99: #{tpu_custom_call.1} parent=39 // pred_region
          %p767 = scmp.lt.s32.totalorder %s44, 1
          %s768 = scalar_select %p767, %s44, 1
          %s769 = scalar_lea.vmem %s20, %s768
        $region100: #{tpu_custom_call.1} parent=39 // pred_fallthru
          _
        // Predicated region
        $region101: #{tpu_custom_call.1} parent=39 // pred_check
          %p770 = pneg %p538
        $region102: #{tpu_custom_call.1} parent=39 // pred_check_branch
          %772 = sbr.rel (%p770) target = $region104
        $region103: #{tpu_custom_call.1} parent=39 // pred_region
          %p773 = scmp.lt.s32.totalorder %s44, 1
          %s774 = scalar_select %p773, %s44, 1
          %s775 = scalar_lea.vmem %s21, %s774
        $region104: #{tpu_custom_call.1} parent=39 // pred_fallthru
          _
      $region40: #{tpu_custom_call.1} parent=5 // pred_fallthru
        _
      %p776 = scmp.le.s32.totalorder 1, %s44
      %p777 = scmp.lt.s32.totalorder %s44, 3
      %p778 = pnand %p776, %p777
      %p779 = pneg %p778
      // Predicated region
      $region105: #{tpu_custom_call.1} parent=5 // pred_check
        _
      $region106: #{tpu_custom_call.1} parent=5 // pred_check_branch
        %781 = sbr.rel (%p778) target = $region108
      $region107: #{tpu_custom_call.1} parent=5 // pred_region
        %s782 = ssub.s32 %s44, 1
        %p783 = pneg %p65
        %p784 = pneg %p62
        %p785 = pneg %p86
        %p786 = pneg %p83
        %p787 = pneg %p107
        %p788 = pneg %p104
        %p789 = pneg %p128
        %p790 = pneg %p125
        %p791 = scmp.lt.s32.totalorder %s49, 1
        %s792 = scalar_select %p791, %s49, 1
        %s793 = smul.addr %s792, 8
        %s794 = smul.addr %s793, 4
        %s795 = scalar_lea.vmem %s6, %s794
        %p796 = pneg %p154
        %p797 = pneg %p151
        %p798 = scmp.lt.s32.totalorder %s49, 1
        %s799 = scalar_select %p798, %s49, 1
        %s800 = smul.addr %s799, 8
        %s801 = smul.addr %s800, 4
        %s802 = scalar_lea.vmem %s7, %s801
        %p803 = pneg %p180
        %p804 = pneg %p177
        %p805 = scmp.lt.s32.totalorder %s49, 1
        %s806 = scalar_select %p805, %s49, 1
        %s807 = smul.addr %s806, 8
        %s808 = smul.addr %s807, 4
        %s809 = scalar_lea.vmem %s8, %s808
        %p810 = pneg %p206
        %p811 = pneg %p203
        %p812 = scmp.lt.s32.totalorder %s49, 1
        %s813 = scalar_select %p812, %s49, 1
        %s814 = smul.addr %s813, 2
        %s815 = scalar_lea.vmem %s9, %s814
        %p816 = pneg %p232
        %p817 = pneg %p229
        %p818 = scmp.lt.s32.totalorder %s49, 1
        %s819 = scalar_select %p818, %s49, 1
        %s820 = smul.addr %s819, 2
        %s821 = scalar_lea.vmem %s10, %s820
        %p822 = pneg %p258
        %p823 = pneg %p255
        %p824 = scmp.lt.s32.totalorder %s49, 1
        %s825 = scalar_select %p824, %s49, 1
        %s826 = smul.addr %s825, 2
        %s827 = scalar_lea.vmem %s11, %s826
        %p828 = pneg %p284
        %p829 = pneg %p281
        %p830 = scmp.lt.s32.totalorder %s49, 1
        %s831 = scalar_select %p830, %s49, 1
        %s832 = smul.addr %s831, 4
        %s833 = smul.addr %s832, 4
        %s834 = scalar_lea.vmem %s12, %s833
        %p835 = pneg %p310
        %p836 = pneg %p307
        %p837 = scmp.lt.s32.totalorder %s49, 1
        %s838 = scalar_select %p837, %s49, 1
        %s839 = scalar_lea.vmem %s13, %s838
        %p840 = pneg %p336
        %p841 = pneg %p333
        %p842 = scmp.lt.s32.totalorder %s49, 1
        %s843 = scalar_select %p842, %s49, 1
        %s844 = scalar_lea.vmem %s14, %s843
        %p845 = pneg %p362
        %p846 = pneg %p359
        %p847 = scmp.lt.s32.totalorder %s49, 1
        %s848 = scalar_select %p847, %s49, 1
        %s849 = scalar_lea.vmem %s15, %s848
        %p850 = pneg %p388
        %p851 = pneg %p385
        %p852 = scmp.lt.s32.totalorder %s49, 1
        %s853 = scalar_select %p852, %s49, 1
        %s854 = smul.addr %s853, 4
        %s855 = smul.addr %s854, 4
        %s856 = scalar_lea.vmem %s16, %s855
        %p857 = pneg %p414
        %p858 = pneg %p411
        %p859 = scmp.lt.s32.totalorder %s49, 1
        %s860 = scalar_select %p859, %s49, 1
        %s861 = scalar_lea.vmem %s17, %s860
        %p862 = pneg %p440
        %p863 = pneg %p437
        %p864 = scmp.lt.s32.totalorder %s49, 1
        %s865 = scalar_select %p864, %s49, 1
        %s866 = smul.addr %s865, 8
        %s867 = smul.addr %s866, 4
        %s868 = scalar_lea.vmem %s18, %s867
        %p869 = pneg %p466
        %p870 = pneg %p463
        %p871 = scmp.lt.s32.totalorder %s49, 1
        %s872 = scalar_select %p871, %s49, 1
        %s873 = scalar_lea.vmem %s19, %s872
        %p874 = pneg %p492
        %p875 = pneg %p489
        %p876 = scmp.lt.s32.totalorder %s49, 1
        %s877 = scalar_select %p876, %s49, 1
        %s878 = scalar_lea.vmem %s20, %s877
        %p879 = pneg %p518
        %p880 = pneg %p515
        %p881 = scmp.lt.s32.totalorder %s49, 1
        %s882 = scalar_select %p881, %s49, 1
        %s883 = scalar_lea.vmem %s21, %s882
        %p884 = pneg %p544
        %p885 = pneg %p541
        %p886 = pneg %p565
        %p887 = pneg %p562
        %p888 = pneg %p586
        %p889 = pneg %p583
        %p890 = pneg %p607
        %p891 = pneg %p604
        %p892 = pneg %p628
        %p893 = pneg %p625
        %p894 = scmp.lt.s32.totalorder %s49, 1
        %s895 = scalar_select %p894, %s49, 1
        %s896 = smul.addr %s895, 8
        %s897 = smul.addr %s896, 4
        %s898 = scalar_lea.vmem %s6, %s897
        %p899 = scmp.lt.s32.totalorder %s49, 1
        %s900 = scalar_select %p899, %s49, 1
        %s901 = smul.addr %s900, 8
        %s902 = smul.addr %s901, 4
        %s903 = scalar_lea.vmem %s7, %s902
        %p904 = scmp.lt.s32.totalorder %s49, 1
        %s905 = scalar_select %p904, %s49, 1
        %s906 = smul.addr %s905, 8
        %s907 = smul.addr %s906, 4
        %s908 = scalar_lea.vmem %s8, %s907
        %p909 = scmp.lt.s32.totalorder %s49, 1
        %s910 = scalar_select %p909, %s49, 1
        %s911 = smul.addr %s910, 2
        %s912 = scalar_lea.vmem %s9, %s911
        %p913 = scmp.lt.s32.totalorder %s49, 1
        %s914 = scalar_select %p913, %s49, 1
        %s915 = smul.addr %s914, 2
        %s916 = scalar_lea.vmem %s10, %s915
        %p917 = scmp.lt.s32.totalorder %s49, 1
        %s918 = scalar_select %p917, %s49, 1
        %s919 = smul.addr %s918, 2
        %s920 = scalar_lea.vmem %s11, %s919
        %p921 = scmp.lt.s32.totalorder %s49, 1
        %s922 = scalar_select %p921, %s49, 1
        %s923 = smul.addr %s922, 4
        %s924 = smul.addr %s923, 4
        %s925 = scalar_lea.vmem %s12, %s924
        %p926 = scmp.lt.s32.totalorder %s49, 1
        %s927 = scalar_select %p926, %s49, 1
        %s928 = scalar_lea.vmem %s13, %s927
        %p929 = scmp.lt.s32.totalorder %s49, 1
        %s930 = scalar_select %p929, %s49, 1
        %s931 = scalar_lea.vmem %s14, %s930
        %p932 = scmp.lt.s32.totalorder %s49, 1
        %s933 = scalar_select %p932, %s49, 1
        %s934 = scalar_lea.vmem %s15, %s933
        %p935 = scmp.lt.s32.totalorder %s49, 1
        %s936 = scalar_select %p935, %s49, 1
        %s937 = smul.addr %s936, 4
        %s938 = smul.addr %s937, 4
        %s939 = scalar_lea.vmem %s16, %s938
        %p940 = scmp.lt.s32.totalorder %s49, 1
        %s941 = scalar_select %p940, %s49, 1
        %s942 = scalar_lea.vmem %s17, %s941
        %p943 = scmp.lt.s32.totalorder %s49, 1
        %s944 = scalar_select %p943, %s49, 1
        %s945 = smul.addr %s944, 8
        %s946 = smul.addr %s945, 4
        %s947 = scalar_lea.vmem %s18, %s946
        %p948 = scmp.lt.s32.totalorder %s49, 1
        %s949 = scalar_select %p948, %s49, 1
        %s950 = scalar_lea.vmem %s19, %s949
        %p951 = scmp.lt.s32.totalorder %s49, 1
        %s952 = scalar_select %p951, %s49, 1
        %s953 = scalar_lea.vmem %s20, %s952
        %p954 = scmp.lt.s32.totalorder %s49, 1
        %s955 = scalar_select %p954, %s49, 1
        %s956 = scalar_lea.vmem %s21, %s955
        %p958 = scmp.eq.s32.totalorder %s49, 0
        // Predicated region
        $region109: #{tpu_custom_call.1} parent=107 // pred_check
          %p959 = pneg %p958
        $region110: #{tpu_custom_call.1} parent=107 // pred_check_branch
          %961 = sbr.rel (%p959) target = $region112
        $region111: #{tpu_custom_call.1} parent=107 // pred_region
          %v962 = vld [vmem:[%s2] sm:$0xff]
          %v963 = vld [vmem:[%s2 + $0x8] sm:$0xff]
          %v964 = vld [vmem:[%s2 + $0x10] sm:$0xff]
          %v965 = vld [vmem:[%s2 + $0x18] sm:$0xff]
          %v966 = vld [vmem:[%s4] sm:$0x1]
          %v967 = vld [vmem:[%s5] sm:$0x1]
          %vm968 = vcmask 261120
          %v969 = vsel %vm968, %v962, 0.0
          %970 = vadd.xlane.f32.xlu0 %v969
          %v971 = vpop.xlane.xlu0 %970
          %v972 = vsel %vm968, %v963, 0.0
          %973 = vadd.xlane.f32.xlu0 %v972
          %v974 = vpop.xlane.xlu0 %973
          %v975 = vsel %vm968, %v964, 0.0
          %976 = vadd.xlane.f32.xlu0 %v975
          %v977 = vpop.xlane.xlu0 %976
          %v978 = vsel %vm968, %v965, 0.0
          %979 = vadd.xlane.f32.xlu0 %v978
          %v980 = vpop.xlane.xlu0 %979
          %v981 = vrcp.pop 32.0
          %v982 = vmul.f32 %v971, %v981
          %v983 = vmul.f32 %v974, %v981
          %v984 = vmul.f32 %v977, %v981
          %v985 = vmul.f32 %v980, %v981
          %v986 = vsub.f32 %v962, %v982
          %v987 = vsub.f32 %v963, %v983
          %v988 = vsub.f32 %v964, %v984
          %v989 = vsub.f32 %v965, %v985
          %v990 = vmul.f32 %v986, %v986
          %v991 = vmul.f32 %v987, %v987
          %v992 = vmul.f32 %v988, %v988
          %v993 = vmul.f32 %v989, %v989
          %v994 = vsel %vm968, %v990, 0.0
          %995 = vadd.xlane.f32.xlu0 %v994
          %v996 = vpop.xlane.xlu0 %995
          %v997 = vsel %vm968, %v991, 0.0
          %998 = vadd.xlane.f32.xlu0 %v997
          %v999 = vpop.xlane.xlu0 %998
          %v1000 = vsel %vm968, %v992, 0.0
          %1001 = vadd.xlane.f32.xlu0 %v1000
          %v1002 = vpop.xlane.xlu0 %1001
          %v1003 = vsel %vm968, %v993, 0.0
          %1004 = vadd.xlane.f32.xlu0 %v1003
          %v1005 = vpop.xlane.xlu0 %1004
          %v1006 = vmul.f32 %v996, %v981
          %v1007 = vmul.f32 %v999, %v981
          %v1008 = vmul.f32 %v1002, %v981
          %v1009 = vmul.f32 %v1005, %v981
          %v1010 = vadd.f32 %v1006, 1e-12
          %v1011 = vadd.f32 %v1007, 1e-12
          %v1012 = vadd.f32 %v1008, 1e-12
          %v1013 = vadd.f32 %v1009, 1e-12
          %v1014 = vrsqrt.pop %v1010
          %v1015 = vrsqrt.pop %v1011
          %v1016 = vrsqrt.pop %v1012
          %v1017 = vrsqrt.pop %v1013
          %v1018 = vmul.f32 %v986, %v1014
          %v1019 = vmul.f32 %v987, %v1015
          %v1020 = vmul.f32 %v988, %v1016
          %v1021 = vmul.f32 %v989, %v1017
          %v1023 = vlaneseq
          %v1024 = vshrl.u32 %v1023, 7
          %v1025 = vsub.s32 0, %v1024
          %v1026 = vrot.slane %v966, %v1025
          %v1028 = vmul.f32 %v1018, %v1026
          %v1029 = vmul.f32 %v1019, %v1026
          %v1030 = vmul.f32 %v1020, %v1026
          %v1031 = vmul.f32 %v1021, %v1026
          %v1033 = vlaneseq
          %v1034 = vshrl.u32 %v1033, 7
          %v1035 = vsub.s32 0, %v1034
          %v1036 = vrot.slane %v967, %v1035
          %v1038 = vadd.f32 %v1028, %v1036
          %v1039 = vadd.f32 %v1029, %v1036
          %v1040 = vadd.f32 %v1030, %v1036
          %v1041 = vadd.f32 %v1031, %v1036
          %1042 = vst.msk [vmem:[#allocation2] sm:$0xff] %vm968, %v1038
          %1043 = vst.msk [vmem:[#allocation2 + $0x8] sm:$0xff] %vm968, %v1039
          %1044 = vst.msk [vmem:[#allocation2 + $0x10] sm:$0xff] %vm968, %v1040
          %1045 = vst.msk [vmem:[#allocation2 + $0x18] sm:$0xff] %vm968, %v1041
        $region112: #{tpu_custom_call.1} parent=107 // pred_fallthru
          _
        %v1046 = vlaneseq
        %v1047 = vshrl.u32 %v1046, 7
        %v1048 = vadd.s32 %v1047, 8
        %v1049 = vadd.s32 %v1047, 16
        %v1050 = vadd.s32 %v1047, 24
        %v1051 = vlaneseq
        %v1052 = vand.u32 %v1051, 127
        %vm1053 = vcmp.lt.s32.totalorder %v1047, 16
        %vm1054 = vcmp.lt.s32.totalorder %v1048, 16
        %vm1055 = vcmp.lt.s32.totalorder %v1049, 16
        %vm1056 = vcmp.lt.s32.totalorder %v1050, 16
        %vm1057 = vcmp.lt.s32.totalorder %v1052, 16
        %vm1058 = vmand %vm1053, %vm1057
        %vm1059 = vmand %vm1054, %vm1057
        %vm1060 = vmand %vm1055, %vm1057
        %vm1061 = vmand %vm1056, %vm1057
        %vm1062 = vcmp.ge.s32.totalorder %v1047, 16
        %vm1063 = vcmp.ge.s32.totalorder %v1048, 16
        %vm1064 = vcmp.ge.s32.totalorder %v1049, 16
        %vm1065 = vcmp.ge.s32.totalorder %v1050, 16
        %vm1066 = vcmp.lt.s32.totalorder %v1047, 32
        %vm1067 = vcmp.lt.s32.totalorder %v1048, 32
        %vm1068 = vcmp.lt.s32.totalorder %v1049, 32
        %vm1069 = vcmp.lt.s32.totalorder %v1050, 32
        %vm1070 = vmand %vm1062, %vm1066
        %vm1071 = vmand %vm1063, %vm1067
        %vm1072 = vmand %vm1064, %vm1068
        %vm1073 = vmand %vm1065, %vm1069
        %vm1074 = vcmp.ge.s32.totalorder %v1052, 16
        %vm1075 = vcmp.lt.s32.totalorder %v1052, 32
        %vm1076 = vmand %vm1074, %vm1075
        %vm1077 = vmand %vm1070, %vm1076
        %vm1078 = vmand %vm1071, %vm1076
        %vm1079 = vmand %vm1072, %vm1076
        %vm1080 = vmand %vm1073, %vm1076
        %vm1081 = vmor %vm1058, %vm1077
        %vm1082 = vmor %vm1059, %vm1078
        %vm1083 = vmor %vm1060, %vm1079
        %vm1084 = vmor %vm1061, %vm1080
        %v1085 = vld [vmem:[%s3] sm:$0x1]
        %vm1086 = vcmp.gt.f32.partialorder %v1085, 0.5
        %v1087 = vsel %vm1086, 1, 0
        %v1088 = vlaneseq
        %v1089 = vshrl.u32 %v1088, 7
        %v1090 = vsub.s32 0, %v1089
        %v1091 = vrot.slane %v1087, %v1090
        %vm1092 = vcmp.eq.s32.totalorder %v1091, 1
        %vm1093 = vmand %vm1081, %vm1092
        %vm1094 = vmand %vm1082, %vm1092
        %vm1095 = vmand %vm1083, %vm1092
        %vm1096 = vmand %vm1084, %vm1092
        %v1097 = vsel %vm1093, 0.0, -1e+09
        %v1098 = vsel %vm1094, 0.0, -1e+09
        %v1099 = vsel %vm1095, 0.0, -1e+09
        %v1100 = vsel %vm1096, 0.0, -1e+09
        %v1101 = vld [vmem:[#allocation2] sm:$0xff]
        %v1102 = vld [vmem:[#allocation2 + $0x8] sm:$0xff]
        %v1103 = vld [vmem:[#allocation2 + $0x10] sm:$0xff]
        %v1104 = vld [vmem:[#allocation2 + $0x18] sm:$0xff]
        %v1105 = vpack.c.bf16 %v1102, %v1101
        %v1106 = vpack.c.bf16 %v1104, %v1103
        %v1107 = vld [vmem:[%s898] sm:$0xf]
        %v1108 = vld [vmem:[%s898 + $0x4] sm:$0xf]
        %v1109 = vld [vmem:[%s898 + $0x8] sm:$0xf]
        %v1110 = vld [vmem:[%s898 + $0xc] sm:$0xf]
        %v1111 = vld [vmem:[%s912] sm:$0x1]
        %v1113 = vlaneseq
        %v1114 = vshrl.u32 %v1113, 7
        %v1115 = vsub.s32 0, %v1114
        %v1116 = vrot.slane %v1111, %v1115
        %v1122 = vunpack.c.l.b16 %v1107
        %v1123 = vunpack.c.l.b16 %v1108
        %v1124 = vunpack.c.l.b16 %v1109
        %v1125 = vunpack.c.l.b16 %v1110
        %v1126 = vpack.c.b16 %v1123, %v1122
        %v1127 = vpack.c.b16 %v1125, %v1124
        %vm1130 = vcmask 261120
        %v1132 = vsel %vm1130, %v1105, 0
        %v1135 = vsel %vm1130, %v1106, 0
        %1137 = vmatprep.subr.bf16.mxu0 0
        %1138 = vmatpush1.bf16.msra.mxu0 %v1126
        %1139 = vmatprep.subr.bf16.mxu0 0
        %1140 = vmatpush1.bf16.msra.mxu0 %v1127
        %1141 = vmatprep.subr.bf16.mxu0 0
        %1142 = vmatpush1.bf16.msra.mxu0 0
        %1143 = vmatprep.subr.bf16.mxu0 0
        %1144 = vmatpush1.bf16.msra.mxu0 0
        %1145 = vmatprep.subr.bf16.mxu0 0
        %1146 = vmatpush1.bf16.msra.mxu0 0
        %1147 = vmatprep.subr.bf16.mxu0 0
        %1148 = vmatpush1.bf16.msra.mxu0 0
        %1149 = vmatprep.subr.bf16.mxu0 0
        %1150 = vmatpush1.bf16.msra.mxu0 0
        %1151 = vmatprep.subr.bf16.mxu0 0
        %1152 = vmatpush1.bf16.msra.mxu0 0
        %1153 = vmatprep.subr.bf16.mxu0 0
        %1154 = vmatpush1.bf16.msra.mxu0 0
        %1155 = vmatprep.subr.bf16.mxu0 0
        %1156 = vmatpush1.bf16.msra.mxu0 0
        %1157 = vmatprep.subr.bf16.mxu0 0
        %1158 = vmatpush1.bf16.msra.mxu0 0
        %1159 = vmatprep.subr.bf16.mxu0 0
        %1160 = vmatpush1.bf16.msra.mxu0 0
        %1161 = vmatprep.subr.bf16.mxu0 0
        %1162 = vmatpush1.bf16.msra.mxu0 0
        %1163 = vmatprep.subr.bf16.mxu0 0
        %1164 = vmatpush1.bf16.msra.mxu0 0
        %1165 = vmatprep.subr.bf16.mxu0 0
        %1166 = vmatpush1.bf16.msra.mxu0 0
        %1167 = vmatprep.subr.bf16.mxu0 0
        %1168 = vmatpush1.bf16.msra.mxu0 0
        %1169 = vmatprep.mubr.bf16.mxu0 0
        %1170 = vmatmul.mubr.bf16.gmra.mrb[0].mxu0 %v1132
        %v1171 = vpop.f32.mrb[0].mxu0
        %v1172 = vadd.f32 %v1116, %v1171
        %v1173 = vpop.f32.mrb[0].mxu0
        %v1174 = vpop.f32.mrb[0].mxu0
        %v1175 = vadd.f32 %v1116, %v1174
        %v1176 = vpop.f32.mrb[0].mxu0
        %1177 = vmatprep.mubr.bf16.mxu0 0
        %1178 = vmatmul.mubr.bf16.gmra.mrb[0].mxu0 %v1135
        %v1179 = vpop.f32.mrb[0].mxu0
        %v1180 = vadd.f32 %v1116, %v1179
        %v1181 = vpop.f32.mrb[0].mxu0
        %v1182 = vpop.f32.mrb[0].mxu0
        %v1183 = vadd.f32 %v1116, %v1182
        %v1184 = vpop.f32.mrb[0].mxu0
        %1185 = vdwg.mxu0
        %v1186 = vld [vmem:[%s903] sm:$0xf]
        %v1187 = vld [vmem:[%s903 + $0x4] sm:$0xf]
        %v1188 = vld [vmem:[%s903 + $0x8] sm:$0xf]
        %v1189 = vld [vmem:[%s903 + $0xc] sm:$0xf]
        %v1190 = vld [vmem:[%s916] sm:$0x1]
        %v1192 = vlaneseq
        %v1193 = vshrl.u32 %v1192, 7
        %v1194 = vsub.s32 0, %v1193
        %v1195 = vrot.slane %v1190, %v1194
        %v1201 = vunpack.c.l.b16 %v1186
        %v1202 = vunpack.c.l.b16 %v1187
        %v1203 = vunpack.c.l.b16 %v1188
        %v1204 = vunpack.c.l.b16 %v1189
        %v1205 = vpack.c.b16 %v1202, %v1201
        %v1206 = vpack.c.b16 %v1204, %v1203
        %1209 = vmatprep.subr.bf16.mxu0 0
        %1210 = vmatpush1.bf16.msra.mxu0 %v1205
        %1211 = vmatprep.subr.bf16.mxu0 0
        %1212 = vmatpush1.bf16.msra.mxu0 %v1206
        %1213 = vmatprep.subr.bf16.mxu0 0
        %1214 = vmatpush1.bf16.msra.mxu0 0
        %1215 = vmatprep.subr.bf16.mxu0 0
        %1216 = vmatpush1.bf16.msra.mxu0 0
        %1217 = vmatprep.subr.bf16.mxu0 0
        %1218 = vmatpush1.bf16.msra.mxu0 0
        %1219 = vmatprep.subr.bf16.mxu0 0
        %1220 = vmatpush1.bf16.msra.mxu0 0
        %1221 = vmatprep.subr.bf16.mxu0 0
        %1222 = vmatpush1.bf16.msra.mxu0 0
        %1223 = vmatprep.subr.bf16.mxu0 0
        %1224 = vmatpush1.bf16.msra.mxu0 0
        %1225 = vmatprep.subr.bf16.mxu0 0
        %1226 = vmatpush1.bf16.msra.mxu0 0
        %1227 = vmatprep.subr.bf16.mxu0 0
        %1228 = vmatpush1.bf16.msra.mxu0 0
        %1229 = vmatprep.subr.bf16.mxu0 0
        %1230 = vmatpush1.bf16.msra.mxu0 0
        %1231 = vmatprep.subr.bf16.mxu0 0
        %1232 = vmatpush1.bf16.msra.mxu0 0
        %1233 = vmatprep.subr.bf16.mxu0 0
        %1234 = vmatpush1.bf16.msra.mxu0 0
        %1235 = vmatprep.subr.bf16.mxu0 0
        %1236 = vmatpush1.bf16.msra.mxu0 0
        %1237 = vmatprep.subr.bf16.mxu0 0
        %1238 = vmatpush1.bf16.msra.mxu0 0
        %1239 = vmatprep.subr.bf16.mxu0 0
        %1240 = vmatpush1.bf16.msra.mxu0 0
        %1241 = vmatprep.mubr.bf16.mxu0 0
        %1242 = vmatmul.mubr.bf16.gmra.mrb[0].mxu0 %v1132
        %v1243 = vpop.f32.mrb[0].mxu0
        %v1244 = vadd.f32 %v1195, %v1243
        %v1245 = vpop.f32.mrb[0].mxu0
        %v1246 = vpop.f32.mrb[0].mxu0
        %v1247 = vadd.f32 %v1195, %v1246
        %v1248 = vpop.f32.mrb[0].mxu0
        %1249 = vmatprep.mubr.bf16.mxu0 0
        %1250 = vmatmul.mubr.bf16.gmra.mrb[0].mxu0 %v1135
        %v1251 = vpop.f32.mrb[0].mxu0
        %v1252 = vadd.f32 %v1195, %v1251
        %v1253 = vpop.f32.mrb[0].mxu0
        %v1254 = vpop.f32.mrb[0].mxu0
        %v1255 = vadd.f32 %v1195, %v1254
        %v1256 = vpop.f32.mrb[0].mxu0
        %1257 = vdwg.mxu0
        %v1258 = vld [vmem:[%s908] sm:$0xf]
        %v1259 = vld [vmem:[%s908 + $0x4] sm:$0xf]
        %v1260 = vld [vmem:[%s908 + $0x8] sm:$0xf]
        %v1261 = vld [vmem:[%s908 + $0xc] sm:$0xf]
        %v1262 = vld [vmem:[%s920] sm:$0x1]
        %v1264 = vlaneseq
        %v1265 = vshrl.u32 %v1264, 7
        %v1266 = vsub.s32 0, %v1265
        %v1267 = vrot.slane %v1262, %v1266
        %v1273 = vunpack.c.l.b16 %v1258
        %v1274 = vunpack.c.l.b16 %v1259
        %v1275 = vunpack.c.l.b16 %v1260
        %v1276 = vunpack.c.l.b16 %v1261
        %v1277 = vpack.c.b16 %v1274, %v1273
        %v1278 = vpack.c.b16 %v1276, %v1275
        %1281 = vmatprep.subr.bf16.mxu0 0
        %1282 = vmatpush1.bf16.msra.mxu0 %v1277
        %1283 = vmatprep.subr.bf16.mxu0 0
        %1284 = vmatpush1.bf16.msra.mxu0 %v1278
        %1285 = vmatprep.subr.bf16.mxu0 0
        %1286 = vmatpush1.bf16.msra.mxu0 0
        %1287 = vmatprep.subr.bf16.mxu0 0
        %1288 = vmatpush1.bf16.msra.mxu0 0
        %1289 = vmatprep.subr.bf16.mxu0 0
        %1290 = vmatpush1.bf16.msra.mxu0 0
        %1291 = vmatprep.subr.bf16.mxu0 0
        %1292 = vmatpush1.bf16.msra.mxu0 0
        %1293 = vmatprep.subr.bf16.mxu0 0
        %1294 = vmatpush1.bf16.msra.mxu0 0
        %1295 = vmatprep.subr.bf16.mxu0 0
        %1296 = vmatpush1.bf16.msra.mxu0 0
        %1297 = vmatprep.subr.bf16.mxu0 0
        %1298 = vmatpush1.bf16.msra.mxu0 0
        %1299 = vmatprep.subr.bf16.mxu0 0
        %1300 = vmatpush1.bf16.msra.mxu0 0
        %1301 = vmatprep.subr.bf16.mxu0 0
        %1302 = vmatpush1.bf16.msra.mxu0 0
        %1303 = vmatprep.subr.bf16.mxu0 0
        %1304 = vmatpush1.bf16.msra.mxu0 0
        %1305 = vmatprep.subr.bf16.mxu0 0
        %1306 = vmatpush1.bf16.msra.mxu0 0
        %1307 = vmatprep.subr.bf16.mxu0 0
        %1308 = vmatpush1.bf16.msra.mxu0 0
        %1309 = vmatprep.subr.bf16.mxu0 0
        %1310 = vmatpush1.bf16.msra.mxu0 0
        %1311 = vmatprep.subr.bf16.mxu0 0
        %1312 = vmatpush1.bf16.msra.mxu0 0
        %1313 = vmatprep.mubr.bf16.mxu0 0
        %1314 = vmatmul.mubr.bf16.gmra.mrb[0].mxu0 %v1132
        %v1315 = vpop.f32.mrb[0].mxu0
        %v1316 = vadd.f32 %v1267, %v1315
        %v1317 = vpop.f32.mrb[0].mxu0
        %v1318 = vpop.f32.mrb[0].mxu0
        %v1319 = vadd.f32 %v1267, %v1318
        %v1320 = vpop.f32.mrb[0].mxu0
        %1321 = vmatprep.mubr.bf16.mxu0 0
        %1322 = vmatmul.mubr.bf16.gmra.mrb[0].mxu0 %v1135
        %v1323 = vpop.f32.mrb[0].mxu0
        %v1324 = vadd.f32 %v1267, %v1323
        %v1325 = vpop.f32.mrb[0].mxu0
        %v1326 = vpop.f32.mrb[0].mxu0
        %v1327 = vadd.f32 %v1267, %v1326
        %v1328 = vpop.f32.mrb[0].mxu0
        %1329 = vdwg.mxu0
        %v1330 = vpack.c.bf16 %v1175, %v1172
        %v1331 = vpack.c.bf16 %v1183, %v1180
        %v1332 = vpack.c.bf16 %v1247, %v1244
        %v1333 = vpack.c.bf16 %v1255, %v1252
        %vm1334 = vcmask 130048
        %v1336 = vsel %vm1334, %v1330, 0
        %v1339 = vsel %vm1334, %v1331, 0
        %v1342 = vsel %vm1334, %v1332, 0
        %v1345 = vsel %vm1334, %v1333, 0
        %1347 = vmatprep.subr.bf16.mxu0 0
        %1348 = vmatpush1.bf16.xpose.msra.mxu0 %v1342
        %1349 = vmatprep.subr.bf16.mxu0 0
        %1350 = vmatpush1.bf16.xpose.msra.mxu0 %v1345
        %1351 = vmatprep.subr.bf16.mxu0 0
        %1352 = vmatpush1.bf16.xpose.msra.mxu0 0
        %1353 = vmatprep.subr.bf16.mxu0 0
        %1354 = vmatpush1.bf16.xpose.msra.mxu0 0
        %1355 = vmatprep.subr.bf16.mxu0 0
        %1356 = vmatpush1.bf16.xpose.msra.mxu0 0
        %1357 = vmatprep.subr.bf16.mxu0 0
        %1358 = vmatpush1.bf16.xpose.msra.mxu0 0
        %1359 = vmatprep.subr.bf16.mxu0 0
        %1360 = vmatpush1.bf16.xpose.msra.mxu0 0
        %1361 = vmatprep.subr.bf16.mxu0 0
        %1362 = vmatpush1.bf16.xpose.msra.mxu0 0
        %1363 = vmatprep.subr.bf16.mxu0 0
        %1364 = vmatpush1.bf16.xpose.msra.mxu0 0
        %1365 = vmatprep.subr.bf16.mxu0 0
        %1366 = vmatpush1.bf16.xpose.msra.mxu0 0
        %1367 = vmatprep.subr.bf16.mxu0 0
        %1368 = vmatpush1.bf16.xpose.msra.mxu0 0
        %1369 = vmatprep.subr.bf16.mxu0 0
        %1370 = vmatpush1.bf16.xpose.msra.mxu0 0
        %1371 = vmatprep.subr.bf16.mxu0 0
        %1372 = vmatpush1.bf16.xpose.msra.mxu0 0
        %1373 = vmatprep.subr.bf16.mxu0 0
        %1374 = vmatpush1.bf16.xpose.msra.mxu0 0
        %1375 = vmatprep.subr.bf16.mxu0 0
        %1376 = vmatpush1.bf16.xpose.msra.mxu0 0
        %1377 = vmatprep.subr.bf16.mxu0 0
        %1378 = vmatpush1.bf16.xpose.msra.mxu0 0
        %1379 = vmatprep.mubr.bf16.mxu0 0
        %1380 = vmatmul.mubr.bf16.gmra.mrb[0].mxu0 %v1336
        %v1381 = vpop.f32.mrb[0].mxu0
        %v1382 = vadd.f32 0.0, %v1381
        %v1383 = vpop.f32.mrb[0].mxu0
        %v1384 = vpop.f32.mrb[0].mxu0
        %v1385 = vadd.f32 0.0, %v1384
        %v1386 = vpop.f32.mrb[0].mxu0
        %1387 = vmatprep.mubr.bf16.mxu0 0
        %1388 = vmatmul.mubr.bf16.gmra.mrb[0].mxu0 %v1339
        %v1389 = vpop.f32.mrb[0].mxu0
        %v1390 = vadd.f32 0.0, %v1389
        %v1391 = vpop.f32.mrb[0].mxu0
        %v1392 = vpop.f32.mrb[0].mxu0
        %v1393 = vadd.f32 0.0, %v1392
        %v1394 = vpop.f32.mrb[0].mxu0
        %1395 = vdwg.mxu0
        %v1396 = vmul.f32 %v1382, 0.25
        %v1397 = vmul.f32 %v1385, 0.25
        %v1398 = vmul.f32 %v1390, 0.25
        %v1399 = vmul.f32 %v1393, 0.25
        %v1400 = vadd.f32 %v1396, %v1097
        %v1401 = vadd.f32 %v1397, %v1098
        %v1402 = vadd.f32 %v1398, %v1099
        %v1403 = vadd.f32 %v1399, %v1100
        %v1404 = vsel %vm1130, %v1400, -inf
        %1405 = vmax.xlane.f32.xlu0 %v1404
        %v1406 = vpop.xlane.xlu0 %1405
        %v1407 = vsel %vm1130, %v1401, -inf
        %1408 = vmax.xlane.f32.xlu0 %v1407
        %v1409 = vpop.xlane.xlu0 %1408
        %v1410 = vsel %vm1130, %v1402, -inf
        %1411 = vmax.xlane.f32.xlu0 %v1410
        %v1412 = vpop.xlane.xlu0 %1411
        %v1413 = vsel %vm1130, %v1403, -inf
        %1414 = vmax.xlane.f32.xlu0 %v1413
        %v1415 = vpop.xlane.xlu0 %1414
        %v1416 = vsub.f32 %v1400, %v1406
        %v1417 = vsub.f32 %v1401, %v1409
        %v1418 = vsub.f32 %v1402, %v1412
        %v1419 = vsub.f32 %v1403, %v1415
        %v1420 = vmul.f32 %v1416, 1.442695
        %v1421 = vpow.pop %v1420
        %v1422 = vmul.f32 %v1417, 1.442695
        %v1423 = vpow.pop %v1422
        %v1424 = vmul.f32 %v1418, 1.442695
        %v1425 = vpow.pop %v1424
        %v1426 = vmul.f32 %v1419, 1.442695
        %v1427 = vpow.pop %v1426
        %v1428 = vsel %vm1130, %v1421, 0.0
        %1429 = vadd.xlane.f32.xlu0 %v1428
        %v1430 = vpop.xlane.xlu0 %1429
        %v1431 = vsel %vm1130, %v1423, 0.0
        %1432 = vadd.xlane.f32.xlu0 %v1431
        %v1433 = vpop.xlane.xlu0 %1432
        %v1434 = vsel %vm1130, %v1425, 0.0
        %1435 = vadd.xlane.f32.xlu0 %v1434
        %v1436 = vpop.xlane.xlu0 %1435
        %v1437 = vsel %vm1130, %v1427, 0.0
        %1438 = vadd.xlane.f32.xlu0 %v1437
        %v1439 = vpop.xlane.xlu0 %1438
        %v1440 = vrcp.pop %v1430
        %v1441 = vrcp.pop %v1433
        %v1442 = vrcp.pop %v1436
        %v1443 = vrcp.pop %v1439
        %v1444 = vmul.f32 %v1421, %v1440
        %v1445 = vmul.f32 %v1423, %v1441
        %v1446 = vmul.f32 %v1425, %v1442
        %v1447 = vmul.f32 %v1427, %v1443
        %v1448 = vpack.c.bf16 %v1445, %v1444
        %v1449 = vpack.c.bf16 %v1447, %v1446
        %v1450 = vpack.c.bf16 %v1319, %v1316
        %v1451 = vpack.c.bf16 %v1327, %v1324
        %v1453 = vsel %vm1130, %v1448, 0
        %v1456 = vsel %vm1130, %v1449, 0
        %1458 = vmatprep.subr.bf16.mxu0 0
        %1459 = vmatpush1.bf16.msra.mxu0 %v1450
        %1460 = vmatprep.subr.bf16.mxu0 0
        %1461 = vmatpush1.bf16.msra.mxu0 %v1451
        %1462 = vmatprep.subr.bf16.mxu0 0
        %1463 = vmatpush1.bf16.msra.mxu0 0
        %1464 = vmatprep.subr.bf16.mxu0 0
        %1465 = vmatpush1.bf16.msra.mxu0 0
        %1466 = vmatprep.subr.bf16.mxu0 0
        %1467 = vmatpush1.bf16.msra.mxu0 0
        %1468 = vmatprep.subr.bf16.mxu0 0
        %1469 = vmatpush1.bf16.msra.mxu0 0
        %1470 = vmatprep.subr.bf16.mxu0 0
        %1471 = vmatpush1.bf16.msra.mxu0 0
        %1472 = vmatprep.subr.bf16.mxu0 0
        %1473 = vmatpush1.bf16.msra.mxu0 0
        %1474 = vmatprep.subr.bf16.mxu0 0
        %1475 = vmatpush1.bf16.msra.mxu0 0
        %1476 = vmatprep.subr.bf16.mxu0 0
        %1477 = vmatpush1.bf16.msra.mxu0 0
        %1478 = vmatprep.subr.bf16.mxu0 0
        %1479 = vmatpush1.bf16.msra.mxu0 0
        %1480 = vmatprep.subr.bf16.mxu0 0
        %1481 = vmatpush1.bf16.msra.mxu0 0
        %1482 = vmatprep.subr.bf16.mxu0 0
        %1483 = vmatpush1.bf16.msra.mxu0 0
        %1484 = vmatprep.subr.bf16.mxu0 0
        %1485 = vmatpush1.bf16.msra.mxu0 0
        %1486 = vmatprep.subr.bf16.mxu0 0
        %1487 = vmatpush1.bf16.msra.mxu0 0
        %1488 = vmatprep.subr.bf16.mxu0 0
        %1489 = vmatpush1.bf16.msra.mxu0 0
        %1490 = vmatprep.mubr.bf16.mxu0 0
        %1491 = vmatmul.mubr.bf16.gmra.mrb[0].mxu0 %v1453
        %v1492 = vpop.f32.mrb[0].mxu0
        %v1493 = vadd.f32 0.0, %v1492
        %v1494 = vpop.f32.mrb[0].mxu0
        %v1495 = vpop.f32.mrb[0].mxu0
        %v1496 = vadd.f32 0.0, %v1495
        %v1497 = vpop.f32.mrb[0].mxu0
        %1498 = vmatprep.mubr.bf16.mxu0 0
        %1499 = vmatmul.mubr.bf16.gmra.mrb[0].mxu0 %v1456
        %v1500 = vpop.f32.mrb[0].mxu0
        %v1501 = vadd.f32 0.0, %v1500
        %v1502 = vpop.f32.mrb[0].mxu0
        %v1503 = vpop.f32.mrb[0].mxu0
        %v1504 = vadd.f32 0.0, %v1503
        %v1505 = vpop.f32.mrb[0].mxu0
        %1506 = vdwg.mxu0
        %v1507 = vpack.c.bf16 %v1496, %v1493
        %v1508 = vpack.c.bf16 %v1504, %v1501
        %v1509 = vld [vmem:[%s925] sm:$0xf]
        %v1510 = vld [vmem:[%s925 + $0x4] sm:$0xf]
        %s1511 = scalar_lea.vmem %s898, 16
        %v1512 = vld [vmem:[%s1511] sm:$0xf]
        %v1513 = vld [vmem:[%s1511 + $0x4] sm:$0xf]
        %v1514 = vld [vmem:[%s1511 + $0x8] sm:$0xf]
        %v1515 = vld [vmem:[%s1511 + $0xc] sm:$0xf]
        %s1516 = scalar_lea.vmem %s912, 1
        %v1517 = vld [vmem:[%s1516] sm:$0x1]
        %v1519 = vlaneseq
        %v1520 = vshrl.u32 %v1519, 7
        %v1521 = vsub.s32 0, %v1520
        %v1522 = vrot.slane %v1517, %v1521
        %v1528 = vunpack.c.l.b16 %v1512
        %v1529 = vunpack.c.l.b16 %v1513
        %v1530 = vunpack.c.l.b16 %v1514
        %v1531 = vunpack.c.l.b16 %v1515
        %v1532 = vpack.c.b16 %v1529, %v1528
        %v1533 = vpack.c.b16 %v1531, %v1530
        %1536 = vmatprep.subr.bf16.mxu0 0
        %1537 = vmatpush1.bf16.msra.mxu0 %v1532
        %1538 = vmatprep.subr.bf16.mxu0 0
        %1539 = vmatpush1.bf16.msra.mxu0 %v1533
        %1540 = vmatprep.subr.bf16.mxu0 0
        %1541 = vmatpush1.bf16.msra.mxu0 0
        %1542 = vmatprep.subr.bf16.mxu0 0
        %1543 = vmatpush1.bf16.msra.mxu0 0
        %1544 = vmatprep.subr.bf16.mxu0 0
        %1545 = vmatpush1.bf16.msra.mxu0 0
        %1546 = vmatprep.subr.bf16.mxu0 0
        %1547 = vmatpush1.bf16.msra.mxu0 0
        %1548 = vmatprep.subr.bf16.mxu0 0
        %1549 = vmatpush1.bf16.msra.mxu0 0
        %1550 = vmatprep.subr.bf16.mxu0 0
        %1551 = vmatpush1.bf16.msra.mxu0 0
        %1552 = vmatprep.subr.bf16.mxu0 0
        %1553 = vmatpush1.bf16.msra.mxu0 0
        %1554 = vmatprep.subr.bf16.mxu0 0
        %1555 = vmatpush1.bf16.msra.mxu0 0
        %1556 = vmatprep.subr.bf16.mxu0 0
        %1557 = vmatpush1.bf16.msra.mxu0 0
        %1558 = vmatprep.subr.bf16.mxu0 0
        %1559 = vmatpush1.bf16.msra.mxu0 0
        %1560 = vmatprep.subr.bf16.mxu0 0
        %1561 = vmatpush1.bf16.msra.mxu0 0
        %1562 = vmatprep.subr.bf16.mxu0 0
        %1563 = vmatpush1.bf16.msra.mxu0 0
        %1564 = vmatprep.subr.bf16.mxu0 0
        %1565 = vmatpush1.bf16.msra.mxu0 0
        %1566 = vmatprep.subr.bf16.mxu0 0
        %1567 = vmatpush1.bf16.msra.mxu0 0
        %1568 = vmatprep.mubr.bf16.mxu0 0
        %1569 = vmatmul.mubr.bf16.gmra.mrb[0].mxu0 %v1132
        %v1570 = vpop.f32.mrb[0].mxu0
        %v1571 = vadd.f32 %v1522, %v1570
        %v1572 = vpop.f32.mrb[0].mxu0
        %v1573 = vpop.f32.mrb[0].mxu0
        %v1574 = vadd.f32 %v1522, %v1573
        %v1575 = vpop.f32.mrb[0].mxu0
        %1576 = vmatprep.mubr.bf16.mxu0 0
        %1577 = vmatmul.mubr.bf16.gmra.mrb[0].mxu0 %v1135
        %v1578 = vpop.f32.mrb[0].mxu0
        %v1579 = vadd.f32 %v1522, %v1578
        %v1580 = vpop.f32.mrb[0].mxu0
        %v1581 = vpop.f32.mrb[0].mxu0
        %v1582 = vadd.f32 %v1522, %v1581
        %v1583 = vpop.f32.mrb[0].mxu0
        %1584 = vdwg.mxu0
        %s1585 = scalar_lea.vmem %s903, 16
        %v1586 = vld [vmem:[%s1585] sm:$0xf]
        %v1587 = vld [vmem:[%s1585 + $0x4] sm:$0xf]
        %v1588 = vld [vmem:[%s1585 + $0x8] sm:$0xf]
        %v1589 = vld [vmem:[%s1585 + $0xc] sm:$0xf]
        %s1590 = scalar_lea.vmem %s916, 1
        %v1591 = vld [vmem:[%s1590] sm:$0x1]
        %v1593 = vlaneseq
        %v1594 = vshrl.u32 %v1593, 7
        %v1595 = vsub.s32 0, %v1594
        %v1596 = vrot.slane %v1591, %v1595
        %v1602 = vunpack.c.l.b16 %v1586
        %v1603 = vunpack.c.l.b16 %v1587
        %v1604 = vunpack.c.l.b16 %v1588
        %v1605 = vunpack.c.l.b16 %v1589
        %v1606 = vpack.c.b16 %v1603, %v1602
        %v1607 = vpack.c.b16 %v1605, %v1604
        %1610 = vmatprep.subr.bf16.mxu0 0
        %1611 = vmatpush1.bf16.msra.mxu0 %v1606
        %1612 = vmatprep.subr.bf16.mxu0 0
        %1613 = vmatpush1.bf16.msra.mxu0 %v1607
        %1614 = vmatprep.subr.bf16.mxu0 0
        %1615 = vmatpush1.bf16.msra.mxu0 0
        %1616 = vmatprep.subr.bf16.mxu0 0
        %1617 = vmatpush1.bf16.msra.mxu0 0
        %1618 = vmatprep.subr.bf16.mxu0 0
        %1619 = vmatpush1.bf16.msra.mxu0 0
        %1620 = vmatprep.subr.bf16.mxu0 0
        %1621 = vmatpush1.bf16.msra.mxu0 0
        %1622 = vmatprep.subr.bf16.mxu0 0
        %1623 = vmatpush1.bf16.msra.mxu0 0
        %1624 = vmatprep.subr.bf16.mxu0 0
        %1625 = vmatpush1.bf16.msra.mxu0 0
        %1626 = vmatprep.subr.bf16.mxu0 0
        %1627 = vmatpush1.bf16.msra.mxu0 0
        %1628 = vmatprep.subr.bf16.mxu0 0
        %1629 = vmatpush1.bf16.msra.mxu0 0
        %1630 = vmatprep.subr.bf16.mxu0 0
        %1631 = vmatpush1.bf16.msra.mxu0 0
        %1632 = vmatprep.subr.bf16.mxu0 0
        %1633 = vmatpush1.bf16.msra.mxu0 0
        %1634 = vmatprep.subr.bf16.mxu0 0
        %1635 = vmatpush1.bf16.msra.mxu0 0
        %1636 = vmatprep.subr.bf16.mxu0 0
        %1637 = vmatpush1.bf16.msra.mxu0 0
        %1638 = vmatprep.subr.bf16.mxu0 0
        %1639 = vmatpush1.bf16.msra.mxu0 0
        %1640 = vmatprep.subr.bf16.mxu0 0
        %1641 = vmatpush1.bf16.msra.mxu0 0
        %1642 = vmatprep.mubr.bf16.mxu0 0
        %1643 = vmatmul.mubr.bf16.gmra.mrb[0].mxu0 %v1132
        %v1644 = vpop.f32.mrb[0].mxu0
        %v1645 = vadd.f32 %v1596, %v1644
        %v1646 = vpop.f32.mrb[0].mxu0
        %v1647 = vpop.f32.mrb[0].mxu0
        %v1648 = vadd.f32 %v1596, %v1647
        %v1649 = vpop.f32.mrb[0].mxu0
        %1650 = vmatprep.mubr.bf16.mxu0 0
        %1651 = vmatmul.mubr.bf16.gmra.mrb[0].mxu0 %v1135
        %v1652 = vpop.f32.mrb[0].mxu0
        %v1653 = vadd.f32 %v1596, %v1652
        %v1654 = vpop.f32.mrb[0].mxu0
        %v1655 = vpop.f32.mrb[0].mxu0
        %v1656 = vadd.f32 %v1596, %v1655
        %v1657 = vpop.f32.mrb[0].mxu0
        %1658 = vdwg.mxu0
        %s1659 = scalar_lea.vmem %s908, 16
        %v1660 = vld [vmem:[%s1659] sm:$0xf]
        %v1661 = vld [vmem:[%s1659 + $0x4] sm:$0xf]
        %v1662 = vld [vmem:[%s1659 + $0x8] sm:$0xf]
        %v1663 = vld [vmem:[%s1659 + $0xc] sm:$0xf]
        %s1664 = scalar_lea.vmem %s920, 1
        %v1665 = vld [vmem:[%s1664] sm:$0x1]
        %v1667 = vlaneseq
        %v1668 = vshrl.u32 %v1667, 7
        %v1669 = vsub.s32 0, %v1668
        %v1670 = vrot.slane %v1665, %v1669
        %v1676 = vunpack.c.l.b16 %v1660
        %v1677 = vunpack.c.l.b16 %v1661
        %v1678 = vunpack.c.l.b16 %v1662
        %v1679 = vunpack.c.l.b16 %v1663
        %v1680 = vpack.c.b16 %v1677, %v1676
        %v1681 = vpack.c.b16 %v1679, %v1678
        %1684 = vmatprep.subr.bf16.mxu0 0
        %1685 = vmatpush1.bf16.msra.mxu0 %v1680
        %1686 = vmatprep.subr.bf16.mxu0 0
        %1687 = vmatpush1.bf16.msra.mxu0 %v1681
        %1688 = vmatprep.subr.bf16.mxu0 0
        %1689 = vmatpush1.bf16.msra.mxu0 0
        %1690 = vmatprep.subr.bf16.mxu0 0
        %1691 = vmatpush1.bf16.msra.mxu0 0
        %1692 = vmatprep.subr.bf16.mxu0 0
        %1693 = vmatpush1.bf16.msra.mxu0 0
        %1694 = vmatprep.subr.bf16.mxu0 0
        %1695 = vmatpush1.bf16.msra.mxu0 0
        %1696 = vmatprep.subr.bf16.mxu0 0
        %1697 = vmatpush1.bf16.msra.mxu0 0
        %1698 = vmatprep.subr.bf16.mxu0 0
        %1699 = vmatpush1.bf16.msra.mxu0 0
        %1700 = vmatprep.subr.bf16.mxu0 0
        %1701 = vmatpush1.bf16.msra.mxu0 0
        %1702 = vmatprep.subr.bf16.mxu0 0
        %1703 = vmatpush1.bf16.msra.mxu0 0
        %1704 = vmatprep.subr.bf16.mxu0 0
        %1705 = vmatpush1.bf16.msra.mxu0 0
        %1706 = vmatprep.subr.bf16.mxu0 0
        %1707 = vmatpush1.bf16.msra.mxu0 0
        %1708 = vmatprep.subr.bf16.mxu0 0
        %1709 = vmatpush1.bf16.msra.mxu0 0
        %1710 = vmatprep.subr.bf16.mxu0 0
        %1711 = vmatpush1.bf16.msra.mxu0 0
        %1712 = vmatprep.subr.bf16.mxu0 0
        %1713 = vmatpush1.bf16.msra.mxu0 0
        %1714 = vmatprep.subr.bf16.mxu0 0
        %1715 = vmatpush1.bf16.msra.mxu0 0
        %1716 = vmatprep.mubr.bf16.mxu0 0
        %1717 = vmatmul.mubr.bf16.gmra.mrb[0].mxu0 %v1132
        %v1718 = vpop.f32.mrb[0].mxu0
        %v1719 = vadd.f32 %v1670, %v1718
        %v1720 = vpop.f32.mrb[0].mxu0
        %v1721 = vpop.f32.mrb[0].mxu0
        %v1722 = vadd.f32 %v1670, %v1721
        %v1723 = vpop.f32.mrb[0].mxu0
        %1724 = vmatprep.mubr.bf16.mxu0 0
        %1725 = vmatmul.mubr.bf16.gmra.mrb[0].mxu0 %v1135
        %v1726 = vpop.f32.mrb[0].mxu0
        %v1727 = vadd.f32 %v1670, %v1726
        %v1728 = vpop.f32.mrb[0].mxu0
        %v1729 = vpop.f32.mrb[0].mxu0
        %v1730 = vadd.f32 %v1670, %v1729
        %v1731 = vpop.f32.mrb[0].mxu0
        %1732 = vdwg.mxu0
        %v1733 = vpack.c.bf16 %v1574, %v1571
        %v1734 = vpack.c.bf16 %v1582, %v1579
        %v1735 = vpack.c.bf16 %v1648, %v1645
        %v1736 = vpack.c.bf16 %v1656, %v1653
        %v1738 = vsel %vm1334, %v1733, 0
        %v1741 = vsel %vm1334, %v1734, 0
        %v1744 = vsel %vm1334, %v1735, 0
        %v1747 = vsel %vm1334, %v1736, 0
        %1749 = vmatprep.subr.bf16.mxu0 0
        %1750 = vmatpush1.bf16.xpose.msra.mxu0 %v1744
        %1751 = vmatprep.subr.bf16.mxu0 0
        %1752 = vmatpush1.bf16.xpose.msra.mxu0 %v1747
        %1753 = vmatprep.subr.bf16.mxu0 0
        %1754 = vmatpush1.bf16.xpose.msra.mxu0 0
        %1755 = vmatprep.subr.bf16.mxu0 0
        %1756 = vmatpush1.bf16.xpose.msra.mxu0 0
        %1757 = vmatprep.subr.bf16.mxu0 0
        %1758 = vmatpush1.bf16.xpose.msra.mxu0 0
        %1759 = vmatprep.subr.bf16.mxu0 0
        %1760 = vmatpush1.bf16.xpose.msra.mxu0 0
        %1761 = vmatprep.subr.bf16.mxu0 0
        %1762 = vmatpush1.bf16.xpose.msra.mxu0 0
        %1763 = vmatprep.subr.bf16.mxu0 0
        %1764 = vmatpush1.bf16.xpose.msra.mxu0 0
        %1765 = vmatprep.subr.bf16.mxu0 0
        %1766 = vmatpush1.bf16.xpose.msra.mxu0 0
        %1767 = vmatprep.subr.bf16.mxu0 0
        %1768 = vmatpush1.bf16.xpose.msra.mxu0 0
        %1769 = vmatprep.subr.bf16.mxu0 0
        %1770 = vmatpush1.bf16.xpose.msra.mxu0 0
        %1771 = vmatprep.subr.bf16.mxu0 0
        %1772 = vmatpush1.bf16.xpose.msra.mxu0 0
        %1773 = vmatprep.subr.bf16.mxu0 0
        %1774 = vmatpush1.bf16.xpose.msra.mxu0 0
        %1775 = vmatprep.subr.bf16.mxu0 0
        %1776 = vmatpush1.bf16.xpose.msra.mxu0 0
        %1777 = vmatprep.subr.bf16.mxu0 0
        %1778 = vmatpush1.bf16.xpose.msra.mxu0 0
        %1779 = vmatprep.subr.bf16.mxu0 0
        %1780 = vmatpush1.bf16.xpose.msra.mxu0 0
        %1781 = vmatprep.mubr.bf16.mxu0 0
        %1782 = vmatmul.mubr.bf16.gmra.mrb[0].mxu0 %v1738
        %v1783 = vpop.f32.mrb[0].mxu0
        %v1784 = vadd.f32 0.0, %v1783
        %v1785 = vpop.f32.mrb[0].mxu0
        %v1786 = vpop.f32.mrb[0].mxu0
        %v1787 = vadd.f32 0.0, %v1786
        %v1788 = vpop.f32.mrb[0].mxu0
        %1789 = vmatprep.mubr.bf16.mxu0 0
        %1790 = vmatmul.mubr.bf16.gmra.mrb[0].mxu0 %v1741
        %v1791 = vpop.f32.mrb[0].mxu0
        %v1792 = vadd.f32 0.0, %v1791
        %v1793 = vpop.f32.mrb[0].mxu0
        %v1794 = vpop.f32.mrb[0].mxu0
        %v1795 = vadd.f32 0.0, %v1794
        %v1796 = vpop.f32.mrb[0].mxu0
        %1797 = vdwg.mxu0
        %v1798 = vmul.f32 %v1784, 0.25
        %v1799 = vmul.f32 %v1787, 0.25
        %v1800 = vmul.f32 %v1792, 0.25
        %v1801 = vmul.f32 %v1795, 0.25
        %v1802 = vadd.f32 %v1798, %v1097
        %v1803 = vadd.f32 %v1799, %v1098
        %v1804 = vadd.f32 %v1800, %v1099
        %v1805 = vadd.f32 %v1801, %v1100
        %v1806 = vsel %vm1130, %v1802, -inf
        %1807 = vmax.xlane.f32.xlu0 %v1806
        %v1808 = vpop.xlane.xlu0 %1807
        %v1809 = vsel %vm1130, %v1803, -inf
        %1810 = vmax.xlane.f32.xlu0 %v1809
        %v1811 = vpop.xlane.xlu0 %1810
        %v1812 = vsel %vm1130, %v1804, -inf
        %1813 = vmax.xlane.f32.xlu0 %v1812
        %v1814 = vpop.xlane.xlu0 %1813
        %v1815 = vsel %vm1130, %v1805, -inf
        %1816 = vmax.xlane.f32.xlu0 %v1815
        %v1817 = vpop.xlane.xlu0 %1816
        %v1818 = vsub.f32 %v1802, %v1808
        %v1819 = vsub.f32 %v1803, %v1811
        %v1820 = vsub.f32 %v1804, %v1814
        %v1821 = vsub.f32 %v1805, %v1817
        %v1822 = vmul.f32 %v1818, 1.442695
        %v1823 = vpow.pop %v1822
        %v1824 = vmul.f32 %v1819, 1.442695
        %v1825 = vpow.pop %v1824
        %v1826 = vmul.f32 %v1820, 1.442695
        %v1827 = vpow.pop %v1826
        %v1828 = vmul.f32 %v1821, 1.442695
        %v1829 = vpow.pop %v1828
        %v1830 = vsel %vm1130, %v1823, 0.0
        %1831 = vadd.xlane.f32.xlu0 %v1830
        %v1832 = vpop.xlane.xlu0 %1831
        %v1833 = vsel %vm1130, %v1825, 0.0
        %1834 = vadd.xlane.f32.xlu0 %v1833
        %v1835 = vpop.xlane.xlu0 %1834
        %v1836 = vsel %vm1130, %v1827, 0.0
        %1837 = vadd.xlane.f32.xlu0 %v1836
        %v1838 = vpop.xlane.xlu0 %1837
        %v1839 = vsel %vm1130, %v1829, 0.0
        %1840 = vadd.xlane.f32.xlu0 %v1839
        %v1841 = vpop.xlane.xlu0 %1840
        %v1842 = vrcp.pop %v1832
        %v1843 = vrcp.pop %v1835
        %v1844 = vrcp.pop %v1838
        %v1845 = vrcp.pop %v1841
        %v1846 = vmul.f32 %v1823, %v1842
        %v1847 = vmul.f32 %v1825, %v1843
        %v1848 = vmul.f32 %v1827, %v1844
        %v1849 = vmul.f32 %v1829, %v1845
        %v1850 = vpack.c.bf16 %v1847, %v1846
        %v1851 = vpack.c.bf16 %v1849, %v1848
        %v1852 = vpack.c.bf16 %v1722, %v1719
        %v1853 = vpack.c.bf16 %v1730, %v1727
        %v1855 = vsel %vm1130, %v1850, 0
        %v1858 = vsel %vm1130, %v1851, 0
        %1860 = vmatprep.subr.bf16.mxu0 0
        %1861 = vmatpush1.bf16.msra.mxu0 %v1852
        %1862 = vmatprep.subr.bf16.mxu0 0
        %1863 = vmatpush1.bf16.msra.mxu0 %v1853
        %1864 = vmatprep.subr.bf16.mxu0 0
        %1865 = vmatpush1.bf16.msra.mxu0 0
        %1866 = vmatprep.subr.bf16.mxu0 0
        %1867 = vmatpush1.bf16.msra.mxu0 0
        %1868 = vmatprep.subr.bf16.mxu0 0
        %1869 = vmatpush1.bf16.msra.mxu0 0
        %1870 = vmatprep.subr.bf16.mxu0 0
        %1871 = vmatpush1.bf16.msra.mxu0 0
        %1872 = vmatprep.subr.bf16.mxu0 0
        %1873 = vmatpush1.bf16.msra.mxu0 0
        %1874 = vmatprep.subr.bf16.mxu0 0
        %1875 = vmatpush1.bf16.msra.mxu0 0
        %1876 = vmatprep.subr.bf16.mxu0 0
        %1877 = vmatpush1.bf16.msra.mxu0 0
        %1878 = vmatprep.subr.bf16.mxu0 0
        %1879 = vmatpush1.bf16.msra.mxu0 0
        %1880 = vmatprep.subr.bf16.mxu0 0
        %1881 = vmatpush1.bf16.msra.mxu0 0
        %1882 = vmatprep.subr.bf16.mxu0 0
        %1883 = vmatpush1.bf16.msra.mxu0 0
        %1884 = vmatprep.subr.bf16.mxu0 0
        %1885 = vmatpush1.bf16.msra.mxu0 0
        %1886 = vmatprep.subr.bf16.mxu0 0
        %1887 = vmatpush1.bf16.msra.mxu0 0
        %1888 = vmatprep.subr.bf16.mxu0 0
        %1889 = vmatpush1.bf16.msra.mxu0 0
        %1890 = vmatprep.subr.bf16.mxu0 0
        %1891 = vmatpush1.bf16.msra.mxu0 0
        %1892 = vmatprep.mubr.bf16.mxu0 0
        %1893 = vmatmul.mubr.bf16.gmra.mrb[0].mxu0 %v1855
        %v1894 = vpop.f32.mrb[0].mxu0
        %v1895 = vadd.f32 0.0, %v1894
        %v1896 = vpop.f32.mrb[0].mxu0
        %v1897 = vpop.f32.mrb[0].mxu0
        %v1898 = vadd.f32 0.0, %v1897
        %v1899 = vpop.f32.mrb[0].mxu0
        %1900 = vmatprep.mubr.bf16.mxu0 0
        %1901 = vmatmul.mubr.bf16.gmra.mrb[0].mxu0 %v1858
        %v1902 = vpop.f32.mrb[0].mxu0
        %v1903 = vadd.f32 0.0, %v1902
        %v1904 = vpop.f32.mrb[0].mxu0
        %v1905 = vpop.f32.mrb[0].mxu0
        %v1906 = vadd.f32 0.0, %v1905
        %v1907 = vpop.f32.mrb[0].mxu0
        %1908 = vdwg.mxu0
        %v1909 = vpack.c.bf16 %v1898, %v1895
        %v1910 = vpack.c.bf16 %v1906, %v1903
        %s1911 = scalar_lea.vmem %s925, 8
        %v1912 = vld [vmem:[%s1911] sm:$0xf]
        %v1913 = vld [vmem:[%s1911 + $0x4] sm:$0xf]
        %v1916 = vunpack.c.l.b16 %v1912
        %v1917 = vunpack.c.l.b16 %v1913
        %v1918 = vpack.c.b16 %v1917, %v1916
        %v1921 = vsel %vm1334, %v1909, 0
        %v1924 = vsel %vm1334, %v1910, 0
        %1926 = vmatprep.subr.bf16.mxu0 0
        %1927 = vmatpush1.bf16.msra.mxu0 %v1918
        %1928 = vmatprep.subr.bf16.mxu0 0
        %1929 = vmatpush1.bf16.msra.mxu0 0
        %1930 = vmatprep.subr.bf16.mxu0 0
        %1931 = vmatpush1.bf16.msra.mxu0 0
        %1932 = vmatprep.subr.bf16.mxu0 0
        %1933 = vmatpush1.bf16.msra.mxu0 0
        %1934 = vmatprep.subr.bf16.mxu0 0
        %1935 = vmatpush1.bf16.msra.mxu0 0
        %1936 = vmatprep.subr.bf16.mxu0 0
        %1937 = vmatpush1.bf16.msra.mxu0 0
        %1938 = vmatprep.subr.bf16.mxu0 0
        %1939 = vmatpush1.bf16.msra.mxu0 0
        %1940 = vmatprep.subr.bf16.mxu0 0
        %1941 = vmatpush1.bf16.msra.mxu0 0
        %1942 = vmatprep.subr.bf16.mxu0 0
        %1943 = vmatpush1.bf16.msra.mxu0 0
        %1944 = vmatprep.subr.bf16.mxu0 0
        %1945 = vmatpush1.bf16.msra.mxu0 0
        %1946 = vmatprep.subr.bf16.mxu0 0
        %1947 = vmatpush1.bf16.msra.mxu0 0
        %1948 = vmatprep.subr.bf16.mxu0 0
        %1949 = vmatpush1.bf16.msra.mxu0 0
        %1950 = vmatprep.subr.bf16.mxu0 0
        %1951 = vmatpush1.bf16.msra.mxu0 0
        %1952 = vmatprep.subr.bf16.mxu0 0
        %1953 = vmatpush1.bf16.msra.mxu0 0
        %1954 = vmatprep.subr.bf16.mxu0 0
        %1955 = vmatpush1.bf16.msra.mxu0 0
        %1956 = vmatprep.subr.bf16.mxu0 0
        %1957 = vmatpush1.bf16.msra.mxu0 0
        %1958 = vmatprep.mubr.bf16.mxu0 0
        %1959 = vmatmul.mubr.bf16.gmra.mrb[0].mxu0 %v1921
        %v1960 = vpop.f32.mrb[0].mxu0
        %v1961 = vadd.f32 0.0, %v1960
        %v1962 = vpop.f32.mrb[0].mxu0
        %v1963 = vpop.f32.mrb[0].mxu0
        %v1964 = vadd.f32 0.0, %v1963
        %v1965 = vpop.f32.mrb[0].mxu0
        %1966 = vmatprep.mubr.bf16.mxu0 0
        %1967 = vmatmul.mubr.bf16.gmra.mrb[0].mxu0 %v1924
        %v1968 = vpop.f32.mrb[0].mxu0
        %v1969 = vadd.f32 0.0, %v1968
        %v1970 = vpop.f32.mrb[0].mxu0
        %v1971 = vpop.f32.mrb[0].mxu0
        %v1972 = vadd.f32 0.0, %v1971
        %v1973 = vpop.f32.mrb[0].mxu0
        %1974 = vdwg.mxu0
        %v1977 = vunpack.c.l.b16 %v1509
        %v1978 = vunpack.c.l.b16 %v1510
        %v1979 = vpack.c.b16 %v1978, %v1977
        %v1982 = vsel %vm1334, %v1507, 0
        %v1985 = vsel %vm1334, %v1508, 0
        %1987 = vmatprep.subr.bf16.mxu0 0
        %1988 = vmatpush1.bf16.msra.mxu0 %v1979
        %1989 = vmatprep.subr.bf16.mxu0 0
        %1990 = vmatpush1.bf16.msra.mxu0 0
        %1991 = vmatprep.subr.bf16.mxu0 0
        %1992 = vmatpush1.bf16.msra.mxu0 0
        %1993 = vmatprep.subr.bf16.mxu0 0
        %1994 = vmatpush1.bf16.msra.mxu0 0
        %1995 = vmatprep.subr.bf16.mxu0 0
        %1996 = vmatpush1.bf16.msra.mxu0 0
        %1997 = vmatprep.subr.bf16.mxu0 0
        %1998 = vmatpush1.bf16.msra.mxu0 0
        %1999 = vmatprep.subr.bf16.mxu0 0
        %2000 = vmatpush1.bf16.msra.mxu0 0
        %2001 = vmatprep.subr.bf16.mxu0 0
        %2002 = vmatpush1.bf16.msra.mxu0 0
        %2003 = vmatprep.subr.bf16.mxu0 0
        %2004 = vmatpush1.bf16.msra.mxu0 0
        %2005 = vmatprep.subr.bf16.mxu0 0
        %2006 = vmatpush1.bf16.msra.mxu0 0
        %2007 = vmatprep.subr.bf16.mxu0 0
        %2008 = vmatpush1.bf16.msra.mxu0 0
        %2009 = vmatprep.subr.bf16.mxu0 0
        %2010 = vmatpush1.bf16.msra.mxu0 0
        %2011 = vmatprep.subr.bf16.mxu0 0
        %2012 = vmatpush1.bf16.msra.mxu0 0
        %2013 = vmatprep.subr.bf16.mxu0 0
        %2014 = vmatpush1.bf16.msra.mxu0 0
        %2015 = vmatprep.subr.bf16.mxu0 0
        %2016 = vmatpush1.bf16.msra.mxu0 0
        %2017 = vmatprep.subr.bf16.mxu0 0
        %2018 = vmatpush1.bf16.msra.mxu0 0
        %2019 = vmatprep.mubr.bf16.mxu0 0
        %2020 = vmatmul.mubr.bf16.gmra.mrb[0].mxu0 %v1982
        %v2021 = vpop.f32.mrb[0].mxu0
        %v2022 = vadd.f32 %v1961, %v2021
        %v2023 = vpop.f32.mrb[0].mxu0
        %v2024 = vpop.f32.mrb[0].mxu0
        %v2025 = vadd.f32 %v1964, %v2024
        %v2026 = vpop.f32.mrb[0].mxu0
        %2027 = vmatprep.mubr.bf16.mxu0 0
        %2028 = vmatmul.mubr.bf16.gmra.mrb[0].mxu0 %v1985
        %v2029 = vpop.f32.mrb[0].mxu0
        %v2030 = vadd.f32 %v1969, %v2029
        %v2031 = vpop.f32.mrb[0].mxu0
        %v2032 = vpop.f32.mrb[0].mxu0
        %v2033 = vadd.f32 %v1972, %v2032
        %v2034 = vpop.f32.mrb[0].mxu0
        %2035 = vdwg.mxu0
        %v2036 = vld [vmem:[%s928] sm:$0x1]
        %v2038 = vlaneseq
        %v2039 = vshrl.u32 %v2038, 7
        %v2040 = vsub.s32 0, %v2039
        %v2041 = vrot.slane %v2036, %v2040
        %v2043 = vadd.f32 %v2022, %v2041
        %v2044 = vadd.f32 %v2025, %v2041
        %v2045 = vadd.f32 %v2030, %v2041
        %v2046 = vadd.f32 %v2033, %v2041
        %v2047 = vadd.f32 %v1101, %v2043
        %v2048 = vadd.f32 %v1102, %v2044
        %v2049 = vadd.f32 %v1103, %v2045
        %v2050 = vadd.f32 %v1104, %v2046
        %v2051 = vld [vmem:[%s931] sm:$0x1]
        %v2052 = vld [vmem:[%s934] sm:$0x1]
        %v2053 = vsel %vm1130, %v2047, 0.0
        %2054 = vadd.xlane.f32.xlu0 %v2053
        %v2055 = vpop.xlane.xlu0 %2054
        %v2056 = vsel %vm1130, %v2048, 0.0
        %2057 = vadd.xlane.f32.xlu0 %v2056
        %v2058 = vpop.xlane.xlu0 %2057
        %v2059 = vsel %vm1130, %v2049, 0.0
        %2060 = vadd.xlane.f32.xlu0 %v2059
        %v2061 = vpop.xlane.xlu0 %2060
        %v2062 = vsel %vm1130, %v2050, 0.0
        %2063 = vadd.xlane.f32.xlu0 %v2062
        %v2064 = vpop.xlane.xlu0 %2063
        %v2065 = vrcp.pop 32.0
        %v2066 = vmul.f32 %v2055, %v2065
        %v2067 = vmul.f32 %v2058, %v2065
        %v2068 = vmul.f32 %v2061, %v2065
        %v2069 = vmul.f32 %v2064, %v2065
        %v2070 = vsub.f32 %v2047, %v2066
        %v2071 = vsub.f32 %v2048, %v2067
        %v2072 = vsub.f32 %v2049, %v2068
        %v2073 = vsub.f32 %v2050, %v2069
        %v2074 = vmul.f32 %v2070, %v2070
        %v2075 = vmul.f32 %v2071, %v2071
        %v2076 = vmul.f32 %v2072, %v2072
        %v2077 = vmul.f32 %v2073, %v2073
        %v2078 = vsel %vm1130, %v2074, 0.0
        %2079 = vadd.xlane.f32.xlu0 %v2078
        %v2080 = vpop.xlane.xlu0 %2079
        %v2081 = vsel %vm1130, %v2075, 0.0
        %2082 = vadd.xlane.f32.xlu0 %v2081
        %v2083 = vpop.xlane.xlu0 %2082
        %v2084 = vsel %vm1130, %v2076, 0.0
        %2085 = vadd.xlane.f32.xlu0 %v2084
        %v2086 = vpop.xlane.xlu0 %2085
        %v2087 = vsel %vm1130, %v2077, 0.0
        %2088 = vadd.xlane.f32.xlu0 %v2087
        %v2089 = vpop.xlane.xlu0 %2088
        %v2090 = vmul.f32 %v2080, %v2065
        %v2091 = vmul.f32 %v2083, %v2065
        %v2092 = vmul.f32 %v2086, %v2065
        %v2093 = vmul.f32 %v2089, %v2065
        %v2094 = vadd.f32 %v2090, 1e-12
        %v2095 = vadd.f32 %v2091, 1e-12
        %v2096 = vadd.f32 %v2092, 1e-12
        %v2097 = vadd.f32 %v2093, 1e-12
        %v2098 = vrsqrt.pop %v2094
        %v2099 = vrsqrt.pop %v2095
        %v2100 = vrsqrt.pop %v2096
        %v2101 = vrsqrt.pop %v2097
        %v2102 = vmul.f32 %v2070, %v2098
        %v2103 = vmul.f32 %v2071, %v2099
        %v2104 = vmul.f32 %v2072, %v2100
        %v2105 = vmul.f32 %v2073, %v2101
        %v2107 = vlaneseq
        %v2108 = vshrl.u32 %v2107, 7
        %v2109 = vsub.s32 0, %v2108
        %v2110 = vrot.slane %v2051, %v2109
        %v2112 = vmul.f32 %v2102, %v2110
        %v2113 = vmul.f32 %v2103, %v2110
        %v2114 = vmul.f32 %v2104, %v2110
        %v2115 = vmul.f32 %v2105, %v2110
        %v2117 = vlaneseq
        %v2118 = vshrl.u32 %v2117, 7
        %v2119 = vsub.s32 0, %v2118
        %v2120 = vrot.slane %v2052, %v2119
        %v2122 = vadd.f32 %v2112, %v2120
        %v2123 = vadd.f32 %v2113, %v2120
        %v2124 = vadd.f32 %v2114, %v2120
        %v2125 = vadd.f32 %v2115, %v2120
        %v2126 = vpack.c.bf16 %v2123, %v2122
        %v2127 = vpack.c.bf16 %v2125, %v2124
        %v2128 = vld [vmem:[%s939] sm:$0xf]
        %v2129 = vld [vmem:[%s939 + $0x4] sm:$0xf]
        %v2130 = vld [vmem:[%s939 + $0x8] sm:$0xf]
        %v2131 = vld [vmem:[%s939 + $0xc] sm:$0xf]
        %v2132 = vld [vmem:[%s942] sm:$0x1]
        %v2134 = vlaneseq
        %v2135 = vshrl.u32 %v2134, 7
        %v2136 = vsub.s32 0, %v2135
        %v2137 = vrot.slane %v2132, %v2136
        %v2143 = vunpack.c.l.b16 %v2128
        %v2144 = vunpack.c.l.b16 %v2129
        %v2145 = vunpack.c.l.b16 %v2130
        %v2146 = vunpack.c.l.b16 %v2131
        %v2147 = vpack.c.b16 %v2144, %v2143
        %v2148 = vpack.c.b16 %v2146, %v2145
        %v2152 = vsel %vm1130, %v2126, 0
        %v2155 = vsel %vm1130, %v2127, 0
        %2157 = vmatprep.subr.bf16.mxu0 0
        %2158 = vmatpush1.bf16.msra.mxu0 %v2147
        %2159 = vmatprep.subr.bf16.mxu0 0
        %2160 = vmatpush1.bf16.msra.mxu0 %v2148
        %2161 = vmatprep.subr.bf16.mxu0 0
        %2162 = vmatpush1.bf16.msra.mxu0 0
        %2163 = vmatprep.subr.bf16.mxu0 0
        %2164 = vmatpush1.bf16.msra.mxu0 0
        %2165 = vmatprep.subr.bf16.mxu0 0
        %2166 = vmatpush1.bf16.msra.mxu0 0
        %2167 = vmatprep.subr.bf16.mxu0 0
        %2168 = vmatpush1.bf16.msra.mxu0 0
        %2169 = vmatprep.subr.bf16.mxu0 0
        %2170 = vmatpush1.bf16.msra.mxu0 0
        %2171 = vmatprep.subr.bf16.mxu0 0
        %2172 = vmatpush1.bf16.msra.mxu0 0
        %2173 = vmatprep.subr.bf16.mxu0 0
        %2174 = vmatpush1.bf16.msra.mxu0 0
        %2175 = vmatprep.subr.bf16.mxu0 0
        %2176 = vmatpush1.bf16.msra.mxu0 0
        %2177 = vmatprep.subr.bf16.mxu0 0
        %2178 = vmatpush1.bf16.msra.mxu0 0
        %2179 = vmatprep.subr.bf16.mxu0 0
        %2180 = vmatpush1.bf16.msra.mxu0 0
        %2181 = vmatprep.subr.bf16.mxu0 0
        %2182 = vmatpush1.bf16.msra.mxu0 0
        %2183 = vmatprep.subr.bf16.mxu0 0
        %2184 = vmatpush1.bf16.msra.mxu0 0
        %2185 = vmatprep.subr.bf16.mxu0 0
        %2186 = vmatpush1.bf16.msra.mxu0 0
        %2187 = vmatprep.subr.bf16.mxu0 0
        %2188 = vmatpush1.bf16.msra.mxu0 0
        %2189 = vmatprep.mubr.bf16.mxu0 0
        %2190 = vmatmul.mubr.bf16.gmra.mrb[0].mxu0 %v2152
        %v2191 = vpop.f32.mrb[0].mxu0
        %v2192 = vadd.f32 %v2137, %v2191
        %v2193 = vpop.f32.mrb[0].mxu0
        %v2194 = vpop.f32.mrb[0].mxu0
        %v2195 = vadd.f32 %v2137, %v2194
        %v2196 = vpop.f32.mrb[0].mxu0
        %2197 = vmatprep.mubr.bf16.mxu0 0
        %2198 = vmatmul.mubr.bf16.gmra.mrb[0].mxu0 %v2155
        %v2199 = vpop.f32.mrb[0].mxu0
        %v2200 = vadd.f32 %v2137, %v2199
        %v2201 = vpop.f32.mrb[0].mxu0
        %v2202 = vpop.f32.mrb[0].mxu0
        %v2203 = vadd.f32 %v2137, %v2202
        %v2204 = vpop.f32.mrb[0].mxu0
        %2205 = vdwg.mxu0
        %v2206 = vmul.f32 %v2192, 0.5
        %v2207 = vmul.f32 %v2195, 0.5
        %v2208 = vmul.f32 %v2200, 0.5
        %v2209 = vmul.f32 %v2203, 0.5
        %v2210 = vmul.f32 %v2192, 0.044715
        %v2211 = vmul.f32 %v2195, 0.044715
        %v2212 = vmul.f32 %v2200, 0.044715
        %v2213 = vmul.f32 %v2203, 0.044715
        %v2214 = vmul.f32 %v2210, %v2192
        %v2215 = vmul.f32 %v2211, %v2195
        %v2216 = vmul.f32 %v2212, %v2200
        %v2217 = vmul.f32 %v2213, %v2203
        %v2218 = vmul.f32 %v2214, %v2192
        %v2219 = vmul.f32 %v2215, %v2195
        %v2220 = vmul.f32 %v2216, %v2200
        %v2221 = vmul.f32 %v2217, %v2203
        %v2222 = vadd.f32 %v2192, %v2218
        %v2223 = vadd.f32 %v2195, %v2219
        %v2224 = vadd.f32 %v2200, %v2220
        %v2225 = vadd.f32 %v2203, %v2221
        %v2226 = vmul.f32 %v2222, 0.7978846
        %v2227 = vmul.f32 %v2223, 0.7978846
        %v2228 = vmul.f32 %v2224, 0.7978846
        %v2229 = vmul.f32 %v2225, 0.7978846
        %v2230 = vtanh.pop %v2226
        %v2231 = vtanh.pop %v2227
        %v2232 = vtanh.pop %v2228
        %v2233 = vtanh.pop %v2229
        %v2234 = vadd.f32 %v2230, 1.0
        %v2235 = vadd.f32 %v2231, 1.0
        %v2236 = vadd.f32 %v2232, 1.0
        %v2237 = vadd.f32 %v2233, 1.0
        %v2238 = vmul.f32 %v2206, %v2234
        %v2239 = vmul.f32 %v2207, %v2235
        %v2240 = vmul.f32 %v2208, %v2236
        %v2241 = vmul.f32 %v2209, %v2237
        %v2242 = vpack.c.bf16 %v2239, %v2238
        %v2243 = vpack.c.bf16 %v2241, %v2240
        %v2244 = vld [vmem:[%s947] sm:$0xf]
        %v2245 = vld [vmem:[%s947 + $0x4] sm:$0xf]
        %v2246 = vld [vmem:[%s947 + $0x8] sm:$0xf]
        %v2247 = vld [vmem:[%s947 + $0xc] sm:$0xf]
        %v2248 = vld [vmem:[%s947 + $0x10] sm:$0xf]
        %v2249 = vld [vmem:[%s947 + $0x14] sm:$0xf]
        %v2250 = vld [vmem:[%s947 + $0x18] sm:$0xf]
        %v2251 = vld [vmem:[%s947 + $0x1c] sm:$0xf]
        %v2252 = vld [vmem:[%s950] sm:$0x1]
        %v2254 = vlaneseq
        %v2255 = vshrl.u32 %v2254, 7
        %v2256 = vsub.s32 0, %v2255
        %v2257 = vrot.slane %v2252, %v2256
        %v2267 = vunpack.c.l.b16 %v2244
        %v2268 = vunpack.c.l.b16 %v2245
        %v2269 = vunpack.c.l.b16 %v2246
        %v2270 = vunpack.c.l.b16 %v2247
        %v2271 = vunpack.c.l.b16 %v2248
        %v2272 = vunpack.c.l.b16 %v2249
        %v2273 = vunpack.c.l.b16 %v2250
        %v2274 = vunpack.c.l.b16 %v2251
        %v2275 = vpack.c.b16 %v2268, %v2267
        %v2276 = vpack.c.b16 %v2270, %v2269
        %v2277 = vpack.c.b16 %v2272, %v2271
        %v2278 = vpack.c.b16 %v2274, %v2273
        %vm2283 = vcmask 523264
        %v2285 = vsel %vm2283, %v2242, 0
        %v2288 = vsel %vm2283, %v2243, 0
        %2290 = vmatprep.subr.bf16.mxu0 0
        %2291 = vmatpush1.bf16.msra.mxu0 %v2275
        %2292 = vmatprep.subr.bf16.mxu0 0
        %2293 = vmatpush1.bf16.msra.mxu0 %v2276
        %2294 = vmatprep.subr.bf16.mxu0 0
        %2295 = vmatpush1.bf16.msra.mxu0 %v2277
        %2296 = vmatprep.subr.bf16.mxu0 0
        %2297 = vmatpush1.bf16.msra.mxu0 %v2278
        %2298 = vmatprep.subr.bf16.mxu0 0
        %2299 = vmatpush1.bf16.msra.mxu0 0
        %2300 = vmatprep.subr.bf16.mxu0 0
        %2301 = vmatpush1.bf16.msra.mxu0 0
        %2302 = vmatprep.subr.bf16.mxu0 0
        %2303 = vmatpush1.bf16.msra.mxu0 0
        %2304 = vmatprep.subr.bf16.mxu0 0
        %2305 = vmatpush1.bf16.msra.mxu0 0
        %2306 = vmatprep.subr.bf16.mxu0 0
        %2307 = vmatpush1.bf16.msra.mxu0 0
        %2308 = vmatprep.subr.bf16.mxu0 0
        %2309 = vmatpush1.bf16.msra.mxu0 0
        %2310 = vmatprep.subr.bf16.mxu0 0
        %2311 = vmatpush1.bf16.msra.mxu0 0
        %2312 = vmatprep.subr.bf16.mxu0 0
        %2313 = vmatpush1.bf16.msra.mxu0 0
        %2314 = vmatprep.subr.bf16.mxu0 0
        %2315 = vmatpush1.bf16.msra.mxu0 0
        %2316 = vmatprep.subr.bf16.mxu0 0
        %2317 = vmatpush1.bf16.msra.mxu0 0
        %2318 = vmatprep.subr.bf16.mxu0 0
        %2319 = vmatpush1.bf16.msra.mxu0 0
        %2320 = vmatprep.subr.bf16.mxu0 0
        %2321 = vmatpush1.bf16.msra.mxu0 0
        %2322 = vmatprep.mubr.bf16.mxu0 0
        %2323 = vmatmul.mubr.bf16.gmra.mrb[0].mxu0 %v2285
        %v2324 = vpop.f32.mrb[0].mxu0
        %v2325 = vadd.f32 %v2257, %v2324
        %v2326 = vpop.f32.mrb[0].mxu0
        %v2327 = vpop.f32.mrb[0].mxu0
        %v2328 = vadd.f32 %v2257, %v2327
        %v2329 = vpop.f32.mrb[0].mxu0
        %2330 = vmatprep.mubr.bf16.mxu0 0
        %2331 = vmatmul.mubr.bf16.gmra.mrb[0].mxu0 %v2288
        %v2332 = vpop.f32.mrb[0].mxu0
        %v2333 = vadd.f32 %v2257, %v2332
        %v2334 = vpop.f32.mrb[0].mxu0
        %v2335 = vpop.f32.mrb[0].mxu0
        %v2336 = vadd.f32 %v2257, %v2335
        %v2337 = vpop.f32.mrb[0].mxu0
        %2338 = vdwg.mxu0
        %v2339 = vadd.f32 %v2122, %v2325
        %v2340 = vadd.f32 %v2123, %v2328
        %v2341 = vadd.f32 %v2124, %v2333
        %v2342 = vadd.f32 %v2125, %v2336
        %v2343 = vld [vmem:[%s953] sm:$0x1]
        %v2344 = vld [vmem:[%s956] sm:$0x1]
        %v2345 = vsel %vm1130, %v2339, 0.0
        %2346 = vadd.xlane.f32.xlu0 %v2345
        %v2347 = vpop.xlane.xlu0 %2346
        %v2348 = vsel %vm1130, %v2340, 0.0
        %2349 = vadd.xlane.f32.xlu0 %v2348
        %v2350 = vpop.xlane.xlu0 %2349
        %v2351 = vsel %vm1130, %v2341, 0.0
        %2352 = vadd.xlane.f32.xlu0 %v2351
        %v2353 = vpop.xlane.xlu0 %2352
        %v2354 = vsel %vm1130, %v2342, 0.0
        %2355 = vadd.xlane.f32.xlu0 %v2354
        %v2356 = vpop.xlane.xlu0 %2355
        %v2357 = vmul.f32 %v2347, %v2065
        %v2358 = vmul.f32 %v2350, %v2065
        %v2359 = vmul.f32 %v2353, %v2065
        %v2360 = vmul.f32 %v2356, %v2065
        %v2361 = vsub.f32 %v2339, %v2357
        %v2362 = vsub.f32 %v2340, %v2358
        %v2363 = vsub.f32 %v2341, %v2359
        %v2364 = vsub.f32 %v2342, %v2360
        %v2365 = vmul.f32 %v2361, %v2361
        %v2366 = vmul.f32 %v2362, %v2362
        %v2367 = vmul.f32 %v2363, %v2363
        %v2368 = vmul.f32 %v2364, %v2364
        %v2369 = vsel %vm1130, %v2365, 0.0
        %2370 = vadd.xlane.f32.xlu0 %v2369
        %v2371 = vpop.xlane.xlu0 %2370
        %v2372 = vsel %vm1130, %v2366, 0.0
        %2373 = vadd.xlane.f32.xlu0 %v2372
        %v2374 = vpop.xlane.xlu0 %2373
        %v2375 = vsel %vm1130, %v2367, 0.0
        %2376 = vadd.xlane.f32.xlu0 %v2375
        %v2377 = vpop.xlane.xlu0 %2376
        %v2378 = vsel %vm1130, %v2368, 0.0
        %2379 = vadd.xlane.f32.xlu0 %v2378
        %v2380 = vpop.xlane.xlu0 %2379
        %v2381 = vmul.f32 %v2371, %v2065
        %v2382 = vmul.f32 %v2374, %v2065
        %v2383 = vmul.f32 %v2377, %v2065
        %v2384 = vmul.f32 %v2380, %v2065
        %v2385 = vadd.f32 %v2381, 1e-12
        %v2386 = vadd.f32 %v2382, 1e-12
        %v2387 = vadd.f32 %v2383, 1e-12
        %v2388 = vadd.f32 %v2384, 1e-12
        %v2389 = vrsqrt.pop %v2385
        %v2390 = vrsqrt.pop %v2386
        %v2391 = vrsqrt.pop %v2387
        %v2392 = vrsqrt.pop %v2388
        %v2393 = vmul.f32 %v2361, %v2389
        %v2394 = vmul.f32 %v2362, %v2390
        %v2395 = vmul.f32 %v2363, %v2391
        %v2396 = vmul.f32 %v2364, %v2392
        %v2398 = vlaneseq
        %v2399 = vshrl.u32 %v2398, 7
        %v2400 = vsub.s32 0, %v2399
        %v2401 = vrot.slane %v2343, %v2400
        %v2403 = vmul.f32 %v2393, %v2401
        %v2404 = vmul.f32 %v2394, %v2401
        %v2405 = vmul.f32 %v2395, %v2401
        %v2406 = vmul.f32 %v2396, %v2401
        %v2408 = vlaneseq
        %v2409 = vshrl.u32 %v2408, 7
        %v2410 = vsub.s32 0, %v2409
        %v2411 = vrot.slane %v2344, %v2410
        %v2413 = vadd.f32 %v2403, %v2411
        %v2414 = vadd.f32 %v2404, %v2411
        %v2415 = vadd.f32 %v2405, %v2411
        %v2416 = vadd.f32 %v2406, %v2411
        %2417 = vst.msk [vmem:[#allocation2] sm:$0xff] %vm1130, %v2413
        %2418 = vst.msk [vmem:[#allocation2 + $0x8] sm:$0xff] %vm1130, %v2414
        %2419 = vst.msk [vmem:[#allocation2 + $0x10] sm:$0xff] %vm1130, %v2415
        %2420 = vst.msk [vmem:[#allocation2 + $0x18] sm:$0xff] %vm1130, %v2416
        %p2421 = scmp.eq.s32.totalorder %s49, 1
        // Predicated region
        $region113: #{tpu_custom_call.1} parent=107 // pred_check
          %p2422 = pneg %p2421
        $region114: #{tpu_custom_call.1} parent=107 // pred_check_branch
          %2424 = sbr.rel (%p2422) target = $region116
        $region115: #{tpu_custom_call.1} parent=107 // pred_region
          %s2425 = sld [smem:[#allocation4]]
          %p2426 = scmp.gt.s32.totalorder %s2425, 0
          %s2427 = scalar_select %p2426, %s2425, 0
          %p2428 = scmp.lt.s32.totalorder %s2427, 15
          %s2429 = scalar_select %p2428, %s2427, 15
          %s2430 = sld [smem:[#allocation5]]
          %p2431 = scmp.gt.s32.totalorder %s2430, 0
          %s2432 = scalar_select %p2431, 1.0, 0.0
          %vm2433 = vcmp.eq.s32.totalorder %v1047, 0
          %v2434 = vstv %s2429
          %vm2435 = vcmp.eq.s32.totalorder %v1052, %v2434
          %vm2436 = vmand %vm2433, %vm2435
          %v2437 = vstv %s2432
          %v2438 = vsel %vm2436, %v2437, 0.0
          %s2439 = sld [smem:[#allocation4 + $0x1]]
          %p2440 = scmp.gt.s32.totalorder %s2439, 0
          %s2441 = scalar_select %p2440, %s2439, 0
          %p2442 = scmp.lt.s32.totalorder %s2441, 15
          %s2443 = scalar_select %p2442, %s2441, 15
          %p2444 = scmp.gt.s32.totalorder %s2430, 1
          %s2445 = scalar_select %p2444, 1.0, 0.0
          %vm2446 = vcmp.eq.s32.totalorder %v1047, 1
          %v2447 = vstv %s2443
          %vm2448 = vcmp.eq.s32.totalorder %v1052, %v2447
          %vm2449 = vmand %vm2446, %vm2448
          %v2450 = vstv %s2445
          %v2451 = vsel %vm2449, %v2450, %v2438
          %s2452 = sld [smem:[#allocation4 + $0x2]]
          %p2453 = scmp.gt.s32.totalorder %s2452, 0
          %s2454 = scalar_select %p2453, %s2452, 0
          %p2455 = scmp.lt.s32.totalorder %s2454, 15
          %s2456 = scalar_select %p2455, %s2454, 15
          %p2457 = scmp.gt.s32.totalorder %s2430, 2
          %s2458 = scalar_select %p2457, 1.0, 0.0
          %vm2459 = vcmp.eq.s32.totalorder %v1047, 2
          %v2460 = vstv %s2456
          %vm2461 = vcmp.eq.s32.totalorder %v1052, %v2460
          %vm2462 = vmand %vm2459, %vm2461
          %v2463 = vstv %s2458
          %v2464 = vsel %vm2462, %v2463, %v2451
          %s2465 = sld [smem:[#allocation4 + $0x3]]
          %p2466 = scmp.gt.s32.totalorder %s2465, 0
          %s2467 = scalar_select %p2466, %s2465, 0
          %p2468 = scmp.lt.s32.totalorder %s2467, 15
          %s2469 = scalar_select %p2468, %s2467, 15
          %p2470 = scmp.gt.s32.totalorder %s2430, 3
          %s2471 = scalar_select %p2470, 1.0, 0.0
          %vm2472 = vcmp.eq.s32.totalorder %v1047, 3
          %v2473 = vstv %s2469
          %vm2474 = vcmp.eq.s32.totalorder %v1052, %v2473
          %vm2475 = vmand %vm2472, %vm2474
          %v2476 = vstv %s2471
          %v2477 = vsel %vm2475, %v2476, %v2464
          %s2478 = sld [smem:[#allocation4 + $0x80]]
          %p2479 = scmp.gt.s32.totalorder %s2478, 0
          %s2480 = scalar_select %p2479, %s2478, 0
          %p2481 = scmp.lt.s32.totalorder %s2480, 15
          %s2482 = scalar_select %p2481, %s2480, 15
          %s2483 = sadd.s32 %s2482, 16
          %s2484 = sld [smem:[#allocation5 + $0x1]]
          %p2485 = scmp.gt.s32.totalorder %s2484, 0
          %s2486 = scalar_select %p2485, 1.0, 0.0
          %vm2487 = vcmp.eq.s32.totalorder %v1047, 4
          %v2488 = vstv %s2483
          %vm2489 = vcmp.eq.s32.totalorder %v1052, %v2488
          %vm2490 = vmand %vm2487, %vm2489
          %v2491 = vstv %s2486
          %v2492 = vsel %vm2490, %v2491, %v2477
          %s2493 = sld [smem:[#allocation4 + $0x81]]
          %p2494 = scmp.gt.s32.totalorder %s2493, 0
          %s2495 = scalar_select %p2494, %s2493, 0
          %p2496 = scmp.lt.s32.totalorder %s2495, 15
          %s2497 = scalar_select %p2496, %s2495, 15
          %s2498 = sadd.s32 %s2497, 16
          %p2499 = scmp.gt.s32.totalorder %s2484, 1
          %s2500 = scalar_select %p2499, 1.0, 0.0
          %vm2501 = vcmp.eq.s32.totalorder %v1047, 5
          %v2502 = vstv %s2498
          %vm2503 = vcmp.eq.s32.totalorder %v1052, %v2502
          %vm2504 = vmand %vm2501, %vm2503
          %v2505 = vstv %s2500
          %v2506 = vsel %vm2504, %v2505, %v2492
          %s2507 = sld [smem:[#allocation4 + $0x82]]
          %p2508 = scmp.gt.s32.totalorder %s2507, 0
          %s2509 = scalar_select %p2508, %s2507, 0
          %p2510 = scmp.lt.s32.totalorder %s2509, 15
          %s2511 = scalar_select %p2510, %s2509, 15
          %s2512 = sadd.s32 %s2511, 16
          %p2513 = scmp.gt.s32.totalorder %s2484, 2
          %s2514 = scalar_select %p2513, 1.0, 0.0
          %vm2515 = vcmp.eq.s32.totalorder %v1047, 6
          %v2516 = vstv %s2512
          %vm2517 = vcmp.eq.s32.totalorder %v1052, %v2516
          %vm2518 = vmand %vm2515, %vm2517
          %v2519 = vstv %s2514
          %v2520 = vsel %vm2518, %v2519, %v2506
          %s2521 = sld [smem:[#allocation4 + $0x83]]
          %p2522 = scmp.gt.s32.totalorder %s2521, 0
          %s2523 = scalar_select %p2522, %s2521, 0
          %p2524 = scmp.lt.s32.totalorder %s2523, 15
          %s2525 = scalar_select %p2524, %s2523, 15
          %s2526 = sadd.s32 %s2525, 16
          %p2527 = scmp.gt.s32.totalorder %s2484, 3
          %s2528 = scalar_select %p2527, 1.0, 0.0
          %vm2529 = vcmp.eq.s32.totalorder %v1047, 7
          %v2530 = vstv %s2526
          %vm2531 = vcmp.eq.s32.totalorder %v1052, %v2530
          %vm2532 = vmand %vm2529, %vm2531
          %v2533 = vstv %s2528
          %v2534 = vsel %vm2532, %v2533, %v2520
          %v2536 = vsel %vm1130, %v2534, 0
          %2538 = vmatprep.subr.mxu0 0.0
          %2539 = vmatpush1.msra.mxu0 %v2413
          %2540 = vmatprep.subr.mxu0 0.0
          %2541 = vmatpush1.msra.mxu0 %v2414
          %2542 = vmatprep.subr.mxu0 0.0
          %2543 = vmatpush1.msra.mxu0 %v2415
          %2544 = vmatprep.subr.mxu0 0.0
          %2545 = vmatpush1.msra.mxu0 %v2416
          %2546 = vmatprep.subr.mxu0 0.0
          %2547 = vmatpush1.msra.mxu0 0.0
          %2548 = vmatprep.subr.mxu0 0.0
          %2549 = vmatpush1.msra.mxu0 0.0
          %2550 = vmatprep.subr.mxu0 0.0
          %2551 = vmatpush1.msra.mxu0 0.0
          %2552 = vmatprep.subr.mxu0 0.0
          %2553 = vmatpush1.msra.mxu0 0.0
          %2554 = vmatprep.subr.mxu0 0.0
          %2555 = vmatpush1.msra.mxu0 0.0
          %2556 = vmatprep.subr.mxu0 0.0
          %2557 = vmatpush1.msra.mxu0 0.0
          %2558 = vmatprep.subr.mxu0 0.0
          %2559 = vmatpush1.msra.mxu0 0.0
          %2560 = vmatprep.subr.mxu0 0.0
          %2561 = vmatpush1.msra.mxu0 0.0
          %2562 = vmatprep.subr.mxu0 0.0
          %2563 = vmatpush1.msra.mxu0 0.0
          %2564 = vmatprep.subr.mxu0 0.0
          %2565 = vmatpush1.msra.mxu0 0.0
          %2566 = vmatprep.subr.mxu0 0.0
          %2567 = vmatpush1.msra.mxu0 0.0
          %2568 = vmatprep.subr.mxu0 0.0
          %2569 = vmatpush1.msra.mxu0 0.0
          %2570 = vmatprep.subr.mxu0 0.0
          %2571 = vmatpush1.msra.mxu0 0.0
          %2572 = vmatprep.subr.mxu0 0.0
          %2573 = vmatpush1.msra.mxu0 0.0
          %2574 = vmatprep.subr.mxu0 0.0
          %2575 = vmatpush1.msra.mxu0 0.0
          %2576 = vmatprep.subr.mxu0 0.0
          %2577 = vmatpush1.msra.mxu0 0.0
          %2578 = vmatprep.subr.mxu0 0.0
          %2579 = vmatpush1.msra.mxu0 0.0
          %2580 = vmatprep.subr.mxu0 0.0
          %2581 = vmatpush1.msra.mxu0 0.0
          %2582 = vmatprep.subr.mxu0 0.0
          %2583 = vmatpush1.msra.mxu0 0.0
          %2584 = vmatprep.subr.mxu0 0.0
          %2585 = vmatpush1.msra.mxu0 0.0
          %2586 = vmatprep.subr.mxu0 0.0
          %2587 = vmatpush1.msra.mxu0 0.0
          %2588 = vmatprep.subr.mxu0 0.0
          %2589 = vmatpush1.msra.mxu0 0.0
          %2590 = vmatprep.subr.mxu0 0.0
          %2591 = vmatpush1.msra.mxu0 0.0
          %2592 = vmatprep.subr.mxu0 0.0
          %2593 = vmatpush1.msra.mxu0 0.0
          %2594 = vmatprep.subr.mxu0 0.0
          %2595 = vmatpush1.msra.mxu0 0.0
          %2596 = vmatprep.subr.mxu0 0.0
          %2597 = vmatpush1.msra.mxu0 0.0
          %2598 = vmatprep.subr.mxu0 0.0
          %2599 = vmatpush1.msra.mxu0 0.0
          %2600 = vmatprep.subr.mxu0 0.0
          %2601 = vmatpush1.msra.mxu0 0.0
          %2602 = vmatprep.mubr.f32.mxu0 0.0
          %2603 = vmatmul.mubr.f32.gmra.mrb[0].mxu0 %v2536
          %v2604 = vpop.f32.mrb[0].mxu0
          %v2605 = vadd.f32 0.0, %v2604
          %v2606 = vpop.f32.mrb[0].mxu0
          %2607 = vdwg.mxu0
          %2608 = vst.msk [vmem:[#allocation6] sm:$0xff] %vm1130, %v2605
          %v2609 = vpack.c.bf16 %v2605, %v2605
          %v2610 = vld [vmem:[%s22] sm:$0xf]
          %v2611 = vld [vmem:[%s22 + $0x4] sm:$0xf]
          %v2612 = vld [vmem:[%s22 + $0x8] sm:$0xf]
          %v2613 = vld [vmem:[%s22 + $0xc] sm:$0xf]
          %v2614 = vld [vmem:[%s23] sm:$0x1]
          %v2616 = vlaneseq
          %v2617 = vshrl.u32 %v2616, 7
          %v2618 = vsub.s32 0, %v2617
          %v2619 = vrot.slane %v2614, %v2618
          %v2625 = vunpack.c.l.b16 %v2610
          %v2626 = vunpack.c.l.b16 %v2611
          %v2627 = vunpack.c.l.b16 %v2612
          %v2628 = vunpack.c.l.b16 %v2613
          %v2629 = vpack.c.b16 %v2626, %v2625
          %v2630 = vpack.c.b16 %v2628, %v2627
          %v2634 = vsel %vm1130, %v2609, 0
          %2636 = vmatprep.subr.bf16.mxu0 0
          %2637 = vmatpush1.bf16.msra.mxu0 %v2629
          %2638 = vmatprep.subr.bf16.mxu0 0
          %2639 = vmatpush1.bf16.msra.mxu0 %v2630
          %2640 = vmatprep.subr.bf16.mxu0 0
          %2641 = vmatpush1.bf16.msra.mxu0 0
          %2642 = vmatprep.subr.bf16.mxu0 0
          %2643 = vmatpush1.bf16.msra.mxu0 0
          %2644 = vmatprep.subr.bf16.mxu0 0
          %2645 = vmatpush1.bf16.msra.mxu0 0
          %2646 = vmatprep.subr.bf16.mxu0 0
          %2647 = vmatpush1.bf16.msra.mxu0 0
          %2648 = vmatprep.subr.bf16.mxu0 0
          %2649 = vmatpush1.bf16.msra.mxu0 0
          %2650 = vmatprep.subr.bf16.mxu0 0
          %2651 = vmatpush1.bf16.msra.mxu0 0
          %2652 = vmatprep.subr.bf16.mxu0 0
          %2653 = vmatpush1.bf16.msra.mxu0 0
          %2654 = vmatprep.subr.bf16.mxu0 0
          %2655 = vmatpush1.bf16.msra.mxu0 0
          %2656 = vmatprep.subr.bf16.mxu0 0
          %2657 = vmatpush1.bf16.msra.mxu0 0
          %2658 = vmatprep.subr.bf16.mxu0 0
          %2659 = vmatpush1.bf16.msra.mxu0 0
          %2660 = vmatprep.subr.bf16.mxu0 0
          %2661 = vmatpush1.bf16.msra.mxu0 0
          %2662 = vmatprep.subr.bf16.mxu0 0
          %2663 = vmatpush1.bf16.msra.mxu0 0
          %2664 = vmatprep.subr.bf16.mxu0 0
          %2665 = vmatpush1.bf16.msra.mxu0 0
          %2666 = vmatprep.subr.bf16.mxu0 0
          %2667 = vmatpush1.bf16.msra.mxu0 0
          %2668 = vmatprep.mubr.bf16.mxu0 0
          %2669 = vmatmul.mubr.bf16.gmra.mrb[0].mxu0 %v2634
          %v2670 = vpop.f32.mrb[0].mxu0
          %v2671 = vadd.f32 %v2619, %v2670
          %v2672 = vpop.f32.mrb[0].mxu0
          %v2673 = vpop.f32.mrb[0].mxu0
          %v2674 = vpop.f32.mrb[0].mxu0
          %2675 = vdwg.mxu0
          %2676 = vst [vmem:[#allocation8] sm:$0xff] %v2671
        $region116: #{tpu_custom_call.1} parent=107 // pred_fallthru
          _
        // Predicated region
        $region117: #{tpu_custom_call.1} parent=107 // pred_check
          %p2677 = pneg %p604
        $region118: #{tpu_custom_call.1} parent=107 // pred_check_branch
          %2679 = sbr.rel (%p2677) target = $region120
        $region119: #{tpu_custom_call.1} parent=107 // pred_region
          %s2681 = ssub.s32 128, 128
          %2682 = vsyncadd [#allocation7], %s2681
          %s2684 = sshll.u32 [#allocation6], 4
          %s2685 = int_to_ptr.vmem [resolvable:$true] %s2684
          %2687 = dma.vmem_to_hbm [thread:$0]  %s2685, 128, %s24, [#allocation7]
        $region120: #{tpu_custom_call.1} parent=107 // pred_fallthru
          _
        // Predicated region
        $region121: #{tpu_custom_call.1} parent=107 // pred_check
          %p2688 = pneg %p625
        $region122: #{tpu_custom_call.1} parent=107 // pred_check_branch
          %2690 = sbr.rel (%p2688) target = $region124
        $region123: #{tpu_custom_call.1} parent=107 // pred_region
          %s2692 = ssub.s32 128, 128
          %2693 = vsyncadd [#allocation9], %s2692
          %s2695 = sshll.u32 [#allocation8], 4
          %s2696 = int_to_ptr.vmem [resolvable:$true] %s2695
          %2698 = dma.vmem_to_hbm [thread:$0]  %s2696, 128, %s25, [#allocation9]
        $region124: #{tpu_custom_call.1} parent=107 // pred_fallthru
          _
        // Predicated region
        $region125: #{tpu_custom_call.1} parent=107 // pred_check
          %p2699 = pneg %p604
        $region126: #{tpu_custom_call.1} parent=107 // pred_check_branch
          %2701 = sbr.rel (%p2699) target = $region128
        $region127: #{tpu_custom_call.1} parent=107 // pred_region
          %2702 = dma.done [#allocation7], 128
        $region128: #{tpu_custom_call.1} parent=107 // pred_fallthru
          _
        // Predicated region
        $region129: #{tpu_custom_call.1} parent=107 // pred_check
          %p2703 = pneg %p625
        $region130: #{tpu_custom_call.1} parent=107 // pred_check_branch
          %2705 = sbr.rel (%p2703) target = $region132
        $region131: #{tpu_custom_call.1} parent=107 // pred_region
          %2706 = dma.done [#allocation9], 128
        $region132: #{tpu_custom_call.1} parent=107 // pred_fallthru
          _
      $region108: #{tpu_custom_call.1} parent=5 // pred_fallthru
        _
      %p2707 = scmp.le.s32.totalorder 2, %s44
      // Predicated region
      $region133: #{tpu_custom_call.1} parent=5 // pred_check
        %p2708 = pneg %p2707
      $region134: #{tpu_custom_call.1} parent=5 // pred_check_branch
        %2710 = sbr.rel (%p2708) target = $region136
      $region135: #{tpu_custom_call.1} parent=5 // pred_region
        %s2711 = ssub.s32 %s44, 2
      $region136: #{tpu_custom_call.1} parent=5 // pred_fallthru
        _
    $region6: #{tpu_custom_call.1} parent=1 // loop_footer
      %s48 = sadd.s32 1, %s44
    $region7: #{tpu_custom_call.1} parent=1 // loop_footer_branch
      %43 = sbr.rel target = $region3
    $region8: #{tpu_custom_call.1} parent=1 // loop_exit
      _
    %2712 = vsyncpa [#allocation7], 1
    %s2713 = scalar_lea.sflag [#allocation7], 1
    %2714 = vsyncpa %s2713, 1
    %2715 = vsyncpa [#allocation9], 1

</llo_original>
